<compile_context>
chip_gen: v7x
topology: tpu7x:2x2x1
jax: 0.10.0
libtpu: 0.0.40
codegen_flags: <defaults>
</compile_context>

<pallas_src>
import math

import numpy as np
import jax
import jax.numpy as jnp
from jax import lax
from jax.experimental import pallas as pl
from jax.experimental.pallas import tpu as pltpu

# ----------------------------------------------------------------------------
# Small synthetic config (PyTorch defaults scaled down)
# ----------------------------------------------------------------------------
NODE_DIM = 32                         # config.node_dim
IRREPS = ((16, 0), (8, 1), (8, 2))    # '16x0e + 8x1o + 8x2e'  (mult, l)
NUM_IRREPS = sum(m for m, _ in IRREPS)                 # 32
SPH_DIM = sum(m * (2 * l + 1) for m, l in IRREPS)      # 80
NUM_BASIS = 8
CUTOFF = 5.0
HIDDEN_DIM = 16                       # config.hidden_dim (grad-out MLP)
ACTION_BLOCKS = 2
EMBED_DIM = 16                        # int2c1e embedding width
MAX_Z = 20
MSG_HIDDEN = NODE_DIM + 2 * NUM_IRREPS        # 96
UPD_HIDDEN = 2 * NODE_DIM + NUM_IRREPS        # 96

LANE = 128                            # padded output width of every Pallas layer

LEN_UNIT_CONV = 1.0    # Angstrom -> Angstrom
PROP_UNIT_CONV = 1.0   # eV -> eV
GRAD_UNIT_CONV = 1.0   # eV/Angstrom -> eV/Angstrom

_SQRT2C = math.sqrt(2.0 / CUTOFF)
_PI_C = math.pi / CUTOFF


def _default_vmem_limit():
    """~half of physical VMEM: 32 MiB on v7x (64 MiB chips), 64 MiB on v5e/v6e."""
    try:
        cap = getattr(pltpu.get_tpu_info(), "vmem_capacity_bytes", None)
        if cap:
            return int(min(cap // 2, 96 * 1024 * 1024))
    except Exception:
        pass
    return 32 * 1024 * 1024


_VMEM_LIMIT = _default_vmem_limit()

# ----------------------------------------------------------------------------
# Constant 0/1 matrices (gate expansion / irrep reductions / msg_s placement)
# ----------------------------------------------------------------------------
_GATE_REPEATS = sum([[2 * l + 1] * m for m, l in IRREPS], [])
_gexp = np.zeros((NUM_IRREPS, SPH_DIM), np.float32)
_off = 0
for _i, _r in enumerate(_GATE_REPEATS):
    _gexp[_i, _off:_off + _r] = 1.0
    _off += _r

# Combined matrix for the fused edge kernel: filt @ GM -> [gs | ge | ms] (3x128)
#   rows  0:32  -> gate_state expansion onto slab cols 0:80   (chunk 0)
#   rows 32:64  -> gate_edge  expansion onto slab cols 0:80   (chunk 1)
#   rows 64:96  -> msg_s identity onto slab cols 80:112       (chunk 2)
_gm = np.zeros((LANE, 3 * LANE), np.float32)
_gm[0:NUM_IRREPS, 0:SPH_DIM] = _gexp
_gm[NUM_IRREPS:2 * NUM_IRREPS, LANE:LANE + SPH_DIM] = _gexp
for _k in range(NODE_DIM):
    _gm[2 * NUM_IRREPS + _k, 2 * LANE + SPH_DIM + _k] = 1.0
GATE_COMBINED = jnp.asarray(_gm, jnp.bfloat16)        # exact 0/1 values in bf16

# per-irrep reduction (norm / dot): [128, 32] (pad rows 80:128 are zero)
_nm = np.zeros((LANE, NUM_IRREPS), np.float32)
_nm[:SPH_DIM, :] = _gexp.T
NORM_MAT = jnp.asarray(_nm)

# gate expansion into a 128-wide vector slab: [32, 128]
_gsl = np.zeros((NUM_IRREPS, LANE), np.float32)
_gsl[:, :SPH_DIM] = _gexp
GEXP_SLAB = jnp.asarray(_gsl)


# ----------------------------------------------------------------------------
# Tiling helpers
# ----------------------------------------------------------------------------
def _row_tile(m):
    """Row tile: up to 512 rows, multiple of 8, >=2 grid steps when possible."""
    half = ((pl.cdiv(m, 2) + 7) // 8) * 8
    return int(max(8, min(512, half)))


def _mosaic_params(semantics):
    return pltpu.CompilerParams(dimension_semantics=semantics,
                                vmem_limit_bytes=_VMEM_LIMIT)


def _sigmoid(x):
    return 1.0 / (1.0 + jnp.exp(-x))


# ----------------------------------------------------------------------------
# Pallas kernels: linear / fused 2-layer MLP / transposed matmuls
# ----------------------------------------------------------------------------
def _linear_kernel(a_ref, w_ref, b_ref, o_ref):
    # bf16 MXU operands (weights stored bf16), f32 accumulation, fused bias.
    o_ref[...] = jnp.dot(a_ref[...].astype(jnp.bfloat16), w_ref[...],
                         preferred_element_type=jnp.float32) + b_ref[...]


def _linear_impl(a, w, b):
    M, K = a.shape
    N = w.shape[1]
    tm = _row_tile(M)
    return pl.pallas_call(
        _linear_kernel,
        out_shape=jax.ShapeDtypeStruct((M, N), jnp.float32),
        grid=(pl.cdiv(M, tm),),
        in_specs=[pl.BlockSpec((tm, K), lambda i: (i, 0)),
                  pl.BlockSpec((K, N), lambda i: (0, 0)),
                  pl.BlockSpec((1, N), lambda i: (0, 0))],
        out_specs=pl.BlockSpec((tm, N), lambda i: (i, 0)),
        compiler_params=_mosaic_params(("parallel",)),
    )(a, w, b)


def _mlp2_kernel_res(a_ref, w1_ref, b1_ref, w2_ref, b2_ref, y_ref, z1_ref):
    # Fused Linear -> SiLU -> Linear; hidden activation never leaves VMEM.
    z1 = jnp.dot(a_ref[...].astype(jnp.bfloat16), w1_ref[...],
                 preferred_element_type=jnp.float32) + b1_ref[...]
    h = z1 * _sigmoid(z1)
    y_ref[...] = jnp.dot(h.astype(jnp.bfloat16), w2_ref[...],
                         preferred_element_type=jnp.float32) + b2_ref[...]
    z1_ref[...] = z1                                     # residual for the VJP


def _mlp2_kernel_prim(a_ref, w1_ref, b1_ref, w2_ref, b2_ref, y_ref):
    # Primal-only variant: no residual store.
    z1 = jnp.dot(a_ref[...].astype(jnp.bfloat16), w1_ref[...],
                 preferred_element_type=jnp.float32) + b1_ref[...]
    h = z1 * _sigmoid(z1)
    y_ref[...] = jnp.dot(h.astype(jnp.bfloat16), w2_ref[...],
                         preferred_element_type=jnp.float32) + b2_ref[...]


def _mlp2_impl(a, w1, b1, w2, b2, save_z1):
    M, K = a.shape
    H = w1.shape[1]
    N = w2.shape[1]
    tm = _row_tile(M)
    in_specs = [pl.BlockSpec((tm, K), lambda i: (i, 0)),
                pl.BlockSpec((K, H), lambda i: (0, 0)),
                pl.BlockSpec((1, H), lambda i: (0, 0)),
                pl.BlockSpec((H, N), lambda i: (0, 0)),
                pl.BlockSpec((1, N), lambda i: (0, 0))]
    if save_z1:
        return pl.pallas_call(
            _mlp2_kernel_res,
            out_shape=(jax.ShapeDtypeStruct((M, N), jnp.float32),
                       jax.ShapeDtypeStruct((M, H), jnp.float32)),
            grid=(pl.cdiv(M, tm),),
            in_specs=in_specs,
            out_specs=(pl.BlockSpec((tm, N), lambda i: (i, 0)),
                       pl.BlockSpec((tm, H), lambda i: (i, 0))),
            compiler_params=_mosaic_params(("parallel",)),
        )(a, w1, b1, w2, b2)
    return pl.pallas_call(
        _mlp2_kernel_prim,
        out_shape=jax.ShapeDtypeStruct((M, N), jnp.float32),
        grid=(pl.cdiv(M, tm),),
        in_specs=in_specs,
        out_specs=pl.BlockSpec((tm, N), lambda i: (i, 0)),
        compiler_params=_mosaic_params(("parallel",)),
    )(a, w1, b1, w2, b2)


def _mm_nt_kernel(x_ref, y_ref, o_ref):
    # x @ y^T with the transpose absorbed into contraction dims (no HBM transpose).
    o_ref[...] = lax.dot_general(
        x_ref[...].astype(jnp.bfloat16), y_ref[...].astype(jnp.bfloat16),
        dimension_numbers=(((1,), (1,)), ((), ())),
        preferred_element_type=jnp.float32)


def _mm_nt(x, y):
    """x [M, N] @ y [K, N]^T -> [M, K]."""
    M, N = x.shape
    K = y.shape[0]
    tm = _row_tile(M)
    return pl.pallas_call(
        _mm_nt_kernel,
        out_shape=jax.ShapeDtypeStruct((M, K), jnp.float32),
        grid=(pl.cdiv(M, tm),),
        in_specs=[pl.BlockSpec((tm, N), lambda i: (i, 0)),
                  pl.BlockSpec((K, N), lambda i: (0, 0))],
        out_specs=pl.BlockSpec((tm, K), lambda i: (i, 0)),
        compiler_params=_mosaic_params(("parallel",)),
    )(x, y)


def _mm_tn(x, y):
    """x [M, K]^T @ y [M, N] -> [K, N]; row-reduction grid + in-output accumulator."""
    M, K = x.shape
    _, N = y.shape
    tm = _row_tile(M)

    def kernel(x_ref, y_ref, o_ref):
        i = pl.program_id(0)

        @pl.when(i == 0)
        def _():
            o_ref[...] = jnp.zeros_like(o_ref)

        # mask rows of a partial last tile so the reduction stays correct
        row = i * tm + lax.broadcasted_iota(jnp.int32, (tm, 1), 0)
        valid = (row < M).astype(jnp.float32)
        xm = (x_ref[...] * valid).astype(jnp.bfloat16)
        ym = (y_ref[...] * valid).astype(jnp.bfloat16)
        o_ref[...] += lax.dot_general(
            xm, ym, dimension_numbers=(((0,), (0,)), ((), ())),
            preferred_element_type=jnp.float32)

    return pl.pallas_call(
        kernel,
        out_shape=jax.ShapeDtypeStruct((K, N), jnp.float32),
        grid=(pl.cdiv(M, tm),),
        in_specs=[pl.BlockSpec((tm, K), lambda i: (i, 0)),
                  pl.BlockSpec((tm, N), lambda i: (i, 0))],
        out_specs=pl.BlockSpec((K, N), lambda i: (0, 0)),
        compiler_params=_mosaic_params(("arbitrary",)),
    )(x, y)


# ----------------------------------------------------------------------------
# Differentiable Pallas layers (custom VJPs; backward is also Pallas)
# ----------------------------------------------------------------------------
@jax.custom_vjp
def pallas_linear(a, w, b):
    return _linear_impl(a, w, b)


def _plin_fwd(a, w, b):
    return _linear_impl(a, w, b), (a, w)


def _plin_bwd(res, g):
    a, w = res
    da = _mm_nt(g, w)                               # g @ w^T
    dw = _mm_tn(a, g).astype(w.dtype)               # a^T @ g
    db = jnp.sum(g, axis=0, keepdims=True)
    return da, dw, db


pallas_linear.defvjp(_plin_fwd, _plin_bwd)


@jax.custom_vjp
def pallas_mlp2(a, w1, b1, w2, b2):
    return _mlp2_impl(a, w1, b1, w2, b2, save_z1=False)


def _pmlp2_fwd(a, w1, b1, w2, b2):
    y, z1 = _mlp2_impl(a, w1, b1, w2, b2, save_z1=True)
    return y, (a, w1, w2, z1)


def _pmlp2_bwd(res, g):
    a, w1, w2, z1 = res
    sig = _sigmoid(z1)
    h = z1 * sig                                    # silu(z1)
    gh = _mm_nt(g, w2)                              # g @ w2^T
    gz1 = gh * (sig * (1.0 + z1 * (1.0 - sig)))     # * silu'(z1)
    da = _mm_nt(gz1, w1)                            # gz1 @ w1^T
    dw1 = _mm_tn(a, gz1).astype(w1.dtype)
    db1 = jnp.sum(gz1, axis=0, keepdims=True)
    dw2 = _mm_tn(h, g).astype(w2.dtype)
    db2 = jnp.sum(g, axis=0, keepdims=True)
    return da, dw1, db1, dw2, db2


pallas_mlp2.defvjp(_pmlp2_fwd, _pmlp2_bwd)


# ----------------------------------------------------------------------------
# Fused edge-message kernel (rbf + cutoff + filter + gates + msg slab) + VJP
# ----------------------------------------------------------------------------
def _edge_fwd_kernel(dist_ref, sj_ref, vj_ref, rsh_ref, wr_ref, br_ref, gm_ref,
                     out_ref):
    d = dist_ref[...]                                              # (tm, 1) f32
    inv_d = 1.0 / jnp.maximum(d, 1e-12)
    n = (lax.broadcasted_iota(jnp.int32, (d.shape[0], NUM_BASIS), 1) + 1
         ).astype(jnp.float32)
    arg = n * (_PI_C * d)                                          # (tm, NB)
    rbf = _SQRT2C * jnp.sin(arg) * inv_d                           # bessel rbf
    fcut = 0.5 * (jnp.cos(_PI_C * d) + 1.0) * jnp.where(d < CUTOFF, 1.0, 0.0)
    fw = (jnp.dot(rbf.astype(jnp.bfloat16), wr_ref[...],
                  preferred_element_type=jnp.float32) + br_ref[...]) * fcut
    filt = sj_ref[...] * fw                                        # (tm, 128)
    gg = jnp.dot(filt.astype(jnp.bfloat16), gm_ref[...],
                 preferred_element_type=jnp.float32)               # (tm, 384)
    # slab layout: [msg_v (80) | msg_s (32) | 0 (16)]
    out_ref[...] = (vj_ref[...] * gg[:, :LANE]
                    + rsh_ref[...] * gg[:, LANE:2 * LANE]
                    + gg[:, 2 * LANE:])


def _edge_msg_fwd_impl(dist, sj, vj, rsh, wr, br):
    E = dist.shape[0]
    tm = _row_tile(E)
    return pl.pallas_call(
        _edge_fwd_kernel,
        out_shape=jax.ShapeDtypeStruct((E, LANE), jnp.float32),
        grid=(pl.cdiv(E, tm),),
        in_specs=[pl.BlockSpec((tm, 1), lambda i: (i, 0)),
                  pl.BlockSpec((tm, LANE), lambda i: (i, 0)),
                  pl.BlockSpec((tm, LANE), lambda i: (i, 0)),
                  pl.BlockSpec((tm, LANE), lambda i: (i, 0)),
                  pl.BlockSpec((NUM_BASIS, LANE), lambda i: (0, 0)),
                  pl.BlockSpec((1, LANE), lambda i: (0, 0)),
                  pl.BlockSpec((LANE, 3 * LANE), lambda i: (0, 0))],
        out_specs=pl.BlockSpec((tm, LANE), lambda i: (i, 0)),
        compiler_params=_mosaic_params(("parallel",)),
    )(dist, sj, vj, rsh, wr, br, GATE_COMBINED)


def _edge_bwd_kernel(g_ref, dist_ref, sj_ref, vj_ref, rsh_ref, wr_ref, br_ref,
                     gm_ref, dd_ref, dsj_ref, dvj_ref, drsh_ref):
    # Recompute the cheap forward pieces, then fused backward.
    d = dist_ref[...]
    inv_d = 1.0 / jnp.maximum(d, 1e-12)
    n = (lax.broadcasted_iota(jnp.int32, (d.shape[0], NUM_BASIS), 1) + 1
         ).astype(jnp.float32)
    arg = n * (_PI_C * d)
    sin_a = jnp.sin(arg)
    cos_a = jnp.cos(arg)
    rbf = _SQRT2C * sin_a * inv_d
    inside = jnp.where(d < CUTOFF, 1.0, 0.0)
    fcut = 0.5 * (jnp.cos(_PI_C * d) + 1.0) * inside
    fwpre = jnp.dot(rbf.astype(jnp.bfloat16), wr_ref[...],
                    preferred_element_type=jnp.float32) + br_ref[...]
    fw = fwpre * fcut
    sj = sj_ref[...]
    filt = sj * fw
    gm = gm_ref[...]
    gg = jnp.dot(filt.astype(jnp.bfloat16), gm,
                 preferred_element_type=jnp.float32)
    gs = gg[:, :LANE]
    ge = gg[:, LANE:2 * LANE]

    g = g_ref[...]
    vj = vj_ref[...]
    rsh = rsh_ref[...]
    dvj_ref[...] = g * gs
    drsh_ref[...] = g * ge

    def nt(x, m):
        return lax.dot_general(x, m, dimension_numbers=(((1,), (1,)), ((), ())),
                               preferred_element_type=jnp.float32)

    dgs = (g * vj).astype(jnp.bfloat16)
    dge = (g * rsh).astype(jnp.bfloat16)
    d_filt = (nt(dgs, gm[:, :LANE]) + nt(dge, gm[:, LANE:2 * LANE])
              + nt(g.astype(jnp.bfloat16), gm[:, 2 * LANE:]))
    dsj_ref[...] = d_filt * fw
    d_fw = d_filt * sj
    d_fwpre = d_fw * fcut
    d_fcut = jnp.sum(d_fw * fwpre, axis=-1, keepdims=True)
    d_rbf = nt(d_fwpre.astype(jnp.bfloat16), wr_ref[...])          # (tm, NB)
    drbf_dd = _SQRT2C * ((n * _PI_C) * cos_a * inv_d - sin_a * inv_d * inv_d)
    dfcut_dd = -0.5 * _PI_C * jnp.sin(_PI_C * d) * inside
    dd_ref[...] = (jnp.sum(d_rbf * drbf_dd, axis=-1, keepdims=True)
                   + d_fcut * dfcut_dd)


def _edge_msg_bwd_impl(g, dist, sj, vj, rsh, wr, br):
    E = dist.shape[0]
    tm = _row_tile(E)
    return pl.pallas_call(
        _edge_bwd_kernel,
        out_shape=(jax.ShapeDtypeStruct((E, 1), jnp.float32),
                   jax.ShapeDtypeStruct((E, LANE), jnp.float32),
                   jax.ShapeDtypeStruct((E, LANE), jnp.float32),
                   jax.ShapeDtypeStruct((E, LANE), jnp.float32)),
        grid=(pl.cdiv(E, tm),),
        in_specs=[pl.BlockSpec((tm, LANE), lambda i: (i, 0)),
                  pl.BlockSpec((tm, 1), lambda i: (i, 0)),
                  pl.BlockSpec((tm, LANE), lambda i: (i, 0)),
                  pl.BlockSpec((tm, LANE), lambda i: (i, 0)),
                  pl.BlockSpec((tm, LANE), lambda i: (i, 0)),
                  pl.BlockSpec((NUM_BASIS, LANE), lambda i: (0, 0)),
                  pl.BlockSpec((1, LANE), lambda i: (0, 0)),
                  pl.BlockSpec((LANE, 3 * LANE), lambda i: (0, 0))],
        out_specs=(pl.BlockSpec((tm, 1), lambda i: (i, 0)),
                   pl.BlockSpec((tm, LANE), lambda i: (i, 0)),
                   pl.BlockSpec((tm, LANE), lambda i: (i, 0)),
                   pl.BlockSpec((tm, LANE), lambda i: (i, 0))),
        compiler_params=_mosaic_params(("parallel",)),
    )(g, dist, sj, vj, rsh, wr, br, GATE_COMBINED)


@jax.custom_vjp
def edge_message(dist, sj, vj, rsh, wr, br):
    return _edge_msg_fwd_impl(dist, sj, vj, rsh, wr, br)


def _edge_vjp_fwd(dist, sj, vj, rsh, wr, br):
    # Residuals are already-live inputs; no extra HBM writes for the VJP.
    return _edge_msg_fwd_impl(dist, sj, vj, rsh, wr, br), (dist, sj, vj, rsh, wr, br)


def _edge_vjp_bwd(res, g):
    dist, sj, vj, rsh, wr, br = res
    d_dist, d_sj, d_vj, d_rsh = _edge_msg_bwd_impl(g, dist, sj, vj, rsh, wr, br)
    # Weight cotangents (never used on the force path -> DCE'd) via plain XLA.
    inv_d = 1.0 / jnp.maximum(dist, 1e-12)
    n = jnp.arange(1, NUM_BASIS + 1, dtype=jnp.float32)
    rbf = _SQRT2C * jnp.sin(n * (_PI_C * dist)) * inv_d
    fcut = 0.5 * (jnp.cos(_PI_C * dist) + 1.0) * (dist < CUTOFF).astype(jnp.float32)
    gm = GATE_COMBINED.astype(jnp.float32)
    d_filt = (jnp.dot(g * vj, gm[:, :LANE].T)
              + jnp.dot(g * rsh, gm[:, LANE:2 * LANE].T)
              + jnp.dot(g, gm[:, 2 * LANE:].T))
    d_fwpre = d_filt * sj * fcut
    d_wr = jnp.dot(rbf.T, d_fwpre).astype(wr.dtype)
    d_br = jnp.sum(d_fwpre, axis=0, keepdims=True)
    return d_dist, d_sj, d_vj, d_rsh, d_wr, d_br


edge_message.defvjp(_edge_vjp_fwd, _edge_vjp_bwd)


# ----------------------------------------------------------------------------
# Spherical harmonics (XLA; differentiated by autodiff), 128-wide slab
# ----------------------------------------------------------------------------
def sph_harm_slab(vec):
    """Real spherical harmonics (e3nn conv.: input order (y, z, x),
    normalize=True, normalization='integral'), repeated per irrep multiplicity,
    zero-padded to a lane-dense 128-wide slab."""
    d = jnp.sqrt(jnp.sum(vec * vec, axis=-1, keepdims=True))
    u = vec / jnp.maximum(d, 1e-12)
    x, y, z = u[:, 1], u[:, 2], u[:, 0]
    c = 1.0 / (2.0 * math.sqrt(math.pi))
    s3, s5, s15 = math.sqrt(3.0), math.sqrt(5.0), math.sqrt(15.0)
    sh0 = jnp.ones_like(x)[:, None] * c
    sh1 = jnp.stack([s3 * x, s3 * y, s3 * z], axis=-1) * c
    sh2 = jnp.stack([
        s15 * x * z,
        s15 * x * y,
        s5 * (y * y - 0.5 * (x * x + z * z)),
        s15 * y * z,
        0.5 * s15 * (z * z - x * x),
    ], axis=-1) * c
    ys = {0: sh0, 1: sh1, 2: sh2}
    blocks = [jnp.tile(ys[l], (1, m)) for m, l in IRREPS]
    pad = jnp.zeros((vec.shape[0], LANE - SPH_DIM), jnp.float32)
    return jnp.concatenate(blocks + [pad], axis=-1)


# ----------------------------------------------------------------------------
# Model blocks
# ----------------------------------------------------------------------------
def message_block(p, x_scalar, x_vector, dist, rsh, idx_i, idx_j, n_atoms):
    scalar_out = pallas_mlp2(x_scalar, p["w1"], p["b1"], p["w2"], p["b2"])  # [N,128]
    sj = scalar_out[idx_j]                     # TODO(synk): fuse gather via VMEM node table
    vj = x_vector[idx_j]
    msg = edge_message(dist, sj, vj, rsh, p["wr"], p["br"])                 # [E,128]
    agg = jax.ops.segment_sum(msg, idx_i, num_segments=n_atoms,
                              indices_are_sorted=True)
    # slab layout: [msg_v (80) | msg_s (32) | 0 (16)]
    x_scalar = x_scalar + agg[:, SPH_DIM:SPH_DIM + NODE_DIM]
    # pad columns (>=80) of x_vector accumulate msg_s sums but are never read:
    # wUV / gate matrices have zero pad rows, and the next edge kernel multiplies
    # vj by a gate slab that is zero beyond column 80.
    x_vector = x_vector + agg
    return x_scalar, x_vector


def update_block(p, x_scalar, x_vector):
    hp = lax.Precision.HIGHEST
    # o3.Linear(U) and o3.Linear(V) folded into one [128, 256] block-diag matmul.
    uv = jnp.dot(x_vector, p["wUV"])                                        # [N,256]
    u_sph, v_sph = uv[:, :LANE], uv[:, LANE:]
    # per-irrep norm / dot as matmuls against the 0/1 reduction matrix
    v_inv = jnp.sqrt(jnp.dot(v_sph * v_sph, NORM_MAT, precision=hp) + 1e-8)  # [N,32]
    mlp_out = pallas_mlp2(jnp.concatenate([x_scalar, v_inv], axis=-1),
                          p["w1"], p["b1"], p["w2"], p["b2"])                # [N,128]
    a_vv = mlp_out[:, :NUM_IRREPS]
    a_sv = mlp_out[:, NUM_IRREPS:NUM_IRREPS + NODE_DIM]
    a_ss = mlp_out[:, NUM_IRREPS + NODE_DIM:UPD_HIDDEN]
    d_vec = u_sph * jnp.dot(a_vv, GEXP_SLAB, precision=hp)                   # [N,128]
    dot_uv = jnp.dot(u_sph * v_sph, NORM_MAT, precision=hp)                  # [N,32]
    inner = pallas_linear(dot_uv, p["wdot"], p["bdot"])[:, :NODE_DIM]
    return x_scalar + a_sv * inner + a_ss, x_vector + d_vec


def energy_from_vec(vec, x_embed, params, idx_i, idx_j):
    """Total energy as a function of edge vectors (differentiated w.r.t. vec)."""
    n_atoms = x_embed.shape[0]
    dist = jnp.sqrt(jnp.sum(vec * vec, axis=-1, keepdims=True))              # [E,1]
    rsh = sph_harm_slab(vec)                                                 # [E,128]
    x_scalar = pallas_linear(x_embed, params["node_w"],
                             params["node_b"])[:, :NODE_DIM]                 # [N,32]
    x_vector = jnp.zeros((n_atoms, LANE), jnp.float32)                       # [N,128]
    for blk in range(ACTION_BLOCKS):
        x_scalar, x_vector = message_block(params["msg"][blk], x_scalar, x_vector,
                                           dist, rsh, idx_i, idx_j, n_atoms)
        x_scalar, x_vector = update_block(params["upd"][blk], x_scalar, x_vector)
    out_p = params["out"]
    energies = pallas_mlp2(x_scalar, out_p["w1"], out_p["b1"],
                           out_p["w2"], out_p["b2"])[:, 0]                   # [N]
    return jnp.sum(energies), energies


def md_painn_forward(params, at_no, coord, edge_index, shifts, charge=0, spin=0):
    coord = coord * LEN_UNIT_CONV
    n_atoms = coord.shape[0]
    # sort edges by receiver so message aggregation / force reduction use
    # sorted segment sums (indices_are_sorted=True)
    order = jnp.argsort(edge_index[0])
    idx_i = edge_index[0][order]
    idx_j = edge_index[1][order]
    shifts = shifts[order]
    vec = coord[idx_i] - coord[idx_j] - shifts
    x_embed = params["embed_table"][at_no]                                   # int2c1e

    efun = lambda v: energy_from_vec(v, x_embed, params, idx_i, idx_j)
    (_, energies), edge_grad = jax.value_and_grad(efun, has_aux=True)(vec)

    # torch.autograd.grad w.r.t. coord == segment reduction of dE/dvec (+i, -j)
    nuc_grad = (jax.ops.segment_sum(edge_grad, idx_i, num_segments=n_atoms,
                                    indices_are_sorted=True)
                - jax.ops.segment_sum(edge_grad, idx_j, num_segments=n_atoms))
    forces = -nuc_grad

    edge_virials = 0.5 * jnp.einsum("zi,zj->zij", edge_grad, vec)
    virials = (jax.ops.segment_sum(edge_virials, idx_i, num_segments=n_atoms,
                                   indices_are_sorted=True)
               + jax.ops.segment_sum(edge_virials, idx_j, num_segments=n_atoms))

    energies = (energies + params["atom_sp"][at_no]) * PROP_UNIT_CONV
    energy = jnp.sum(energies)
    forces = forces * GRAD_UNIT_CONV
    virials = virials * PROP_UNIT_CONV
    virial = jnp.sum(virials, axis=0)
    virial = 0.5 * (virial + virial.T)
    return {"energy": energy, "energies": energies, "forces": forces,
            "virial": virial, "virials": virials}


# ----------------------------------------------------------------------------
# Deterministic parameter init (synthetic weights; bf16, outputs padded to 128)
# ----------------------------------------------------------------------------
def init_params(seed=0):
    keys = iter(jax.random.split(jax.random.PRNGKey(seed), 128))

    def w_pad(fin, fout, fin_pad=None):
        """Real [fin, fout] weights zero-padded into a bf16 [fin_pad, LANE] slab."""
        fin_pad = fin if fin_pad is None else fin_pad
        wr = jax.random.normal(next(keys), (fin, fout), jnp.float32) / np.sqrt(fin)
        out = jnp.zeros((fin_pad, LANE), jnp.float32)
        return out.at[:fin, :fout].set(wr).astype(jnp.bfloat16)

    def b_pad():
        return jnp.zeros((1, LANE), jnp.float32)

    def equi_w_pair():
        """Two o3.Linear(edge_irreps) block-diag kron weights, padded to 128 and
        folded into one [128, 256] matrix (pad rows/cols stay zero)."""
        mats = []
        for _ in range(2):
            full = np.zeros((LANE, LANE), np.float32)
            off = 0
            for m, l in IRREPS:
                ws = np.asarray(jax.random.normal(next(keys), (m, m), jnp.float32))
                blk = np.kron(ws / np.sqrt(m), np.eye(2 * l + 1, dtype=np.float32))
                k = blk.shape[0]
                full[off:off + k, off:off + k] = blk
                off += k
            mats.append(full)
        return jnp.asarray(np.concatenate(mats, axis=1))

    params = {
        "embed_table": jax.random.normal(next(keys), (MAX_Z + 1, EMBED_DIM), jnp.float32),
        "atom_sp": jnp.zeros((MAX_Z + 1,), jnp.float32),   # atom_ref - batom_ref
        "node_w": w_pad(EMBED_DIM, NODE_DIM), "node_b": b_pad(),
        "msg": [], "upd": [],
        "out": {"w1": w_pad(NODE_DIM, HIDDEN_DIM), "b1": b_pad(),
                "w2": w_pad(HIDDEN_DIM, 1, fin_pad=LANE), "b2": b_pad()},
    }
    for _ in range(ACTION_BLOCKS):
        params["msg"].append({
            "w1": w_pad(NODE_DIM, NODE_DIM), "b1": b_pad(),
            "w2": w_pad(NODE_DIM, MSG_HIDDEN, fin_pad=LANE), "b2": b_pad(),
            "wr": w_pad(NUM_BASIS, MSG_HIDDEN), "br": b_pad(),
        })
        params["upd"].append({
            "wUV": equi_w_pair(),
            "w1": w_pad(NODE_DIM + NUM_IRREPS, NODE_DIM), "b1": b_pad(),
            "w2": w_pad(NODE_DIM, UPD_HIDDEN, fin_pad=LANE), "b2": b_pad(),
            "wdot": w_pad(NUM_IRREPS, NODE_DIM), "bdot": b_pad(),
        })
    return params


if __name__ == "__main__":
    n_atoms, n_edges = 8, 16
    key = jax.random.PRNGKey(0)
    k1, k2 = jax.random.split(key)
    at_no = jax.random.randint(k1, (n_atoms,), 1, 10)
    coord = jax.random.normal(k2, (n_atoms, 3), jnp.float32) * 1.5
    src = np.arange(n_atoms)
    edge_index = jnp.array(
        np.stack([np.concatenate([src, src]),
                  np.concatenate([(src + 1) % n_atoms, (src + 3) % n_atoms])]),
        dtype=jnp.int32)                                   # [2, 16]
    shifts = jnp.zeros((n_edges, 3), jnp.float32)

    params = init_params(0)
    fwd = jax.jit(md_painn_forward)
    out = fwd(params, at_no, coord, edge_index, shifts)
    jax.block_until_ready(out)

    assert out["energies"].shape == (n_atoms,)
    assert out["forces"].shape == (n_atoms, 3)
    assert out["virials"].shape == (n_atoms, 3, 3)
    assert out["virial"].shape == (3, 3)
    assert all(bool(jnp.all(jnp.isfinite(v))) for v in jax.tree_util.tree_leaves(out))
    print("KERNEL_OK")
</pallas_src>

<mosaic_0001>
module attributes {stable_mosaic.version = 11 : i64} {
  func.func @_linear_kernel(%arg0: i32, %arg1: memref<8x16xf32, #tpu.memory_space<vmem>>, %arg2: memref<16x128xbf16, #tpu.memory_space<vmem>>, %arg3: memref<1x128xf32, #tpu.memory_space<vmem>>, %arg4: memref<8x128xf32, #tpu.memory_space<vmem>>) attributes {dimension_semantics = [#tpu.dimension_semantics<parallel>], iteration_bounds = array<i64: 1>, scalar_prefetch = 0 : i64, scratch_operands = 0 : i64, tpu.core_type = #tpu.core_type<tc>, window_params = [{transform_indices = @transform_0, window_bounds = array<i64: 8, 16>}, {pipeline_mode = #tpu.pipeline_mode<synchronous>, transform_indices = @transform_1, window_bounds = array<i64: 16, 128>}, {pipeline_mode = #tpu.pipeline_mode<synchronous>, transform_indices = @transform_2, window_bounds = array<i64: 1, 128>}, {transform_indices = @transform_3, window_bounds = array<i64: 8, 128>}]} {
    %c0 = arith.constant 0 : index
    %c0_0 = arith.constant 0 : index
    %0 = vector.load %arg1[%c0, %c0_0] : memref<8x16xf32, #tpu.memory_space<vmem>>, vector<8x16xf32>
    %1 = arith.truncf %0 : vector<8x16xf32> to vector<8x16xbf16>
    %c0_1 = arith.constant 0 : index
    %c0_2 = arith.constant 0 : index
    %2 = vector.load %arg2[%c0_1, %c0_2] : memref<16x128xbf16, #tpu.memory_space<vmem>>, vector<16x128xbf16>
    %cst = arith.constant dense<0.000000e+00> : vector<8x128xf32>
    %3 = tpu.matmul %1, %2, %cst {dimension_numbers = #tpu.dot_dimension_numbers<[1], [0], [0], [1], [0, 0, 1, 1], [], []>} : vector<8x16xbf16>, vector<16x128xbf16>, vector<8x128xf32> -> vector<8x128xf32>
    %c0_3 = arith.constant 0 : index
    %c0_4 = arith.constant 0 : index
    %4 = vector.load %arg3[%c0_3, %c0_4] : memref<1x128xf32, #tpu.memory_space<vmem>>, vector<1x128xf32>
    %5 = vector.broadcast %4 : vector<1x128xf32> to vector<8x128xf32>
    %6 = arith.addf %3, %5 : vector<8x128xf32>
    %c0_5 = arith.constant 0 : index
    %c0_6 = arith.constant 0 : index
    %7 = vector.load %arg4[%c0_5, %c0_6] : memref<8x128xf32, #tpu.memory_space<vmem>>, vector<8x128xf32>
    tpu.vector_store %arg4[%c0_5, %c0_6], %6 {strides = array<i32>} : memref<8x128xf32, #tpu.memory_space<vmem>>, vector<8x128xf32>,
    return
  }
  func.func @transform_0(%arg0: i32) -> (i32, i32) {
    %c0_i32 = arith.constant 0 : i32
    %c0_i32_0 = arith.constant 0 : i32
    return %arg0, %c0_i32 : i32, i32
  }
  func.func @transform_1(%arg0: i32) -> (i32, i32) {
    %c0_i32 = arith.constant 0 : i32
    %c0_i32_0 = arith.constant 0 : i32
    %c0_i32_1 = arith.constant 0 : i32
    return %c0_i32, %c0_i32_0 : i32, i32
  }
  func.func @transform_2(%arg0: i32) -> (i32, i32) {
    %c0_i32 = arith.constant 0 : i32
    %c0_i32_0 = arith.constant 0 : i32
    %c0_i32_1 = arith.constant 0 : i32
    return %c0_i32, %c0_i32_0 : i32, i32
  }
  func.func @transform_3(%arg0: i32) -> (i32, i32) {
    %c0_i32 = arith.constant 0 : i32
    %c0_i32_0 = arith.constant 0 : i32
    return %arg0, %c0_i32 : i32, i32
  }
}

module attributes {stable_mosaic.version = 11 : i64} {
  func.func @_mlp2_kernel_prim(%arg0: i32, %arg1: memref<8x32xf32, #tpu.memory_space<vmem>>, %arg2: memref<32x128xbf16, #tpu.memory_space<vmem>>, %arg3: memref<1x128xf32, #tpu.memory_space<vmem>>, %arg4: memref<128x128xbf16, #tpu.memory_space<vmem>>, %arg5: memref<1x128xf32, #tpu.memory_space<vmem>>, %arg6: memref<8x128xf32, #tpu.memory_space<vmem>>) attributes {dimension_semantics = [#tpu.dimension_semantics<parallel>], iteration_bounds = array<i64: 1>, scalar_prefetch = 0 : i64, scratch_operands = 0 : i64, tpu.core_type = #tpu.core_type<tc>, window_params = [{transform_indices = @transform_0, window_bounds = array<i64: 8, 32>}, {pipeline_mode = #tpu.pipeline_mode<synchronous>, transform_indices = @transform_1, window_bounds = array<i64: 32, 128>}, {pipeline_mode = #tpu.pipeline_mode<synchronous>, transform_indices = @transform_2, window_bounds = array<i64: 1, 128>}, {pipeline_mode = #tpu.pipeline_mode<synchronous>, transform_indices = @transform_3, window_bounds = array<i64: 128, 128>}, {pipeline_mode = #tpu.pipeline_mode<synchronous>, transform_indices = @transform_4, window_bounds = array<i64: 1, 128>}, {transform_indices = @transform_5, window_bounds = array<i64: 8, 128>}]} {
    %c0 = arith.constant 0 : index
    %c0_0 = arith.constant 0 : index
    %0 = vector.load %arg1[%c0, %c0_0] : memref<8x32xf32, #tpu.memory_space<vmem>>, vector<8x32xf32>
    %1 = arith.truncf %0 : vector<8x32xf32> to vector<8x32xbf16>
    %c0_1 = arith.constant 0 : index
    %c0_2 = arith.constant 0 : index
    %2 = vector.load %arg2[%c0_1, %c0_2] : memref<32x128xbf16, #tpu.memory_space<vmem>>, vector<32x128xbf16>
    %cst = arith.constant dense<0.000000e+00> : vector<8x128xf32>
    %3 = tpu.matmul %1, %2, %cst {dimension_numbers = #tpu.dot_dimension_numbers<[1], [0], [0], [1], [0, 0, 1, 1], [], []>} : vector<8x32xbf16>, vector<32x128xbf16>, vector<8x128xf32> -> vector<8x128xf32>
    %c0_3 = arith.constant 0 : index
    %c0_4 = arith.constant 0 : index
    %4 = vector.load %arg3[%c0_3, %c0_4] : memref<1x128xf32, #tpu.memory_space<vmem>>, vector<1x128xf32>
    %5 = vector.broadcast %4 : vector<1x128xf32> to vector<8x128xf32>
    %6 = arith.addf %3, %5 : vector<8x128xf32>
    %cst_5 = arith.constant 0.000000e+00 : f32
    %7 = vector.broadcast %cst_5 : f32 to vector<8x128xf32>
    %8 = arith.subf %7, %6 : vector<8x128xf32>
    %9 = math.exp %8 : vector<8x128xf32>
    %cst_6 = arith.constant 1.000000e+00 : f32
    %10 = vector.broadcast %cst_6 : f32 to vector<8x128xf32>
    %11 = arith.addf %10, %9 : vector<8x128xf32>
    %cst_7 = arith.constant 1.000000e+00 : f32
    %12 = vector.broadcast %cst_7 : f32 to vector<8x128xf32>
    %13 = arith.divf %12, %11 : vector<8x128xf32>
    %14 = arith.mulf %6, %13 : vector<8x128xf32>
    %15 = arith.truncf %14 : vector<8x128xf32> to vector<8x128xbf16>
    %c0_8 = arith.constant 0 : index
    %c0_9 = arith.constant 0 : index
    %16 = vector.load %arg4[%c0_8, %c0_9] : memref<128x128xbf16, #tpu.memory_space<vmem>>, vector<128x128xbf16>
    %cst_10 = arith.constant dense<0.000000e+00> : vector<8x128xf32>
    %17 = tpu.matmul %15, %16, %cst_10 {dimension_numbers = #tpu.dot_dimension_numbers<[1], [0], [0], [1], [0, 0, 1, 1], [], []>} : vector<8x128xbf16>, vector<128x128xbf16>, vector<8x128xf32> -> vector<8x128xf32>
    %c0_11 = arith.constant 0 : index
    %c0_12 = arith.constant 0 : index
    %18 = vector.load %arg5[%c0_11, %c0_12] : memref<1x128xf32, #tpu.memory_space<vmem>>, vector<1x128xf32>
    %19 = vector.broadcast %18 : vector<1x128xf32> to vector<8x128xf32>
    %20 = arith.addf %17, %19 : vector<8x128xf32>
    %c0_13 = arith.constant 0 : index
    %c0_14 = arith.constant 0 : index
    %21 = vector.load %arg6[%c0_13, %c0_14] : memref<8x128xf32, #tpu.memory_space<vmem>>, vector<8x128xf32>
    tpu.vector_store %arg6[%c0_13, %c0_14], %20 {strides = array<i32>} : memref<8x128xf32, #tpu.memory_space<vmem>>, vector<8x128xf32>,
    return
  }
  func.func @transform_0(%arg0: i32) -> (i32, i32) {
    %c0_i32 = arith.constant 0 : i32
    %c0_i32_0 = arith.constant 0 : i32
    return %arg0, %c0_i32 : i32, i32
  }
  func.func @transform_1(%arg0: i32) -> (i32, i32) {
    %c0_i32 = arith.constant 0 : i32
    %c0_i32_0 = arith.constant 0 : i32
    %c0_i32_1 = arith.constant 0 : i32
    return %c0_i32, %c0_i32_0 : i32, i32
  }
  func.func @transform_2(%arg0: i32) -> (i32, i32) {
    %c0_i32 = arith.constant 0 : i32
    %c0_i32_0 = arith.constant 0 : i32
    %c0_i32_1 = arith.constant 0 : i32
    return %c0_i32, %c0_i32_0 : i32, i32
  }
  func.func @transform_3(%arg0: i32) -> (i32, i32) {
    %c0_i32 = arith.constant 0 : i32
    %c0_i32_0 = arith.constant 0 : i32
    %c0_i32_1 = arith.constant 0 : i32
    return %c0_i32, %c0_i32_0 : i32, i32
  }
  func.func @transform_4(%arg0: i32) -> (i32, i32) {
    %c0_i32 = arith.constant 0 : i32
    %c0_i32_0 = arith.constant 0 : i32
    %c0_i32_1 = arith.constant 0 : i32
    return %c0_i32, %c0_i32_0 : i32, i32
  }
  func.func @transform_5(%arg0: i32) -> (i32, i32) {
    %c0_i32 = arith.constant 0 : i32
    %c0_i32_0 = arith.constant 0 : i32
    return %arg0, %c0_i32 : i32, i32
  }
}

module attributes {stable_mosaic.version = 11 : i64} {
  func.func @_edge_fwd_kernel(%arg0: i32, %arg1: memref<8x1xf32, #tpu.memory_space<vmem>>, %arg2: memref<8x128xf32, #tpu.memory_space<vmem>>, %arg3: memref<8x128xf32, #tpu.memory_space<vmem>>, %arg4: memref<8x128xf32, #tpu.memory_space<vmem>>, %arg5: memref<8x128xbf16, #tpu.memory_space<vmem>>, %arg6: memref<1x128xf32, #tpu.memory_space<vmem>>, %arg7: memref<128x384xbf16, #tpu.memory_space<vmem>>, %arg8: memref<8x128xf32, #tpu.memory_space<vmem>>) attributes {dimension_semantics = [#tpu.dimension_semantics<parallel>], iteration_bounds = array<i64: 2>, scalar_prefetch = 0 : i64, scratch_operands = 0 : i64, tpu.core_type = #tpu.core_type<tc>, window_params = [{transform_indices = @transform_0, window_bounds = array<i64: 8, 1>}, {transform_indices = @transform_1, window_bounds = array<i64: 8, 128>}, {transform_indices = @transform_2, window_bounds = array<i64: 8, 128>}, {transform_indices = @transform_3, window_bounds = array<i64: 8, 128>}, {pipeline_mode = #tpu.pipeline_mode<synchronous>, transform_indices = @transform_4, window_bounds = array<i64: 8, 128>}, {pipeline_mode = #tpu.pipeline_mode<synchronous>, transform_indices = @transform_5, window_bounds = array<i64: 1, 128>}, {pipeline_mode = #tpu.pipeline_mode<synchronous>, transform_indices = @transform_6, window_bounds = array<i64: 128, 384>}, {transform_indices = @transform_7, window_bounds = array<i64: 8, 128>}]} {
    %c0 = arith.constant 0 : index
    %c0_0 = arith.constant 0 : index
    %0 = vector.load %arg1[%c0, %c0_0] : memref<8x1xf32, #tpu.memory_space<vmem>>, vector<8x1xf32>
    %cst = arith.constant 9.99999996E-13 : f32
    %1 = vector.broadcast %cst : f32 to vector<8x1xf32>
    %2 = arith.maximumf %0, %1 : vector<8x1xf32>
    %cst_1 = arith.constant 1.000000e+00 : f32
    %3 = vector.broadcast %cst_1 : f32 to vector<8x1xf32>
    %4 = arith.divf %3, %2 : vector<8x1xf32>
    %5 = tpu.iota {dimensions = array<i32: 1>} : vector<8x8xi32>
    %c1_i32 = arith.constant 1 : i32
    %6 = vector.broadcast %c1_i32 : i32 to vector<8x8xi32>
    %7 = arith.addi %5, %6 : vector<8x8xi32>
    %8 = arith.sitofp %7 : vector<8x8xi32> to vector<8x8xf32>
    %cst_2 = arith.constant 0.628318548 : f32
    %9 = vector.broadcast %cst_2 : f32 to vector<8x1xf32>
    %10 = arith.mulf %9, %0 : vector<8x1xf32>
    %11 = vector.broadcast %10 : vector<8x1xf32> to vector<8x8xf32>
    %12 = arith.mulf %8, %11 : vector<8x8xf32>
    %13 = math.sin %12 : vector<8x8xf32>
    %cst_3 = arith.constant 0.632455527 : f32
    %14 = vector.broadcast %cst_3 : f32 to vector<8x8xf32>
    %15 = arith.mulf %14, %13 : vector<8x8xf32>
    %16 = vector.broadcast %4 : vector<8x1xf32> to vector<8x8xf32>
    %17 = arith.mulf %15, %16 : vector<8x8xf32>
    %cst_4 = arith.constant 0.628318548 : f32
    %18 = vector.broadcast %cst_4 : f32 to vector<8x1xf32>
    %19 = arith.mulf %18, %0 : vector<8x1xf32>
    %20 = math.cos %19 : vector<8x1xf32>
    %cst_5 = arith.constant 1.000000e+00 : f32
    %21 = vector.broadcast %cst_5 : f32 to vector<8x1xf32>
    %22 = arith.addf %20, %21 : vector<8x1xf32>
    %cst_6 = arith.constant 5.000000e-01 : f32
    %23 = vector.broadcast %cst_6 : f32 to vector<8x1xf32>
    %24 = arith.mulf %23, %22 : vector<8x1xf32>
    %cst_7 = arith.constant 5.000000e+00 : f32
    %25 = vector.broadcast %cst_7 : f32 to vector<8x1xf32>
    %26 = arith.cmpf olt, %0, %25 : vector<8x1xf32>
    %cst_8 = arith.constant 1.000000e+00 : f32
    %cst_9 = arith.constant 0.000000e+00 : f32
    %27 = vector.broadcast %cst_8 : f32 to vector<8x1xf32>
    %28 = vector.broadcast %cst_9 : f32 to vector<8x1xf32>
    %29 = arith.select %26, %27, %28 : vector<8x1xi1>, vector<8x1xf32>
    %30 = arith.mulf %24, %29 : vector<8x1xf32>
    %31 = arith.truncf %17 : vector<8x8xf32> to vector<8x8xbf16>
    %c0_10 = arith.constant 0 : index
    %c0_11 = arith.constant 0 : index
    %32 = vector.load %arg5[%c0_10, %c0_11] : memref<8x128xbf16, #tpu.memory_space<vmem>>, vector<8x128xbf16>
    %cst_12 = arith.constant dense<0.000000e+00> : vector<8x128xf32>
    %33 = tpu.matmul %31, %32, %cst_12 {dimension_numbers = #tpu.dot_dimension_numbers<[1], [0], [0], [1], [0, 0, 1, 1], [], []>} : vector<8x8xbf16>, vector<8x128xbf16>, vector<8x128xf32> -> vector<8x128xf32>
    %c0_13 = arith.constant 0 : index
    %c0_14 = arith.constant 0 : index
    %34 = vector.load %arg6[%c0_13, %c0_14] : memref<1x128xf32, #tpu.memory_space<vmem>>, vector<1x128xf32>
    %35 = vector.broadcast %34 : vector<1x128xf32> to vector<8x128xf32>
    %36 = arith.addf %33, %35 : vector<8x128xf32>
    %37 = vector.broadcast %30 : vector<8x1xf32> to vector<8x128xf32>
    %38 = arith.mulf %36, %37 : vector<8x128xf32>
    %c0_15 = arith.constant 0 : index
    %c0_16 = arith.constant 0 : index
    %39 = vector.load %arg2[%c0_15, %c0_16] : memref<8x128xf32, #tpu.memory_space<vmem>>, vector<8x128xf32>
    %40 = arith.mulf %39, %38 : vector<8x128xf32>
    %41 = arith.truncf %40 : vector<8x128xf32> to vector<8x128xbf16>
    %c0_17 = arith.constant 0 : index
    %c0_18 = arith.constant 0 : index
    %42 = vector.load %arg7[%c0_17, %c0_18] : memref<128x384xbf16, #tpu.memory_space<vmem>>, vector<128x384xbf16>
    %cst_19 = arith.constant dense<0.000000e+00> : vector<8x384xf32>
    %43 = tpu.matmul %41, %42, %cst_19 {dimension_numbers = #tpu.dot_dimension_numbers<[1], [0], [0], [1], [0, 0, 1, 1], [], []>} : vector<8x128xbf16>, vector<128x384xbf16>, vector<8x384xf32> -> vector<8x384xf32>
    %c0_20 = arith.constant 0 : index
    %c0_21 = arith.constant 0 : index
    %44 = vector.load %arg3[%c0_20, %c0_21] : memref<8x128xf32, #tpu.memory_space<vmem>>, vector<8x128xf32>
    %45 = vector.extract_strided_slice %43 {offsets = [0, 0], sizes = [8, 128], strides = [1, 1]} : vector<8x384xf32> to vector<8x128xf32>
    %46 = arith.mulf %44, %45 : vector<8x128xf32>
    %c0_22 = arith.constant 0 : index
    %c0_23 = arith.constant 0 : index
    %47 = vector.load %arg4[%c0_22, %c0_23] : memref<8x128xf32, #tpu.memory_space<vmem>>, vector<8x128xf32>
    %48 = vector.extract_strided_slice %43 {offsets = [0, 128], sizes = [8, 128], strides = [1, 1]} : vector<8x384xf32> to vector<8x128xf32>
    %49 = arith.mulf %47, %48 : vector<8x128xf32>
    %50 = arith.addf %46, %49 : vector<8x128xf32>
    %51 = vector.extract_strided_slice %43 {offsets = [0, 256], sizes = [8, 128], strides = [1, 1]} : vector<8x384xf32> to vector<8x128xf32>
    %52 = arith.addf %50, %51 : vector<8x128xf32>
    %c0_24 = arith.constant 0 : index
    %c0_25 = arith.constant 0 : index
    %53 = vector.load %arg8[%c0_24, %c0_25] : memref<8x128xf32, #tpu.memory_space<vmem>>, vector<8x128xf32>
    tpu.vector_store %arg8[%c0_24, %c0_25], %52 {strides = array<i32>} : memref<8x128xf32, #tpu.memory_space<vmem>>, vector<8x128xf32>,
    return
  }
  func.func @transform_0(%arg0: i32) -> (i32, i32) {
    %c0_i32 = arith.constant 0 : i32
    %c0_i32_0 = arith.constant 0 : i32
    return %arg0, %c0_i32 : i32, i32
  }
  func.func @transform_1(%arg0: i32) -> (i32, i32) {
    %c0_i32 = arith.constant 0 : i32
    %c0_i32_0 = arith.constant 0 : i32
    return %arg0, %c0_i32 : i32, i32
  }
  func.func @transform_2(%arg0: i32) -> (i32, i32) {
    %c0_i32 = arith.constant 0 : i32
    %c0_i32_0 = arith.constant 0 : i32
    return %arg0, %c0_i32 : i32, i32
  }
  func.func @transform_3(%arg0: i32) -> (i32, i32) {
    %c0_i32 = arith.constant 0 : i32
    %c0_i32_0 = arith.constant 0 : i32
    return %arg0, %c0_i32 : i32, i32
  }
  func.func @transform_4(%arg0: i32) -> (i32, i32) {
    %c0_i32 = arith.constant 0 : i32
    %c0_i32_0 = arith.constant 0 : i32
    %c0_i32_1 = arith.constant 0 : i32
    return %c0_i32, %c0_i32_0 : i32, i32
  }
  func.func @transform_5(%arg0: i32) -> (i32, i32) {
    %c0_i32 = arith.constant 0 : i32
    %c0_i32_0 = arith.constant 0 : i32
    %c0_i32_1 = arith.constant 0 : i32
    return %c0_i32, %c0_i32_0 : i32, i32
  }
  func.func @transform_6(%arg0: i32) -> (i32, i32) {
    %c0_i32 = arith.constant 0 : i32
    %c0_i32_0 = arith.constant 0 : i32
    %c0_i32_1 = arith.constant 0 : i32
    return %c0_i32, %c0_i32_0 : i32, i32
  }
  func.func @transform_7(%arg0: i32) -> (i32, i32) {
    %c0_i32 = arith.constant 0 : i32
    %c0_i32_0 = arith.constant 0 : i32
    return %arg0, %c0_i32 : i32, i32
  }
}

module attributes {stable_mosaic.version = 11 : i64} {
  func.func @_mlp2_kernel_res(%arg0: i32, %arg1: memref<8x64xf32, #tpu.memory_space<vmem>>, %arg2: memref<64x128xbf16, #tpu.memory_space<vmem>>, %arg3: memref<1x128xf32, #tpu.memory_space<vmem>>, %arg4: memref<128x128xbf16, #tpu.memory_space<vmem>>, %arg5: memref<1x128xf32, #tpu.memory_space<vmem>>, %arg6: memref<8x128xf32, #tpu.memory_space<vmem>>, %arg7: memref<8x128xf32, #tpu.memory_space<vmem>>) attributes {dimension_semantics = [#tpu.dimension_semantics<parallel>], iteration_bounds = array<i64: 1>, scalar_prefetch = 0 : i64, scratch_operands = 0 : i64, tpu.core_type = #tpu.core_type<tc>, window_params = [{transform_indices = @transform_0, window_bounds = array<i64: 8, 64>}, {pipeline_mode = #tpu.pipeline_mode<synchronous>, transform_indices = @transform_1, window_bounds = array<i64: 64, 128>}, {pipeline_mode = #tpu.pipeline_mode<synchronous>, transform_indices = @transform_2, window_bounds = array<i64: 1, 128>}, {pipeline_mode = #tpu.pipeline_mode<synchronous>, transform_indices = @transform_3, window_bounds = array<i64: 128, 128>}, {pipeline_mode = #tpu.pipeline_mode<synchronous>, transform_indices = @transform_4, window_bounds = array<i64: 1, 128>}, {transform_indices = @transform_5, window_bounds = array<i64: 8, 128>}, {transform_indices = @transform_6, window_bounds = array<i64: 8, 128>}]} {
    %c0 = arith.constant 0 : index
    %c0_0 = arith.constant 0 : index
    %0 = vector.load %arg1[%c0, %c0_0] : memref<8x64xf32, #tpu.memory_space<vmem>>, vector<8x64xf32>
    %1 = arith.truncf %0 : vector<8x64xf32> to vector<8x64xbf16>
    %c0_1 = arith.constant 0 : index
    %c0_2 = arith.constant 0 : index
    %2 = vector.load %arg2[%c0_1, %c0_2] : memref<64x128xbf16, #tpu.memory_space<vmem>>, vector<64x128xbf16>
    %cst = arith.constant dense<0.000000e+00> : vector<8x128xf32>
    %3 = tpu.matmul %1, %2, %cst {dimension_numbers = #tpu.dot_dimension_numbers<[1], [0], [0], [1], [0, 0, 1, 1], [], []>} : vector<8x64xbf16>, vector<64x128xbf16>, vector<8x128xf32> -> vector<8x128xf32>
    %c0_3 = arith.constant 0 : index
    %c0_4 = arith.constant 0 : index
    %4 = vector.load %arg3[%c0_3, %c0_4] : memref<1x128xf32, #tpu.memory_space<vmem>>, vector<1x128xf32>
    %5 = vector.broadcast %4 : vector<1x128xf32> to vector<8x128xf32>
    %6 = arith.addf %3, %5 : vector<8x128xf32>
    %cst_5 = arith.constant 0.000000e+00 : f32
    %7 = vector.broadcast %cst_5 : f32 to vector<8x128xf32>
    %8 = arith.subf %7, %6 : vector<8x128xf32>
    %9 = math.exp %8 : vector<8x128xf32>
    %cst_6 = arith.constant 1.000000e+00 : f32
    %10 = vector.broadcast %cst_6 : f32 to vector<8x128xf32>
    %11 = arith.addf %10, %9 : vector<8x128xf32>
    %cst_7 = arith.constant 1.000000e+00 : f32
    %12 = vector.broadcast %cst_7 : f32 to vector<8x128xf32>
    %13 = arith.divf %12, %11 : vector<8x128xf32>
    %14 = arith.mulf %6, %13 : vector<8x128xf32>
    %15 = arith.truncf %14 : vector<8x128xf32> to vector<8x128xbf16>
    %c0_8 = arith.constant 0 : index
    %c0_9 = arith.constant 0 : index
    %16 = vector.load %arg4[%c0_8, %c0_9] : memref<128x128xbf16, #tpu.memory_space<vmem>>, vector<128x128xbf16>
    %cst_10 = arith.constant dense<0.000000e+00> : vector<8x128xf32>
    %17 = tpu.matmul %15, %16, %cst_10 {dimension_numbers = #tpu.dot_dimension_numbers<[1], [0], [0], [1], [0, 0, 1, 1], [], []>} : vector<8x128xbf16>, vector<128x128xbf16>, vector<8x128xf32> -> vector<8x128xf32>
    %c0_11 = arith.constant 0 : index
    %c0_12 = arith.constant 0 : index
    %18 = vector.load %arg5[%c0_11, %c0_12] : memref<1x128xf32, #tpu.memory_space<vmem>>, vector<1x128xf32>
    %19 = vector.broadcast %18 : vector<1x128xf32> to vector<8x128xf32>
    %20 = arith.addf %17, %19 : vector<8x128xf32>
    %c0_13 = arith.constant 0 : index
    %c0_14 = arith.constant 0 : index
    %21 = vector.load %arg6[%c0_13, %c0_14] : memref<8x128xf32, #tpu.memory_space<vmem>>, vector<8x128xf32>
    tpu.vector_store %arg6[%c0_13, %c0_14], %20 {strides = array<i32>} : memref<8x128xf32, #tpu.memory_space<vmem>>, vector<8x128xf32>,
    %c0_15 = arith.constant 0 : index
    %c0_16 = arith.constant 0 : index
    %22 = vector.load %arg7[%c0_15, %c0_16] : memref<8x128xf32, #tpu.memory_space<vmem>>, vector<8x128xf32>
    tpu.vector_store %arg7[%c0_15, %c0_16], %6 {strides = array<i32>} : memref<8x128xf32, #tpu.memory_space<vmem>>, vector<8x128xf32>,
    return
  }
  func.func @transform_0(%arg0: i32) -> (i32, i32) {
    %c0_i32 = arith.constant 0 : i32
    %c0_i32_0 = arith.constant 0 : i32
    return %arg0, %c0_i32 : i32, i32
  }
  func.func @transform_1(%arg0: i32) -> (i32, i32) {
    %c0_i32 = arith.constant 0 : i32
    %c0_i32_0 = arith.constant 0 : i32
    %c0_i32_1 = arith.constant 0 : i32
    return %c0_i32, %c0_i32_0 : i32, i32
  }
  func.func @transform_2(%arg0: i32) -> (i32, i32) {
    %c0_i32 = arith.constant 0 : i32
    %c0_i32_0 = arith.constant 0 : i32
    %c0_i32_1 = arith.constant 0 : i32
    return %c0_i32, %c0_i32_0 : i32, i32
  }
  func.func @transform_3(%arg0: i32) -> (i32, i32) {
    %c0_i32 = arith.constant 0 : i32
    %c0_i32_0 = arith.constant 0 : i32
    %c0_i32_1 = arith.constant 0 : i32
    return %c0_i32, %c0_i32_0 : i32, i32
  }
  func.func @transform_4(%arg0: i32) -> (i32, i32) {
    %c0_i32 = arith.constant 0 : i32
    %c0_i32_0 = arith.constant 0 : i32
    %c0_i32_1 = arith.constant 0 : i32
    return %c0_i32, %c0_i32_0 : i32, i32
  }
  func.func @transform_5(%arg0: i32) -> (i32, i32) {
    %c0_i32 = arith.constant 0 : i32
    %c0_i32_0 = arith.constant 0 : i32
    return %arg0, %c0_i32 : i32, i32
  }
  func.func @transform_6(%arg0: i32) -> (i32, i32) {
    %c0_i32 = arith.constant 0 : i32
    %c0_i32_0 = arith.constant 0 : i32
    return %arg0, %c0_i32 : i32, i32
  }
}

module attributes {stable_mosaic.version = 11 : i64} {
  func.func @_linear_kernel(%arg0: i32, %arg1: memref<8x32xf32, #tpu.memory_space<vmem>>, %arg2: memref<32x128xbf16, #tpu.memory_space<vmem>>, %arg3: memref<1x128xf32, #tpu.memory_space<vmem>>, %arg4: memref<8x128xf32, #tpu.memory_space<vmem>>) attributes {dimension_semantics = [#tpu.dimension_semantics<parallel>], iteration_bounds = array<i64: 1>, scalar_prefetch = 0 : i64, scratch_operands = 0 : i64, tpu.core_type = #tpu.core_type<tc>, window_params = [{transform_indices = @transform_0, window_bounds = array<i64: 8, 32>}, {pipeline_mode = #tpu.pipeline_mode<synchronous>, transform_indices = @transform_1, window_bounds = array<i64: 32, 128>}, {pipeline_mode = #tpu.pipeline_mode<synchronous>, transform_indices = @transform_2, window_bounds = array<i64: 1, 128>}, {transform_indices = @transform_3, window_bounds = array<i64: 8, 128>}]} {
    %c0 = arith.constant 0 : index
    %c0_0 = arith.constant 0 : index
    %0 = vector.load %arg1[%c0, %c0_0] : memref<8x32xf32, #tpu.memory_space<vmem>>, vector<8x32xf32>
    %1 = arith.truncf %0 : vector<8x32xf32> to vector<8x32xbf16>
    %c0_1 = arith.constant 0 : index
    %c0_2 = arith.constant 0 : index
    %2 = vector.load %arg2[%c0_1, %c0_2] : memref<32x128xbf16, #tpu.memory_space<vmem>>, vector<32x128xbf16>
    %cst = arith.constant dense<0.000000e+00> : vector<8x128xf32>
    %3 = tpu.matmul %1, %2, %cst {dimension_numbers = #tpu.dot_dimension_numbers<[1], [0], [0], [1], [0, 0, 1, 1], [], []>} : vector<8x32xbf16>, vector<32x128xbf16>, vector<8x128xf32> -> vector<8x128xf32>
    %c0_3 = arith.constant 0 : index
    %c0_4 = arith.constant 0 : index
    %4 = vector.load %arg3[%c0_3, %c0_4] : memref<1x128xf32, #tpu.memory_space<vmem>>, vector<1x128xf32>
    %5 = vector.broadcast %4 : vector<1x128xf32> to vector<8x128xf32>
    %6 = arith.addf %3, %5 : vector<8x128xf32>
    %c0_5 = arith.constant 0 : index
    %c0_6 = arith.constant 0 : index
    %7 = vector.load %arg4[%c0_5, %c0_6] : memref<8x128xf32, #tpu.memory_space<vmem>>, vector<8x128xf32>
    tpu.vector_store %arg4[%c0_5, %c0_6], %6 {strides = array<i32>} : memref<8x128xf32, #tpu.memory_space<vmem>>, vector<8x128xf32>,
    return
  }
  func.func @transform_0(%arg0: i32) -> (i32, i32) {
    %c0_i32 = arith.constant 0 : i32
    %c0_i32_0 = arith.constant 0 : i32
    return %arg0, %c0_i32 : i32, i32
  }
  func.func @transform_1(%arg0: i32) -> (i32, i32) {
    %c0_i32 = arith.constant 0 : i32
    %c0_i32_0 = arith.constant 0 : i32
    %c0_i32_1 = arith.constant 0 : i32
    return %c0_i32, %c0_i32_0 : i32, i32
  }
  func.func @transform_2(%arg0: i32) -> (i32, i32) {
    %c0_i32 = arith.constant 0 : i32
    %c0_i32_0 = arith.constant 0 : i32
    %c0_i32_1 = arith.constant 0 : i32
    return %c0_i32, %c0_i32_0 : i32, i32
  }
  func.func @transform_3(%arg0: i32) -> (i32, i32) {
    %c0_i32 = arith.constant 0 : i32
    %c0_i32_0 = arith.constant 0 : i32
    return %arg0, %c0_i32 : i32, i32
  }
}

module attributes {stable_mosaic.version = 11 : i64} {
  func.func @_mlp2_kernel_res(%arg0: i32, %arg1: memref<8x32xf32, #tpu.memory_space<vmem>>, %arg2: memref<32x128xbf16, #tpu.memory_space<vmem>>, %arg3: memref<1x128xf32, #tpu.memory_space<vmem>>, %arg4: memref<128x128xbf16, #tpu.memory_space<vmem>>, %arg5: memref<1x128xf32, #tpu.memory_space<vmem>>, %arg6: memref<8x128xf32, #tpu.memory_space<vmem>>, %arg7: memref<8x128xf32, #tpu.memory_space<vmem>>) attributes {dimension_semantics = [#tpu.dimension_semantics<parallel>], iteration_bounds = array<i64: 1>, scalar_prefetch = 0 : i64, scratch_operands = 0 : i64, tpu.core_type = #tpu.core_type<tc>, window_params = [{transform_indices = @transform_0, window_bounds = array<i64: 8, 32>}, {pipeline_mode = #tpu.pipeline_mode<synchronous>, transform_indices = @transform_1, window_bounds = array<i64: 32, 128>}, {pipeline_mode = #tpu.pipeline_mode<synchronous>, transform_indices = @transform_2, window_bounds = array<i64: 1, 128>}, {pipeline_mode = #tpu.pipeline_mode<synchronous>, transform_indices = @transform_3, window_bounds = array<i64: 128, 128>}, {pipeline_mode = #tpu.pipeline_mode<synchronous>, transform_indices = @transform_4, window_bounds = array<i64: 1, 128>}, {transform_indices = @transform_5, window_bounds = array<i64: 8, 128>}, {transform_indices = @transform_6, window_bounds = array<i64: 8, 128>}]} {
    %c0 = arith.constant 0 : index
    %c0_0 = arith.constant 0 : index
    %0 = vector.load %arg1[%c0, %c0_0] : memref<8x32xf32, #tpu.memory_space<vmem>>, vector<8x32xf32>
    %1 = arith.truncf %0 : vector<8x32xf32> to vector<8x32xbf16>
    %c0_1 = arith.constant 0 : index
    %c0_2 = arith.constant 0 : index
    %2 = vector.load %arg2[%c0_1, %c0_2] : memref<32x128xbf16, #tpu.memory_space<vmem>>, vector<32x128xbf16>
    %cst = arith.constant dense<0.000000e+00> : vector<8x128xf32>
    %3 = tpu.matmul %1, %2, %cst {dimension_numbers = #tpu.dot_dimension_numbers<[1], [0], [0], [1], [0, 0, 1, 1], [], []>} : vector<8x32xbf16>, vector<32x128xbf16>, vector<8x128xf32> -> vector<8x128xf32>
    %c0_3 = arith.constant 0 : index
    %c0_4 = arith.constant 0 : index
    %4 = vector.load %arg3[%c0_3, %c0_4] : memref<1x128xf32, #tpu.memory_space<vmem>>, vector<1x128xf32>
    %5 = vector.broadcast %4 : vector<1x128xf32> to vector<8x128xf32>
    %6 = arith.addf %3, %5 : vector<8x128xf32>
    %cst_5 = arith.constant 0.000000e+00 : f32
    %7 = vector.broadcast %cst_5 : f32 to vector<8x128xf32>
    %8 = arith.subf %7, %6 : vector<8x128xf32>
    %9 = math.exp %8 : vector<8x128xf32>
    %cst_6 = arith.constant 1.000000e+00 : f32
    %10 = vector.broadcast %cst_6 : f32 to vector<8x128xf32>
    %11 = arith.addf %10, %9 : vector<8x128xf32>
    %cst_7 = arith.constant 1.000000e+00 : f32
    %12 = vector.broadcast %cst_7 : f32 to vector<8x128xf32>
    %13 = arith.divf %12, %11 : vector<8x128xf32>
    %14 = arith.mulf %6, %13 : vector<8x128xf32>
    %15 = arith.truncf %14 : vector<8x128xf32> to vector<8x128xbf16>
    %c0_8 = arith.constant 0 : index
    %c0_9 = arith.constant 0 : index
    %16 = vector.load %arg4[%c0_8, %c0_9] : memref<128x128xbf16, #tpu.memory_space<vmem>>, vector<128x128xbf16>
    %cst_10 = arith.constant dense<0.000000e+00> : vector<8x128xf32>
    %17 = tpu.matmul %15, %16, %cst_10 {dimension_numbers = #tpu.dot_dimension_numbers<[1], [0], [0], [1], [0, 0, 1, 1], [], []>} : vector<8x128xbf16>, vector<128x128xbf16>, vector<8x128xf32> -> vector<8x128xf32>
    %c0_11 = arith.constant 0 : index
    %c0_12 = arith.constant 0 : index
    %18 = vector.load %arg5[%c0_11, %c0_12] : memref<1x128xf32, #tpu.memory_space<vmem>>, vector<1x128xf32>
    %19 = vector.broadcast %18 : vector<1x128xf32> to vector<8x128xf32>
    %20 = arith.addf %17, %19 : vector<8x128xf32>
    %c0_13 = arith.constant 0 : index
    %c0_14 = arith.constant 0 : index
    %21 = vector.load %arg6[%c0_13, %c0_14] : memref<8x128xf32, #tpu.memory_space<vmem>>, vector<8x128xf32>
    tpu.vector_store %arg6[%c0_13, %c0_14], %20 {strides = array<i32>} : memref<8x128xf32, #tpu.memory_space<vmem>>, vector<8x128xf32>,
    %c0_15 = arith.constant 0 : index
    %c0_16 = arith.constant 0 : index
    %22 = vector.load %arg7[%c0_15, %c0_16] : memref<8x128xf32, #tpu.memory_space<vmem>>, vector<8x128xf32>
    tpu.vector_store %arg7[%c0_15, %c0_16], %6 {strides = array<i32>} : memref<8x128xf32, #tpu.memory_space<vmem>>, vector<8x128xf32>,
    return
  }
  func.func @transform_0(%arg0: i32) -> (i32, i32) {
    %c0_i32 = arith.constant 0 : i32
    %c0_i32_0 = arith.constant 0 : i32
    return %arg0, %c0_i32 : i32, i32
  }
  func.func @transform_1(%arg0: i32) -> (i32, i32) {
    %c0_i32 = arith.constant 0 : i32
    %c0_i32_0 = arith.constant 0 : i32
    %c0_i32_1 = arith.constant 0 : i32
    return %c0_i32, %c0_i32_0 : i32, i32
  }
  func.func @transform_2(%arg0: i32) -> (i32, i32) {
    %c0_i32 = arith.constant 0 : i32
    %c0_i32_0 = arith.constant 0 : i32
    %c0_i32_1 = arith.constant 0 : i32
    return %c0_i32, %c0_i32_0 : i32, i32
  }
  func.func @transform_3(%arg0: i32) -> (i32, i32) {
    %c0_i32 = arith.constant 0 : i32
    %c0_i32_0 = arith.constant 0 : i32
    %c0_i32_1 = arith.constant 0 : i32
    return %c0_i32, %c0_i32_0 : i32, i32
  }
  func.func @transform_4(%arg0: i32) -> (i32, i32) {
    %c0_i32 = arith.constant 0 : i32
    %c0_i32_0 = arith.constant 0 : i32
    %c0_i32_1 = arith.constant 0 : i32
    return %c0_i32, %c0_i32_0 : i32, i32
  }
  func.func @transform_5(%arg0: i32) -> (i32, i32) {
    %c0_i32 = arith.constant 0 : i32
    %c0_i32_0 = arith.constant 0 : i32
    return %arg0, %c0_i32 : i32, i32
  }
  func.func @transform_6(%arg0: i32) -> (i32, i32) {
    %c0_i32 = arith.constant 0 : i32
    %c0_i32_0 = arith.constant 0 : i32
    return %arg0, %c0_i32 : i32, i32
  }
}

module attributes {stable_mosaic.version = 11 : i64} {
  func.func @_mm_nt_kernel(%arg0: i32, %arg1: memref<8x128xf32, #tpu.memory_space<vmem>>, %arg2: memref<128x128xbf16, #tpu.memory_space<vmem>>, %arg3: memref<8x128xf32, #tpu.memory_space<vmem>>) attributes {dimension_semantics = [#tpu.dimension_semantics<parallel>], iteration_bounds = array<i64: 1>, scalar_prefetch = 0 : i64, scratch_operands = 0 : i64, tpu.core_type = #tpu.core_type<tc>, window_params = [{transform_indices = @transform_0, window_bounds = array<i64: 8, 128>}, {pipeline_mode = #tpu.pipeline_mode<synchronous>, transform_indices = @transform_1, window_bounds = array<i64: 128, 128>}, {transform_indices = @transform_2, window_bounds = array<i64: 8, 128>}]} {
    %c0 = arith.constant 0 : index
    %c0_0 = arith.constant 0 : index
    %0 = vector.load %arg1[%c0, %c0_0] : memref<8x128xf32, #tpu.memory_space<vmem>>, vector<8x128xf32>
    %1 = arith.truncf %0 : vector<8x128xf32> to vector<8x128xbf16>
    %c0_1 = arith.constant 0 : index
    %c0_2 = arith.constant 0 : index
    %2 = vector.load %arg2[%c0_1, %c0_2] : memref<128x128xbf16, #tpu.memory_space<vmem>>, vector<128x128xbf16>
    %cst = arith.constant dense<0.000000e+00> : vector<8x128xf32>
    %3 = tpu.matmul %1, %2, %cst {dimension_numbers = #tpu.dot_dimension_numbers<[1], [1], [0], [0], [0, 0, 1, 0], [], []>} : vector<8x128xbf16>, vector<128x128xbf16>, vector<8x128xf32> -> vector<8x128xf32>
    %c0_3 = arith.constant 0 : index
    %c0_4 = arith.constant 0 : index
    %4 = vector.load %arg3[%c0_3, %c0_4] : memref<8x128xf32, #tpu.memory_space<vmem>>, vector<8x128xf32>
    tpu.vector_store %arg3[%c0_3, %c0_4], %3 {strides = array<i32>} : memref<8x128xf32, #tpu.memory_space<vmem>>, vector<8x128xf32>,
    return
  }
  func.func @transform_0(%arg0: i32) -> (i32, i32) {
    %c0_i32 = arith.constant 0 : i32
    %c0_i32_0 = arith.constant 0 : i32
    return %arg0, %c0_i32 : i32, i32
  }
  func.func @transform_1(%arg0: i32) -> (i32, i32) {
    %c0_i32 = arith.constant 0 : i32
    %c0_i32_0 = arith.constant 0 : i32
    %c0_i32_1 = arith.constant 0 : i32
    return %c0_i32, %c0_i32_0 : i32, i32
  }
  func.func @transform_2(%arg0: i32) -> (i32, i32) {
    %c0_i32 = arith.constant 0 : i32
    %c0_i32_0 = arith.constant 0 : i32
    return %arg0, %c0_i32 : i32, i32
  }
}

module attributes {stable_mosaic.version = 11 : i64} {
  func.func @_mm_nt_kernel(%arg0: i32, %arg1: memref<8x128xf32, #tpu.memory_space<vmem>>, %arg2: memref<128x128xbf16, #tpu.memory_space<vmem>>, %arg3: memref<8x128xf32, #tpu.memory_space<vmem>>) attributes {dimension_semantics = [#tpu.dimension_semantics<parallel>], iteration_bounds = array<i64: 1>, scalar_prefetch = 0 : i64, scratch_operands = 0 : i64, tpu.core_type = #tpu.core_type<tc>, window_params = [{transform_indices = @transform_0, window_bounds = array<i64: 8, 128>}, {pipeline_mode = #tpu.pipeline_mode<synchronous>, transform_indices = @transform_1, window_bounds = array<i64: 128, 128>}, {transform_indices = @transform_2, window_bounds = array<i64: 8, 128>}]} {
    %c0 = arith.constant 0 : index
    %c0_0 = arith.constant 0 : index
    %0 = vector.load %arg1[%c0, %c0_0] : memref<8x128xf32, #tpu.memory_space<vmem>>, vector<8x128xf32>
    %1 = arith.truncf %0 : vector<8x128xf32> to vector<8x128xbf16>
    %c0_1 = arith.constant 0 : index
    %c0_2 = arith.constant 0 : index
    %2 = vector.load %arg2[%c0_1, %c0_2] : memref<128x128xbf16, #tpu.memory_space<vmem>>, vector<128x128xbf16>
    %cst = arith.constant dense<0.000000e+00> : vector<8x128xf32>
    %3 = tpu.matmul %1, %2, %cst {dimension_numbers = #tpu.dot_dimension_numbers<[1], [1], [0], [0], [0, 0, 1, 0], [], []>} : vector<8x128xbf16>, vector<128x128xbf16>, vector<8x128xf32> -> vector<8x128xf32>
    %c0_3 = arith.constant 0 : index
    %c0_4 = arith.constant 0 : index
    %4 = vector.load %arg3[%c0_3, %c0_4] : memref<8x128xf32, #tpu.memory_space<vmem>>, vector<8x128xf32>
    tpu.vector_store %arg3[%c0_3, %c0_4], %3 {strides = array<i32>} : memref<8x128xf32, #tpu.memory_space<vmem>>, vector<8x128xf32>,
    return
  }
  func.func @transform_0(%arg0: i32) -> (i32, i32) {
    %c0_i32 = arith.constant 0 : i32
    %c0_i32_0 = arith.constant 0 : i32
    return %arg0, %c0_i32 : i32, i32
  }
  func.func @transform_1(%arg0: i32) -> (i32, i32) {
    %c0_i32 = arith.constant 0 : i32
    %c0_i32_0 = arith.constant 0 : i32
    %c0_i32_1 = arith.constant 0 : i32
    return %c0_i32, %c0_i32_0 : i32, i32
  }
  func.func @transform_2(%arg0: i32) -> (i32, i32) {
    %c0_i32 = arith.constant 0 : i32
    %c0_i32_0 = arith.constant 0 : i32
    return %arg0, %c0_i32 : i32, i32
  }
}

module attributes {stable_mosaic.version = 11 : i64} {
  func.func @_mm_nt_kernel(%arg0: i32, %arg1: memref<8x128xf32, #tpu.memory_space<vmem>>, %arg2: memref<32x128xbf16, #tpu.memory_space<vmem>>, %arg3: memref<8x32xf32, #tpu.memory_space<vmem>>) attributes {dimension_semantics = [#tpu.dimension_semantics<parallel>], iteration_bounds = array<i64: 1>, scalar_prefetch = 0 : i64, scratch_operands = 0 : i64, tpu.core_type = #tpu.core_type<tc>, window_params = [{transform_indices = @transform_0, window_bounds = array<i64: 8, 128>}, {pipeline_mode = #tpu.pipeline_mode<synchronous>, transform_indices = @transform_1, window_bounds = array<i64: 32, 128>}, {transform_indices = @transform_2, window_bounds = array<i64: 8, 32>}]} {
    %c0 = arith.constant 0 : index
    %c0_0 = arith.constant 0 : index
    %0 = vector.load %arg1[%c0, %c0_0] : memref<8x128xf32, #tpu.memory_space<vmem>>, vector<8x128xf32>
    %1 = arith.truncf %0 : vector<8x128xf32> to vector<8x128xbf16>
    %c0_1 = arith.constant 0 : index
    %c0_2 = arith.constant 0 : index
    %2 = vector.load %arg2[%c0_1, %c0_2] : memref<32x128xbf16, #tpu.memory_space<vmem>>, vector<32x128xbf16>
    %cst = arith.constant dense<0.000000e+00> : vector<8x32xf32>
    %3 = tpu.matmul %1, %2, %cst {dimension_numbers = #tpu.dot_dimension_numbers<[1], [1], [0], [0], [0, 0, 1, 0], [], []>} : vector<8x128xbf16>, vector<32x128xbf16>, vector<8x32xf32> -> vector<8x32xf32>
    %c0_3 = arith.constant 0 : index
    %c0_4 = arith.constant 0 : index
    %4 = vector.load %arg3[%c0_3, %c0_4] : memref<8x32xf32, #tpu.memory_space<vmem>>, vector<8x32xf32>
    tpu.vector_store %arg3[%c0_3, %c0_4], %3 {strides = array<i32>} : memref<8x32xf32, #tpu.memory_space<vmem>>, vector<8x32xf32>,
    return
  }
  func.func @transform_0(%arg0: i32) -> (i32, i32) {
    %c0_i32 = arith.constant 0 : i32
    %c0_i32_0 = arith.constant 0 : i32
    return %arg0, %c0_i32 : i32, i32
  }
  func.func @transform_1(%arg0: i32) -> (i32, i32) {
    %c0_i32 = arith.constant 0 : i32
    %c0_i32_0 = arith.constant 0 : i32
    %c0_i32_1 = arith.constant 0 : i32
    return %c0_i32, %c0_i32_0 : i32, i32
  }
  func.func @transform_2(%arg0: i32) -> (i32, i32) {
    %c0_i32 = arith.constant 0 : i32
    %c0_i32_0 = arith.constant 0 : i32
    return %arg0, %c0_i32 : i32, i32
  }
}

module attributes {stable_mosaic.version = 11 : i64} {
  func.func @_mm_nt_kernel(%arg0: i32, %arg1: memref<8x128xf32, #tpu.memory_space<vmem>>, %arg2: memref<64x128xbf16, #tpu.memory_space<vmem>>, %arg3: memref<8x64xf32, #tpu.memory_space<vmem>>) attributes {dimension_semantics = [#tpu.dimension_semantics<parallel>], iteration_bounds = array<i64: 1>, scalar_prefetch = 0 : i64, scratch_operands = 0 : i64, tpu.core_type = #tpu.core_type<tc>, window_params = [{transform_indices = @transform_0, window_bounds = array<i64: 8, 128>}, {pipeline_mode = #tpu.pipeline_mode<synchronous>, transform_indices = @transform_1, window_bounds = array<i64: 64, 128>}, {transform_indices = @transform_2, window_bounds = array<i64: 8, 64>}]} {
    %c0 = arith.constant 0 : index
    %c0_0 = arith.constant 0 : index
    %0 = vector.load %arg1[%c0, %c0_0] : memref<8x128xf32, #tpu.memory_space<vmem>>, vector<8x128xf32>
    %1 = arith.truncf %0 : vector<8x128xf32> to vector<8x128xbf16>
    %c0_1 = arith.constant 0 : index
    %c0_2 = arith.constant 0 : index
    %2 = vector.load %arg2[%c0_1, %c0_2] : memref<64x128xbf16, #tpu.memory_space<vmem>>, vector<64x128xbf16>
    %cst = arith.constant dense<0.000000e+00> : vector<8x64xf32>
    %3 = tpu.matmul %1, %2, %cst {dimension_numbers = #tpu.dot_dimension_numbers<[1], [1], [0], [0], [0, 0, 1, 0], [], []>} : vector<8x128xbf16>, vector<64x128xbf16>, vector<8x64xf32> -> vector<8x64xf32>
    %c0_3 = arith.constant 0 : index
    %c0_4 = arith.constant 0 : index
    %4 = vector.load %arg3[%c0_3, %c0_4] : memref<8x64xf32, #tpu.memory_space<vmem>>, vector<8x64xf32>
    tpu.vector_store %arg3[%c0_3, %c0_4], %3 {strides = array<i32>} : memref<8x64xf32, #tpu.memory_space<vmem>>, vector<8x64xf32>,
    return
  }
  func.func @transform_0(%arg0: i32) -> (i32, i32) {
    %c0_i32 = arith.constant 0 : i32
    %c0_i32_0 = arith.constant 0 : i32
    return %arg0, %c0_i32 : i32, i32
  }
  func.func @transform_1(%arg0: i32) -> (i32, i32) {
    %c0_i32 = arith.constant 0 : i32
    %c0_i32_0 = arith.constant 0 : i32
    %c0_i32_1 = arith.constant 0 : i32
    return %c0_i32, %c0_i32_0 : i32, i32
  }
  func.func @transform_2(%arg0: i32) -> (i32, i32) {
    %c0_i32 = arith.constant 0 : i32
    %c0_i32_0 = arith.constant 0 : i32
    return %arg0, %c0_i32 : i32, i32
  }
}

module attributes {stable_mosaic.version = 11 : i64} {
  func.func @_mm_nt_kernel(%arg0: i32, %arg1: memref<8x128xf32, #tpu.memory_space<vmem>>, %arg2: memref<32x128xbf16, #tpu.memory_space<vmem>>, %arg3: memref<8x32xf32, #tpu.memory_space<vmem>>) attributes {dimension_semantics = [#tpu.dimension_semantics<parallel>], iteration_bounds = array<i64: 1>, scalar_prefetch = 0 : i64, scratch_operands = 0 : i64, tpu.core_type = #tpu.core_type<tc>, window_params = [{transform_indices = @transform_0, window_bounds = array<i64: 8, 128>}, {pipeline_mode = #tpu.pipeline_mode<synchronous>, transform_indices = @transform_1, window_bounds = array<i64: 32, 128>}, {transform_indices = @transform_2, window_bounds = array<i64: 8, 32>}]} {
    %c0 = arith.constant 0 : index
    %c0_0 = arith.constant 0 : index
    %0 = vector.load %arg1[%c0, %c0_0] : memref<8x128xf32, #tpu.memory_space<vmem>>, vector<8x128xf32>
    %1 = arith.truncf %0 : vector<8x128xf32> to vector<8x128xbf16>
    %c0_1 = arith.constant 0 : index
    %c0_2 = arith.constant 0 : index
    %2 = vector.load %arg2[%c0_1, %c0_2] : memref<32x128xbf16, #tpu.memory_space<vmem>>, vector<32x128xbf16>
    %cst = arith.constant dense<0.000000e+00> : vector<8x32xf32>
    %3 = tpu.matmul %1, %2, %cst {dimension_numbers = #tpu.dot_dimension_numbers<[1], [1], [0], [0], [0, 0, 1, 0], [], []>} : vector<8x128xbf16>, vector<32x128xbf16>, vector<8x32xf32> -> vector<8x32xf32>
    %c0_3 = arith.constant 0 : index
    %c0_4 = arith.constant 0 : index
    %4 = vector.load %arg3[%c0_3, %c0_4] : memref<8x32xf32, #tpu.memory_space<vmem>>, vector<8x32xf32>
    tpu.vector_store %arg3[%c0_3, %c0_4], %3 {strides = array<i32>} : memref<8x32xf32, #tpu.memory_space<vmem>>, vector<8x32xf32>,
    return
  }
  func.func @transform_0(%arg0: i32) -> (i32, i32) {
    %c0_i32 = arith.constant 0 : i32
    %c0_i32_0 = arith.constant 0 : i32
    return %arg0, %c0_i32 : i32, i32
  }
  func.func @transform_1(%arg0: i32) -> (i32, i32) {
    %c0_i32 = arith.constant 0 : i32
    %c0_i32_0 = arith.constant 0 : i32
    %c0_i32_1 = arith.constant 0 : i32
    return %c0_i32, %c0_i32_0 : i32, i32
  }
  func.func @transform_2(%arg0: i32) -> (i32, i32) {
    %c0_i32 = arith.constant 0 : i32
    %c0_i32_0 = arith.constant 0 : i32
    return %arg0, %c0_i32 : i32, i32
  }
}

module attributes {stable_mosaic.version = 11 : i64} {
  func.func @_edge_bwd_kernel(%arg0: i32, %arg1: memref<8x128xf32, #tpu.memory_space<vmem>>, %arg2: memref<8x1xf32, #tpu.memory_space<vmem>>, %arg3: memref<8x128xf32, #tpu.memory_space<vmem>>, %arg4: memref<8x128xf32, #tpu.memory_space<vmem>>, %arg5: memref<8x128xf32, #tpu.memory_space<vmem>>, %arg6: memref<8x128xbf16, #tpu.memory_space<vmem>>, %arg7: memref<1x128xf32, #tpu.memory_space<vmem>>, %arg8: memref<128x384xbf16, #tpu.memory_space<vmem>>, %arg9: memref<8x1xf32, #tpu.memory_space<vmem>>, %arg10: memref<8x128xf32, #tpu.memory_space<vmem>>, %arg11: memref<8x128xf32, #tpu.memory_space<vmem>>, %arg12: memref<8x128xf32, #tpu.memory_space<vmem>>) attributes {dimension_semantics = [#tpu.dimension_semantics<parallel>], iteration_bounds = array<i64: 2>, scalar_prefetch = 0 : i64, scratch_operands = 0 : i64, tpu.core_type = #tpu.core_type<tc>, window_params = [{transform_indices = @transform_0, window_bounds = array<i64: 8, 128>}, {transform_indices = @transform_1, window_bounds = array<i64: 8, 1>}, {transform_indices = @transform_2, window_bounds = array<i64: 8, 128>}, {transform_indices = @transform_3, window_bounds = array<i64: 8, 128>}, {transform_indices = @transform_4, window_bounds = array<i64: 8, 128>}, {pipeline_mode = #tpu.pipeline_mode<synchronous>, transform_indices = @transform_5, window_bounds = array<i64: 8, 128>}, {pipeline_mode = #tpu.pipeline_mode<synchronous>, transform_indices = @transform_6, window_bounds = array<i64: 1, 128>}, {pipeline_mode = #tpu.pipeline_mode<synchronous>, transform_indices = @transform_7, window_bounds = array<i64: 128, 384>}, {transform_indices = @transform_8, window_bounds = array<i64: 8, 1>}, {transform_indices = @transform_9, window_bounds = array<i64: 8, 128>}, {transform_indices = @transform_10, window_bounds = array<i64: 8, 128>}, {transform_indices = @transform_11, window_bounds = array<i64: 8, 128>}]} {
    %c0 = arith.constant 0 : index
    %c0_0 = arith.constant 0 : index
    %0 = vector.load %arg2[%c0, %c0_0] : memref<8x1xf32, #tpu.memory_space<vmem>>, vector<8x1xf32>
    %cst = arith.constant 9.99999996E-13 : f32
    %1 = vector.broadcast %cst : f32 to vector<8x1xf32>
    %2 = arith.maximumf %0, %1 : vector<8x1xf32>
    %cst_1 = arith.constant 1.000000e+00 : f32
    %3 = vector.broadcast %cst_1 : f32 to vector<8x1xf32>
    %4 = arith.divf %3, %2 : vector<8x1xf32>
    %5 = tpu.iota {dimensions = array<i32: 1>} : vector<8x8xi32>
    %c1_i32 = arith.constant 1 : i32
    %6 = vector.broadcast %c1_i32 : i32 to vector<8x8xi32>
    %7 = arith.addi %5, %6 : vector<8x8xi32>
    %8 = arith.sitofp %7 : vector<8x8xi32> to vector<8x8xf32>
    %cst_2 = arith.constant 0.628318548 : f32
    %9 = vector.broadcast %cst_2 : f32 to vector<8x1xf32>
    %10 = arith.mulf %9, %0 : vector<8x1xf32>
    %11 = vector.broadcast %10 : vector<8x1xf32> to vector<8x8xf32>
    %12 = arith.mulf %8, %11 : vector<8x8xf32>
    %13 = math.sin %12 : vector<8x8xf32>
    %14 = math.cos %12 : vector<8x8xf32>
    %cst_3 = arith.constant 0.632455527 : f32
    %15 = vector.broadcast %cst_3 : f32 to vector<8x8xf32>
    %16 = arith.mulf %15, %13 : vector<8x8xf32>
    %17 = vector.broadcast %4 : vector<8x1xf32> to vector<8x8xf32>
    %18 = arith.mulf %16, %17 : vector<8x8xf32>
    %cst_4 = arith.constant 5.000000e+00 : f32
    %19 = vector.broadcast %cst_4 : f32 to vector<8x1xf32>
    %20 = arith.cmpf olt, %0, %19 : vector<8x1xf32>
    %cst_5 = arith.constant 1.000000e+00 : f32
    %cst_6 = arith.constant 0.000000e+00 : f32
    %21 = vector.broadcast %cst_5 : f32 to vector<8x1xf32>
    %22 = vector.broadcast %cst_6 : f32 to vector<8x1xf32>
    %23 = arith.select %20, %21, %22 : vector<8x1xi1>, vector<8x1xf32>
    %cst_7 = arith.constant 0.628318548 : f32
    %24 = vector.broadcast %cst_7 : f32 to vector<8x1xf32>
    %25 = arith.mulf %24, %0 : vector<8x1xf32>
    %26 = math.cos %25 : vector<8x1xf32>
    %cst_8 = arith.constant 1.000000e+00 : f32
    %27 = vector.broadcast %cst_8 : f32 to vector<8x1xf32>
    %28 = arith.addf %26, %27 : vector<8x1xf32>
    %cst_9 = arith.constant 5.000000e-01 : f32
    %29 = vector.broadcast %cst_9 : f32 to vector<8x1xf32>
    %30 = arith.mulf %29, %28 : vector<8x1xf32>
    %31 = arith.mulf %30, %23 : vector<8x1xf32>
    %32 = arith.truncf %18 : vector<8x8xf32> to vector<8x8xbf16>
    %c0_10 = arith.constant 0 : index
    %c0_11 = arith.constant 0 : index
    %33 = vector.load %arg6[%c0_10, %c0_11] : memref<8x128xbf16, #tpu.memory_space<vmem>>, vector<8x128xbf16>
    %cst_12 = arith.constant dense<0.000000e+00> : vector<8x128xf32>
    %34 = tpu.matmul %32, %33, %cst_12 {dimension_numbers = #tpu.dot_dimension_numbers<[1], [0], [0], [1], [0, 0, 1, 1], [], []>} : vector<8x8xbf16>, vector<8x128xbf16>, vector<8x128xf32> -> vector<8x128xf32>
    %c0_13 = arith.constant 0 : index
    %c0_14 = arith.constant 0 : index
    %35 = vector.load %arg7[%c0_13, %c0_14] : memref<1x128xf32, #tpu.memory_space<vmem>>, vector<1x128xf32>
    %36 = vector.broadcast %35 : vector<1x128xf32> to vector<8x128xf32>
    %37 = arith.addf %34, %36 : vector<8x128xf32>
    %38 = vector.broadcast %31 : vector<8x1xf32> to vector<8x128xf32>
    %39 = arith.mulf %37, %38 : vector<8x128xf32>
    %c0_15 = arith.constant 0 : index
    %c0_16 = arith.constant 0 : index
    %40 = vector.load %arg3[%c0_15, %c0_16] : memref<8x128xf32, #tpu.memory_space<vmem>>, vector<8x128xf32>
    %41 = arith.mulf %40, %39 : vector<8x128xf32>
    %c0_17 = arith.constant 0 : index
    %c0_18 = arith.constant 0 : index
    %42 = vector.load %arg8[%c0_17, %c0_18] : memref<128x384xbf16, #tpu.memory_space<vmem>>, vector<128x384xbf16>
    %43 = arith.truncf %41 : vector<8x128xf32> to vector<8x128xbf16>
    %cst_19 = arith.constant dense<0.000000e+00> : vector<8x384xf32>
    %44 = tpu.matmul %43, %42, %cst_19 {dimension_numbers = #tpu.dot_dimension_numbers<[1], [0], [0], [1], [0, 0, 1, 1], [], []>} : vector<8x128xbf16>, vector<128x384xbf16>, vector<8x384xf32> -> vector<8x384xf32>
    %45 = vector.extract_strided_slice %44 {offsets = [0, 0], sizes = [8, 128], strides = [1, 1]} : vector<8x384xf32> to vector<8x128xf32>
    %46 = vector.extract_strided_slice %44 {offsets = [0, 128], sizes = [8, 128], strides = [1, 1]} : vector<8x384xf32> to vector<8x128xf32>
    %c0_20 = arith.constant 0 : index
    %c0_21 = arith.constant 0 : index
    %47 = vector.load %arg1[%c0_20, %c0_21] : memref<8x128xf32, #tpu.memory_space<vmem>>, vector<8x128xf32>
    %c0_22 = arith.constant 0 : index
    %c0_23 = arith.constant 0 : index
    %48 = vector.load %arg4[%c0_22, %c0_23] : memref<8x128xf32, #tpu.memory_space<vmem>>, vector<8x128xf32>
    %c0_24 = arith.constant 0 : index
    %c0_25 = arith.constant 0 : index
    %49 = vector.load %arg5[%c0_24, %c0_25] : memref<8x128xf32, #tpu.memory_space<vmem>>, vector<8x128xf32>
    %50 = arith.mulf %47, %45 : vector<8x128xf32>
    %c0_26 = arith.constant 0 : index
    %c0_27 = arith.constant 0 : index
    %51 = vector.load %arg11[%c0_26, %c0_27] : memref<8x128xf32, #tpu.memory_space<vmem>>, vector<8x128xf32>
    tpu.vector_store %arg11[%c0_26, %c0_27], %50 {strides = array<i32>} : memref<8x128xf32, #tpu.memory_space<vmem>>, vector<8x128xf32>,
    %52 = arith.mulf %47, %46 : vector<8x128xf32>
    %c0_28 = arith.constant 0 : index
    %c0_29 = arith.constant 0 : index
    %53 = vector.load %arg12[%c0_28, %c0_29] : memref<8x128xf32, #tpu.memory_space<vmem>>, vector<8x128xf32>
    tpu.vector_store %arg12[%c0_28, %c0_29], %52 {strides = array<i32>} : memref<8x128xf32, #tpu.memory_space<vmem>>, vector<8x128xf32>,
    %54 = arith.mulf %47, %48 : vector<8x128xf32>
    %55 = arith.truncf %54 : vector<8x128xf32> to vector<8x128xbf16>
    %56 = arith.mulf %47, %49 : vector<8x128xf32>
    %57 = arith.truncf %56 : vector<8x128xf32> to vector<8x128xbf16>
    %58 = vector.extract_strided_slice %42 {offsets = [0, 0], sizes = [128, 128], strides = [1, 1]} : vector<128x384xbf16> to vector<128x128xbf16>
    %cst_30 = arith.constant dense<0.000000e+00> : vector<8x128xf32>
    %59 = tpu.matmul %55, %58, %cst_30 {dimension_numbers = #tpu.dot_dimension_numbers<[1], [1], [0], [0], [0, 0, 1, 0], [], []>} : vector<8x128xbf16>, vector<128x128xbf16>, vector<8x128xf32> -> vector<8x128xf32>
    %60 = vector.extract_strided_slice %42 {offsets = [0, 128], sizes = [128, 128], strides = [1, 1]} : vector<128x384xbf16> to vector<128x128xbf16>
    %cst_31 = arith.constant dense<0.000000e+00> : vector<8x128xf32>
    %61 = tpu.matmul %57, %60, %cst_31 {dimension_numbers = #tpu.dot_dimension_numbers<[1], [1], [0], [0], [0, 0, 1, 0], [], []>} : vector<8x128xbf16>, vector<128x128xbf16>, vector<8x128xf32> -> vector<8x128xf32>
    %62 = arith.addf %59, %61 : vector<8x128xf32>
    %63 = arith.truncf %47 : vector<8x128xf32> to vector<8x128xbf16>
    %64 = vector.extract_strided_slice %42 {offsets = [0, 256], sizes = [128, 128], strides = [1, 1]} : vector<128x384xbf16> to vector<128x128xbf16>
    %cst_32 = arith.constant dense<0.000000e+00> : vector<8x128xf32>
    %65 = tpu.matmul %63, %64, %cst_32 {dimension_numbers = #tpu.dot_dimension_numbers<[1], [1], [0], [0], [0, 0, 1, 0], [], []>} : vector<8x128xbf16>, vector<128x128xbf16>, vector<8x128xf32> -> vector<8x128xf32>
    %66 = arith.addf %62, %65 : vector<8x128xf32>
    %67 = arith.mulf %66, %39 : vector<8x128xf32>
    %c0_33 = arith.constant 0 : index
    %c0_34 = arith.constant 0 : index
    %68 = vector.load %arg10[%c0_33, %c0_34] : memref<8x128xf32, #tpu.memory_space<vmem>>, vector<8x128xf32>
    tpu.vector_store %arg10[%c0_33, %c0_34], %67 {strides = array<i32>} : memref<8x128xf32, #tpu.memory_space<vmem>>, vector<8x128xf32>,
    %69 = arith.mulf %66, %40 : vector<8x128xf32>
    %70 = vector.broadcast %31 : vector<8x1xf32> to vector<8x128xf32>
    %71 = arith.mulf %69, %70 : vector<8x128xf32>
    %72 = arith.mulf %69, %37 : vector<8x128xf32>
    %cst_35 = arith.constant dense<0.000000e+00> : vector<8xf32>
    %73 = vector.multi_reduction <add>, %72, %cst_35 [1] : vector<8x128xf32> to vector<8xf32>
    %74 = vector.shape_cast %73 : vector<8xf32> to vector<8x1xf32>
    %75 = arith.truncf %71 : vector<8x128xf32> to vector<8x128xbf16>
    %c0_36 = arith.constant 0 : index
    %c0_37 = arith.constant 0 : index
    %76 = vector.load %arg6[%c0_36, %c0_37] : memref<8x128xbf16, #tpu.memory_space<vmem>>, vector<8x128xbf16>
    %cst_38 = arith.constant dense<0.000000e+00> : vector<8x8xf32>
    %77 = tpu.matmul %75, %76, %cst_38 {dimension_numbers = #tpu.dot_dimension_numbers<[1], [1], [0], [0], [0, 0, 1, 0], [], []>} : vector<8x128xbf16>, vector<8x128xbf16>, vector<8x8xf32> -> vector<8x8xf32>
    %cst_39 = arith.constant 0.628318548 : f32
    %78 = vector.broadcast %cst_39 : f32 to vector<8x8xf32>
    %79 = arith.mulf %8, %78 : vector<8x8xf32>
    %80 = arith.mulf %79, %14 : vector<8x8xf32>
    %81 = vector.broadcast %4 : vector<8x1xf32> to vector<8x8xf32>
    %82 = arith.mulf %80, %81 : vector<8x8xf32>
    %83 = vector.broadcast %4 : vector<8x1xf32> to vector<8x8xf32>
    %84 = arith.mulf %13, %83 : vector<8x8xf32>
    %85 = vector.broadcast %4 : vector<8x1xf32> to vector<8x8xf32>
    %86 = arith.mulf %84, %85 : vector<8x8xf32>
    %87 = arith.subf %82, %86 : vector<8x8xf32>
    %cst_40 = arith.constant 0.632455527 : f32
    %88 = vector.broadcast %cst_40 : f32 to vector<8x8xf32>
    %89 = arith.mulf %88, %87 : vector<8x8xf32>
    %cst_41 = arith.constant 0.628318548 : f32
    %90 = vector.broadcast %cst_41 : f32 to vector<8x1xf32>
    %91 = arith.mulf %90, %0 : vector<8x1xf32>
    %92 = math.sin %91 : vector<8x1xf32>
    %cst_42 = arith.constant -0.314159274 : f32
    %93 = vector.broadcast %cst_42 : f32 to vector<8x1xf32>
    %94 = arith.mulf %93, %92 : vector<8x1xf32>
    %95 = arith.mulf %94, %23 : vector<8x1xf32>
    %96 = arith.mulf %77, %89 : vector<8x8xf32>
    %cst_43 = arith.constant dense<0.000000e+00> : vector<8xf32>
    %97 = vector.multi_reduction <add>, %96, %cst_43 [1] : vector<8x8xf32> to vector<8xf32>
    %98 = vector.shape_cast %97 : vector<8xf32> to vector<8x1xf32>
    %99 = arith.mulf %74, %95 : vector<8x1xf32>
    %100 = arith.addf %98, %99 : vector<8x1xf32>
    %c0_44 = arith.constant 0 : index
    %c0_45 = arith.constant 0 : index
    %101 = vector.load %arg9[%c0_44, %c0_45] : memref<8x1xf32, #tpu.memory_space<vmem>>, vector<8x1xf32>
    tpu.vector_store %arg9[%c0_44, %c0_45], %100 {strides = array<i32>} : memref<8x1xf32, #tpu.memory_space<vmem>>, vector<8x1xf32>,
    return
  }
  func.func @transform_0(%arg0: i32) -> (i32, i32) {
    %c0_i32 = arith.constant 0 : i32
    %c0_i32_0 = arith.constant 0 : i32
    return %arg0, %c0_i32 : i32, i32
  }
  func.func @transform_1(%arg0: i32) -> (i32, i32) {
    %c0_i32 = arith.constant 0 : i32
    %c0_i32_0 = arith.constant 0 : i32
    return %arg0, %c0_i32 : i32, i32
  }
  func.func @transform_2(%arg0: i32) -> (i32, i32) {
    %c0_i32 = arith.constant 0 : i32
    %c0_i32_0 = arith.constant 0 : i32
    return %arg0, %c0_i32 : i32, i32
  }
  func.func @transform_3(%arg0: i32) -> (i32, i32) {
    %c0_i32 = arith.constant 0 : i32
    %c0_i32_0 = arith.constant 0 : i32
    return %arg0, %c0_i32 : i32, i32
  }
  func.func @transform_4(%arg0: i32) -> (i32, i32) {
    %c0_i32 = arith.constant 0 : i32
    %c0_i32_0 = arith.constant 0 : i32
    return %arg0, %c0_i32 : i32, i32
  }
  func.func @transform_5(%arg0: i32) -> (i32, i32) {
    %c0_i32 = arith.constant 0 : i32
    %c0_i32_0 = arith.constant 0 : i32
    %c0_i32_1 = arith.constant 0 : i32
    return %c0_i32, %c0_i32_0 : i32, i32
  }
  func.func @transform_6(%arg0: i32) -> (i32, i32) {
    %c0_i32 = arith.constant 0 : i32
    %c0_i32_0 = arith.constant 0 : i32
    %c0_i32_1 = arith.constant 0 : i32
    return %c0_i32, %c0_i32_0 : i32, i32
  }
  func.func @transform_7(%arg0: i32) -> (i32, i32) {
    %c0_i32 = arith.constant 0 : i32
    %c0_i32_0 = arith.constant 0 : i32
    %c0_i32_1 = arith.constant 0 : i32
    return %c0_i32, %c0_i32_0 : i32, i32
  }
  func.func @transform_8(%arg0: i32) -> (i32, i32) {
    %c0_i32 = arith.constant 0 : i32
    %c0_i32_0 = arith.constant 0 : i32
    return %arg0, %c0_i32 : i32, i32
  }
  func.func @transform_9(%arg0: i32) -> (i32, i32) {
    %c0_i32 = arith.constant 0 : i32
    %c0_i32_0 = arith.constant 0 : i32
    return %arg0, %c0_i32 : i32, i32
  }
  func.func @transform_10(%arg0: i32) -> (i32, i32) {
    %c0_i32 = arith.constant 0 : i32
    %c0_i32_0 = arith.constant 0 : i32
    return %arg0, %c0_i32 : i32, i32
  }
  func.func @transform_11(%arg0: i32) -> (i32, i32) {
    %c0_i32 = arith.constant 0 : i32
    %c0_i32_0 = arith.constant 0 : i32
    return %arg0, %c0_i32 : i32, i32
  }
}

module attributes {stable_mosaic.version = 11 : i64} {
  func.func @_mm_nt_kernel(%arg0: i32, %arg1: memref<8x128xf32, #tpu.memory_space<vmem>>, %arg2: memref<128x128xbf16, #tpu.memory_space<vmem>>, %arg3: memref<8x128xf32, #tpu.memory_space<vmem>>) attributes {dimension_semantics = [#tpu.dimension_semantics<parallel>], iteration_bounds = array<i64: 1>, scalar_prefetch = 0 : i64, scratch_operands = 0 : i64, tpu.core_type = #tpu.core_type<tc>, window_params = [{transform_indices = @transform_0, window_bounds = array<i64: 8, 128>}, {pipeline_mode = #tpu.pipeline_mode<synchronous>, transform_indices = @transform_1, window_bounds = array<i64: 128, 128>}, {transform_indices = @transform_2, window_bounds = array<i64: 8, 128>}]} {
    %c0 = arith.constant 0 : index
    %c0_0 = arith.constant 0 : index
    %0 = vector.load %arg1[%c0, %c0_0] : memref<8x128xf32, #tpu.memory_space<vmem>>, vector<8x128xf32>
    %1 = arith.truncf %0 : vector<8x128xf32> to vector<8x128xbf16>
    %c0_1 = arith.constant 0 : index
    %c0_2 = arith.constant 0 : index
    %2 = vector.load %arg2[%c0_1, %c0_2] : memref<128x128xbf16, #tpu.memory_space<vmem>>, vector<128x128xbf16>
    %cst = arith.constant dense<0.000000e+00> : vector<8x128xf32>
    %3 = tpu.matmul %1, %2, %cst {dimension_numbers = #tpu.dot_dimension_numbers<[1], [1], [0], [0], [0, 0, 1, 0], [], []>} : vector<8x128xbf16>, vector<128x128xbf16>, vector<8x128xf32> -> vector<8x128xf32>
    %c0_3 = arith.constant 0 : index
    %c0_4 = arith.constant 0 : index
    %4 = vector.load %arg3[%c0_3, %c0_4] : memref<8x128xf32, #tpu.memory_space<vmem>>, vector<8x128xf32>
    tpu.vector_store %arg3[%c0_3, %c0_4], %3 {strides = array<i32>} : memref<8x128xf32, #tpu.memory_space<vmem>>, vector<8x128xf32>,
    return
  }
  func.func @transform_0(%arg0: i32) -> (i32, i32) {
    %c0_i32 = arith.constant 0 : i32
    %c0_i32_0 = arith.constant 0 : i32
    return %arg0, %c0_i32 : i32, i32
  }
  func.func @transform_1(%arg0: i32) -> (i32, i32) {
    %c0_i32 = arith.constant 0 : i32
    %c0_i32_0 = arith.constant 0 : i32
    %c0_i32_1 = arith.constant 0 : i32
    return %c0_i32, %c0_i32_0 : i32, i32
  }
  func.func @transform_2(%arg0: i32) -> (i32, i32) {
    %c0_i32 = arith.constant 0 : i32
    %c0_i32_0 = arith.constant 0 : i32
    return %arg0, %c0_i32 : i32, i32
  }
}

module attributes {stable_mosaic.version = 11 : i64} {
  func.func @_mm_nt_kernel(%arg0: i32, %arg1: memref<8x128xf32, #tpu.memory_space<vmem>>, %arg2: memref<32x128xbf16, #tpu.memory_space<vmem>>, %arg3: memref<8x32xf32, #tpu.memory_space<vmem>>) attributes {dimension_semantics = [#tpu.dimension_semantics<parallel>], iteration_bounds = array<i64: 1>, scalar_prefetch = 0 : i64, scratch_operands = 0 : i64, tpu.core_type = #tpu.core_type<tc>, window_params = [{transform_indices = @transform_0, window_bounds = array<i64: 8, 128>}, {pipeline_mode = #tpu.pipeline_mode<synchronous>, transform_indices = @transform_1, window_bounds = array<i64: 32, 128>}, {transform_indices = @transform_2, window_bounds = array<i64: 8, 32>}]} {
    %c0 = arith.constant 0 : index
    %c0_0 = arith.constant 0 : index
    %0 = vector.load %arg1[%c0, %c0_0] : memref<8x128xf32, #tpu.memory_space<vmem>>, vector<8x128xf32>
    %1 = arith.truncf %0 : vector<8x128xf32> to vector<8x128xbf16>
    %c0_1 = arith.constant 0 : index
    %c0_2 = arith.constant 0 : index
    %2 = vector.load %arg2[%c0_1, %c0_2] : memref<32x128xbf16, #tpu.memory_space<vmem>>, vector<32x128xbf16>
    %cst = arith.constant dense<0.000000e+00> : vector<8x32xf32>
    %3 = tpu.matmul %1, %2, %cst {dimension_numbers = #tpu.dot_dimension_numbers<[1], [1], [0], [0], [0, 0, 1, 0], [], []>} : vector<8x128xbf16>, vector<32x128xbf16>, vector<8x32xf32> -> vector<8x32xf32>
    %c0_3 = arith.constant 0 : index
    %c0_4 = arith.constant 0 : index
    %4 = vector.load %arg3[%c0_3, %c0_4] : memref<8x32xf32, #tpu.memory_space<vmem>>, vector<8x32xf32>
    tpu.vector_store %arg3[%c0_3, %c0_4], %3 {strides = array<i32>} : memref<8x32xf32, #tpu.memory_space<vmem>>, vector<8x32xf32>,
    return
  }
  func.func @transform_0(%arg0: i32) -> (i32, i32) {
    %c0_i32 = arith.constant 0 : i32
    %c0_i32_0 = arith.constant 0 : i32
    return %arg0, %c0_i32 : i32, i32
  }
  func.func @transform_1(%arg0: i32) -> (i32, i32) {
    %c0_i32 = arith.constant 0 : i32
    %c0_i32_0 = arith.constant 0 : i32
    %c0_i32_1 = arith.constant 0 : i32
    return %c0_i32, %c0_i32_0 : i32, i32
  }
  func.func @transform_2(%arg0: i32) -> (i32, i32) {
    %c0_i32 = arith.constant 0 : i32
    %c0_i32_0 = arith.constant 0 : i32
    return %arg0, %c0_i32 : i32, i32
  }
}

module attributes {stable_mosaic.version = 11 : i64} {
  func.func @_edge_bwd_kernel(%arg0: i32, %arg1: memref<8x128xf32, #tpu.memory_space<vmem>>, %arg2: memref<8x1xf32, #tpu.memory_space<vmem>>, %arg3: memref<8x128xf32, #tpu.memory_space<vmem>>, %arg4: memref<8x128xf32, #tpu.memory_space<vmem>>, %arg5: memref<8x128xf32, #tpu.memory_space<vmem>>, %arg6: memref<8x128xbf16, #tpu.memory_space<vmem>>, %arg7: memref<1x128xf32, #tpu.memory_space<vmem>>, %arg8: memref<128x384xbf16, #tpu.memory_space<vmem>>, %arg9: memref<8x1xf32, #tpu.memory_space<vmem>>, %arg10: memref<8x128xf32, #tpu.memory_space<vmem>>, %arg11: memref<8x128xf32, #tpu.memory_space<vmem>>, %arg12: memref<8x128xf32, #tpu.memory_space<vmem>>) attributes {dimension_semantics = [#tpu.dimension_semantics<parallel>], iteration_bounds = array<i64: 2>, scalar_prefetch = 0 : i64, scratch_operands = 0 : i64, tpu.core_type = #tpu.core_type<tc>, window_params = [{transform_indices = @transform_0, window_bounds = array<i64: 8, 128>}, {transform_indices = @transform_1, window_bounds = array<i64: 8, 1>}, {transform_indices = @transform_2, window_bounds = array<i64: 8, 128>}, {transform_indices = @transform_3, window_bounds = array<i64: 8, 128>}, {transform_indices = @transform_4, window_bounds = array<i64: 8, 128>}, {pipeline_mode = #tpu.pipeline_mode<synchronous>, transform_indices = @transform_5, window_bounds = array<i64: 8, 128>}, {pipeline_mode = #tpu.pipeline_mode<synchronous>, transform_indices = @transform_6, window_bounds = array<i64: 1, 128>}, {pipeline_mode = #tpu.pipeline_mode<synchronous>, transform_indices = @transform_7, window_bounds = array<i64: 128, 384>}, {transform_indices = @transform_8, window_bounds = array<i64: 8, 1>}, {transform_indices = @transform_9, window_bounds = array<i64: 8, 128>}, {transform_indices = @transform_10, window_bounds = array<i64: 8, 128>}, {transform_indices = @transform_11, window_bounds = array<i64: 8, 128>}]} {
    %c0 = arith.constant 0 : index
    %c0_0 = arith.constant 0 : index
    %0 = vector.load %arg2[%c0, %c0_0] : memref<8x1xf32, #tpu.memory_space<vmem>>, vector<8x1xf32>
    %cst = arith.constant 9.99999996E-13 : f32
    %1 = vector.broadcast %cst : f32 to vector<8x1xf32>
    %2 = arith.maximumf %0, %1 : vector<8x1xf32>
    %cst_1 = arith.constant 1.000000e+00 : f32
    %3 = vector.broadcast %cst_1 : f32 to vector<8x1xf32>
    %4 = arith.divf %3, %2 : vector<8x1xf32>
    %5 = tpu.iota {dimensions = array<i32: 1>} : vector<8x8xi32>
    %c1_i32 = arith.constant 1 : i32
    %6 = vector.broadcast %c1_i32 : i32 to vector<8x8xi32>
    %7 = arith.addi %5, %6 : vector<8x8xi32>
    %8 = arith.sitofp %7 : vector<8x8xi32> to vector<8x8xf32>
    %cst_2 = arith.constant 0.628318548 : f32
    %9 = vector.broadcast %cst_2 : f32 to vector<8x1xf32>
    %10 = arith.mulf %9, %0 : vector<8x1xf32>
    %11 = vector.broadcast %10 : vector<8x1xf32> to vector<8x8xf32>
    %12 = arith.mulf %8, %11 : vector<8x8xf32>
    %13 = math.sin %12 : vector<8x8xf32>
    %14 = math.cos %12 : vector<8x8xf32>
    %cst_3 = arith.constant 0.632455527 : f32
    %15 = vector.broadcast %cst_3 : f32 to vector<8x8xf32>
    %16 = arith.mulf %15, %13 : vector<8x8xf32>
    %17 = vector.broadcast %4 : vector<8x1xf32> to vector<8x8xf32>
    %18 = arith.mulf %16, %17 : vector<8x8xf32>
    %cst_4 = arith.constant 5.000000e+00 : f32
    %19 = vector.broadcast %cst_4 : f32 to vector<8x1xf32>
    %20 = arith.cmpf olt, %0, %19 : vector<8x1xf32>
    %cst_5 = arith.constant 1.000000e+00 : f32
    %cst_6 = arith.constant 0.000000e+00 : f32
    %21 = vector.broadcast %cst_5 : f32 to vector<8x1xf32>
    %22 = vector.broadcast %cst_6 : f32 to vector<8x1xf32>
    %23 = arith.select %20, %21, %22 : vector<8x1xi1>, vector<8x1xf32>
    %cst_7 = arith.constant 0.628318548 : f32
    %24 = vector.broadcast %cst_7 : f32 to vector<8x1xf32>
    %25 = arith.mulf %24, %0 : vector<8x1xf32>
    %26 = math.cos %25 : vector<8x1xf32>
    %cst_8 = arith.constant 1.000000e+00 : f32
    %27 = vector.broadcast %cst_8 : f32 to vector<8x1xf32>
    %28 = arith.addf %26, %27 : vector<8x1xf32>
    %cst_9 = arith.constant 5.000000e-01 : f32
    %29 = vector.broadcast %cst_9 : f32 to vector<8x1xf32>
    %30 = arith.mulf %29, %28 : vector<8x1xf32>
    %31 = arith.mulf %30, %23 : vector<8x1xf32>
    %32 = arith.truncf %18 : vector<8x8xf32> to vector<8x8xbf16>
    %c0_10 = arith.constant 0 : index
    %c0_11 = arith.constant 0 : index
    %33 = vector.load %arg6[%c0_10, %c0_11] : memref<8x128xbf16, #tpu.memory_space<vmem>>, vector<8x128xbf16>
    %cst_12 = arith.constant dense<0.000000e+00> : vector<8x128xf32>
    %34 = tpu.matmul %32, %33, %cst_12 {dimension_numbers = #tpu.dot_dimension_numbers<[1], [0], [0], [1], [0, 0, 1, 1], [], []>} : vector<8x8xbf16>, vector<8x128xbf16>, vector<8x128xf32> -> vector<8x128xf32>
    %c0_13 = arith.constant 0 : index
    %c0_14 = arith.constant 0 : index
    %35 = vector.load %arg7[%c0_13, %c0_14] : memref<1x128xf32, #tpu.memory_space<vmem>>, vector<1x128xf32>
    %36 = vector.broadcast %35 : vector<1x128xf32> to vector<8x128xf32>
    %37 = arith.addf %34, %36 : vector<8x128xf32>
    %38 = vector.broadcast %31 : vector<8x1xf32> to vector<8x128xf32>
    %39 = arith.mulf %37, %38 : vector<8x128xf32>
    %c0_15 = arith.constant 0 : index
    %c0_16 = arith.constant 0 : index
    %40 = vector.load %arg3[%c0_15, %c0_16] : memref<8x128xf32, #tpu.memory_space<vmem>>, vector<8x128xf32>
    %41 = arith.mulf %40, %39 : vector<8x128xf32>
    %c0_17 = arith.constant 0 : index
    %c0_18 = arith.constant 0 : index
    %42 = vector.load %arg8[%c0_17, %c0_18] : memref<128x384xbf16, #tpu.memory_space<vmem>>, vector<128x384xbf16>
    %43 = arith.truncf %41 : vector<8x128xf32> to vector<8x128xbf16>
    %cst_19 = arith.constant dense<0.000000e+00> : vector<8x384xf32>
    %44 = tpu.matmul %43, %42, %cst_19 {dimension_numbers = #tpu.dot_dimension_numbers<[1], [0], [0], [1], [0, 0, 1, 1], [], []>} : vector<8x128xbf16>, vector<128x384xbf16>, vector<8x384xf32> -> vector<8x384xf32>
    %45 = vector.extract_strided_slice %44 {offsets = [0, 0], sizes = [8, 128], strides = [1, 1]} : vector<8x384xf32> to vector<8x128xf32>
    %46 = vector.extract_strided_slice %44 {offsets = [0, 128], sizes = [8, 128], strides = [1, 1]} : vector<8x384xf32> to vector<8x128xf32>
    %c0_20 = arith.constant 0 : index
    %c0_21 = arith.constant 0 : index
    %47 = vector.load %arg1[%c0_20, %c0_21] : memref<8x128xf32, #tpu.memory_space<vmem>>, vector<8x128xf32>
    %c0_22 = arith.constant 0 : index
    %c0_23 = arith.constant 0 : index
    %48 = vector.load %arg4[%c0_22, %c0_23] : memref<8x128xf32, #tpu.memory_space<vmem>>, vector<8x128xf32>
    %c0_24 = arith.constant 0 : index
    %c0_25 = arith.constant 0 : index
    %49 = vector.load %arg5[%c0_24, %c0_25] : memref<8x128xf32, #tpu.memory_space<vmem>>, vector<8x128xf32>
    %50 = arith.mulf %47, %45 : vector<8x128xf32>
    %c0_26 = arith.constant 0 : index
    %c0_27 = arith.constant 0 : index
    %51 = vector.load %arg11[%c0_26, %c0_27] : memref<8x128xf32, #tpu.memory_space<vmem>>, vector<8x128xf32>
    tpu.vector_store %arg11[%c0_26, %c0_27], %50 {strides = array<i32>} : memref<8x128xf32, #tpu.memory_space<vmem>>, vector<8x128xf32>,
    %52 = arith.mulf %47, %46 : vector<8x128xf32>
    %c0_28 = arith.constant 0 : index
    %c0_29 = arith.constant 0 : index
    %53 = vector.load %arg12[%c0_28, %c0_29] : memref<8x128xf32, #tpu.memory_space<vmem>>, vector<8x128xf32>
    tpu.vector_store %arg12[%c0_28, %c0_29], %52 {strides = array<i32>} : memref<8x128xf32, #tpu.memory_space<vmem>>, vector<8x128xf32>,
    %54 = arith.mulf %47, %48 : vector<8x128xf32>
    %55 = arith.truncf %54 : vector<8x128xf32> to vector<8x128xbf16>
    %56 = arith.mulf %47, %49 : vector<8x128xf32>
    %57 = arith.truncf %56 : vector<8x128xf32> to vector<8x128xbf16>
    %58 = vector.extract_strided_slice %42 {offsets = [0, 0], sizes = [128, 128], strides = [1, 1]} : vector<128x384xbf16> to vector<128x128xbf16>
    %cst_30 = arith.constant dense<0.000000e+00> : vector<8x128xf32>
    %59 = tpu.matmul %55, %58, %cst_30 {dimension_numbers = #tpu.dot_dimension_numbers<[1], [1], [0], [0], [0, 0, 1, 0], [], []>} : vector<8x128xbf16>, vector<128x128xbf16>, vector<8x128xf32> -> vector<8x128xf32>
    %60 = vector.extract_strided_slice %42 {offsets = [0, 128], sizes = [128, 128], strides = [1, 1]} : vector<128x384xbf16> to vector<128x128xbf16>
    %cst_31 = arith.constant dense<0.000000e+00> : vector<8x128xf32>
    %61 = tpu.matmul %57, %60, %cst_31 {dimension_numbers = #tpu.dot_dimension_numbers<[1], [1], [0], [0], [0, 0, 1, 0], [], []>} : vector<8x128xbf16>, vector<128x128xbf16>, vector<8x128xf32> -> vector<8x128xf32>
    %62 = arith.addf %59, %61 : vector<8x128xf32>
    %63 = arith.truncf %47 : vector<8x128xf32> to vector<8x128xbf16>
    %64 = vector.extract_strided_slice %42 {offsets = [0, 256], sizes = [128, 128], strides = [1, 1]} : vector<128x384xbf16> to vector<128x128xbf16>
    %cst_32 = arith.constant dense<0.000000e+00> : vector<8x128xf32>
    %65 = tpu.matmul %63, %64, %cst_32 {dimension_numbers = #tpu.dot_dimension_numbers<[1], [1], [0], [0], [0, 0, 1, 0], [], []>} : vector<8x128xbf16>, vector<128x128xbf16>, vector<8x128xf32> -> vector<8x128xf32>
    %66 = arith.addf %62, %65 : vector<8x128xf32>
    %67 = arith.mulf %66, %39 : vector<8x128xf32>
    %c0_33 = arith.constant 0 : index
    %c0_34 = arith.constant 0 : index
    %68 = vector.load %arg10[%c0_33, %c0_34] : memref<8x128xf32, #tpu.memory_space<vmem>>, vector<8x128xf32>
    tpu.vector_store %arg10[%c0_33, %c0_34], %67 {strides = array<i32>} : memref<8x128xf32, #tpu.memory_space<vmem>>, vector<8x128xf32>,
    %69 = arith.mulf %66, %40 : vector<8x128xf32>
    %70 = vector.broadcast %31 : vector<8x1xf32> to vector<8x128xf32>
    %71 = arith.mulf %69, %70 : vector<8x128xf32>
    %72 = arith.mulf %69, %37 : vector<8x128xf32>
    %cst_35 = arith.constant dense<0.000000e+00> : vector<8xf32>
    %73 = vector.multi_reduction <add>, %72, %cst_35 [1] : vector<8x128xf32> to vector<8xf32>
    %74 = vector.shape_cast %73 : vector<8xf32> to vector<8x1xf32>
    %75 = arith.truncf %71 : vector<8x128xf32> to vector<8x128xbf16>
    %c0_36 = arith.constant 0 : index
    %c0_37 = arith.constant 0 : index
    %76 = vector.load %arg6[%c0_36, %c0_37] : memref<8x128xbf16, #tpu.memory_space<vmem>>, vector<8x128xbf16>
    %cst_38 = arith.constant dense<0.000000e+00> : vector<8x8xf32>
    %77 = tpu.matmul %75, %76, %cst_38 {dimension_numbers = #tpu.dot_dimension_numbers<[1], [1], [0], [0], [0, 0, 1, 0], [], []>} : vector<8x128xbf16>, vector<8x128xbf16>, vector<8x8xf32> -> vector<8x8xf32>
    %cst_39 = arith.constant 0.628318548 : f32
    %78 = vector.broadcast %cst_39 : f32 to vector<8x8xf32>
    %79 = arith.mulf %8, %78 : vector<8x8xf32>
    %80 = arith.mulf %79, %14 : vector<8x8xf32>
    %81 = vector.broadcast %4 : vector<8x1xf32> to vector<8x8xf32>
    %82 = arith.mulf %80, %81 : vector<8x8xf32>
    %83 = vector.broadcast %4 : vector<8x1xf32> to vector<8x8xf32>
    %84 = arith.mulf %13, %83 : vector<8x8xf32>
    %85 = vector.broadcast %4 : vector<8x1xf32> to vector<8x8xf32>
    %86 = arith.mulf %84, %85 : vector<8x8xf32>
    %87 = arith.subf %82, %86 : vector<8x8xf32>
    %cst_40 = arith.constant 0.632455527 : f32
    %88 = vector.broadcast %cst_40 : f32 to vector<8x8xf32>
    %89 = arith.mulf %88, %87 : vector<8x8xf32>
    %cst_41 = arith.constant 0.628318548 : f32
    %90 = vector.broadcast %cst_41 : f32 to vector<8x1xf32>
    %91 = arith.mulf %90, %0 : vector<8x1xf32>
    %92 = math.sin %91 : vector<8x1xf32>
    %cst_42 = arith.constant -0.314159274 : f32
    %93 = vector.broadcast %cst_42 : f32 to vector<8x1xf32>
    %94 = arith.mulf %93, %92 : vector<8x1xf32>
    %95 = arith.mulf %94, %23 : vector<8x1xf32>
    %96 = arith.mulf %77, %89 : vector<8x8xf32>
    %cst_43 = arith.constant dense<0.000000e+00> : vector<8xf32>
    %97 = vector.multi_reduction <add>, %96, %cst_43 [1] : vector<8x8xf32> to vector<8xf32>
    %98 = vector.shape_cast %97 : vector<8xf32> to vector<8x1xf32>
    %99 = arith.mulf %74, %95 : vector<8x1xf32>
    %100 = arith.addf %98, %99 : vector<8x1xf32>
    %c0_44 = arith.constant 0 : index
    %c0_45 = arith.constant 0 : index
    %101 = vector.load %arg9[%c0_44, %c0_45] : memref<8x1xf32, #tpu.memory_space<vmem>>, vector<8x1xf32>
    tpu.vector_store %arg9[%c0_44, %c0_45], %100 {strides = array<i32>} : memref<8x1xf32, #tpu.memory_space<vmem>>, vector<8x1xf32>,
    return
  }
  func.func @transform_0(%arg0: i32) -> (i32, i32) {
    %c0_i32 = arith.constant 0 : i32
    %c0_i32_0 = arith.constant 0 : i32
    return %arg0, %c0_i32 : i32, i32
  }
  func.func @transform_1(%arg0: i32) -> (i32, i32) {
    %c0_i32 = arith.constant 0 : i32
    %c0_i32_0 = arith.constant 0 : i32
    return %arg0, %c0_i32 : i32, i32
  }
  func.func @transform_2(%arg0: i32) -> (i32, i32) {
    %c0_i32 = arith.constant 0 : i32
    %c0_i32_0 = arith.constant 0 : i32
    return %arg0, %c0_i32 : i32, i32
  }
  func.func @transform_3(%arg0: i32) -> (i32, i32) {
    %c0_i32 = arith.constant 0 : i32
    %c0_i32_0 = arith.constant 0 : i32
    return %arg0, %c0_i32 : i32, i32
  }
  func.func @transform_4(%arg0: i32) -> (i32, i32) {
    %c0_i32 = arith.constant 0 : i32
    %c0_i32_0 = arith.constant 0 : i32
    return %arg0, %c0_i32 : i32, i32
  }
  func.func @transform_5(%arg0: i32) -> (i32, i32) {
    %c0_i32 = arith.constant 0 : i32
    %c0_i32_0 = arith.constant 0 : i32
    %c0_i32_1 = arith.constant 0 : i32
    return %c0_i32, %c0_i32_0 : i32, i32
  }
  func.func @transform_6(%arg0: i32) -> (i32, i32) {
    %c0_i32 = arith.constant 0 : i32
    %c0_i32_0 = arith.constant 0 : i32
    %c0_i32_1 = arith.constant 0 : i32
    return %c0_i32, %c0_i32_0 : i32, i32
  }
  func.func @transform_7(%arg0: i32) -> (i32, i32) {
    %c0_i32 = arith.constant 0 : i32
    %c0_i32_0 = arith.constant 0 : i32
    %c0_i32_1 = arith.constant 0 : i32
    return %c0_i32, %c0_i32_0 : i32, i32
  }
  func.func @transform_8(%arg0: i32) -> (i32, i32) {
    %c0_i32 = arith.constant 0 : i32
    %c0_i32_0 = arith.constant 0 : i32
    return %arg0, %c0_i32 : i32, i32
  }
  func.func @transform_9(%arg0: i32) -> (i32, i32) {
    %c0_i32 = arith.constant 0 : i32
    %c0_i32_0 = arith.constant 0 : i32
    return %arg0, %c0_i32 : i32, i32
  }
  func.func @transform_10(%arg0: i32) -> (i32, i32) {
    %c0_i32 = arith.constant 0 : i32
    %c0_i32_0 = arith.constant 0 : i32
    return %arg0, %c0_i32 : i32, i32
  }
  func.func @transform_11(%arg0: i32) -> (i32, i32) {
    %c0_i32 = arith.constant 0 : i32
    %c0_i32_0 = arith.constant 0 : i32
    return %arg0, %c0_i32 : i32, i32
  }
}

</mosaic_0001>

<llo_original>
// kernel: tile.21
$region0: #{tile.21}
  %s0 = inlined_call_operand.vmem [shape: f32[16,8,5], index: 0, kind: input, shape index: {}]
  %s1 = inlined_call_operand.vmem [shape: f32[16,40], index: 1, kind: output, shape index: {}]
  %v2 = vld [vmem:[%s0] sm:$0x1f]
  %vm3 = vcmask 130048
  %4 = vst.msk [vmem:[%s1] sm:$0x1f] %vm3, %v2
  %s5 = scalar_lea.vmem %s0, 8
  %v6 = vld [vmem:[%s5] sm:$0x1f]
  %vm7 = vcmask 130048
  %s8 = scalar_lea.vmem %s1, 5
  %9 = vst.msk [vmem:[%s8] sm:$0x1f] %vm7, %v6
  %s10 = scalar_lea.vmem %s0, 16
  %v11 = vld [vmem:[%s10] sm:$0x1f]
  %vm12 = vcmask 130048
  %s13 = scalar_lea.vmem %s1, 10
  %14 = vst.msk [vmem:[%s13] sm:$0x1f] %vm12, %v11
  %s15 = scalar_lea.vmem %s0, 24
  %v16 = vld [vmem:[%s15] sm:$0x1f]
  %vm17 = vcmask 130048
  %s18 = scalar_lea.vmem %s1, 15
  %19 = vst.msk [vmem:[%s18] sm:$0x1f] %vm17, %v16
  %s20 = scalar_lea.vmem %s0, 32
  %v21 = vld [vmem:[%s20] sm:$0x1f]
  %vm22 = vcmask 130048
  %s23 = scalar_lea.vmem %s1, 20
  %24 = vst.msk [vmem:[%s23] sm:$0x1f] %vm22, %v21
  %s25 = scalar_lea.vmem %s0, 40
  %v26 = vld [vmem:[%s25] sm:$0x1f]
  %vm27 = vcmask 130048
  %s28 = scalar_lea.vmem %s1, 25
  %29 = vst.msk [vmem:[%s28] sm:$0x1f] %vm27, %v26
  %s30 = scalar_lea.vmem %s0, 48
  %v31 = vld [vmem:[%s30] sm:$0x1f]
  %vm32 = vcmask 130048
  %s33 = scalar_lea.vmem %s1, 30
  %34 = vst.msk [vmem:[%s33] sm:$0x1f] %vm32, %v31
  %s35 = scalar_lea.vmem %s0, 56
  %v36 = vld [vmem:[%s35] sm:$0x1f]
  %vm37 = vcmask 130048
  %s38 = scalar_lea.vmem %s1, 35
  %39 = vst.msk [vmem:[%s38] sm:$0x1f] %vm37, %v36

// kernel: tile.16
$region0: #{tile.16}
  %s0 = inlined_call_operand.vmem [shape: f32[16,8,3], index: 0, kind: input, shape index: {}]
  %s1 = inlined_call_operand.vmem [shape: f32[16,24], index: 1, kind: output, shape index: {}]
  $region1: #{tile.16} parent=0
    #allocation0 [shape = 'u8[32768]{0}', space=vmem, size = 0x8000, scoped, tag = 'scoped mem for input reshape']
    %s3 = sshllo.u32 0, 4
    %s4 = smul.addr 4, 7
    %s5 = scalar_lea.vmem %s0, %s4
    %v6 = vld [vmem:[%s5] sm:%s3]
    %s7 = scalar_lea.vmem [#allocation0], 56
    %8 = vst [vmem:[%s7] sm:%s3] %v6
    %s9 = smul.addr 4, 6
    %s10 = scalar_lea.vmem %s0, %s9
    %v11 = vld [vmem:[%s10] sm:%s3]
    %s12 = scalar_lea.vmem [#allocation0], 48
    %13 = vst [vmem:[%s12] sm:%s3] %v11
    %s14 = smul.addr 4, 5
    %s15 = scalar_lea.vmem %s0, %s14
    %v16 = vld [vmem:[%s15] sm:%s3]
    %s17 = scalar_lea.vmem [#allocation0], 40
    %18 = vst [vmem:[%s17] sm:%s3] %v16
    %s19 = smul.addr 4, 4
    %s20 = scalar_lea.vmem %s0, %s19
    %v21 = vld [vmem:[%s20] sm:%s3]
    %s22 = scalar_lea.vmem [#allocation0], 32
    %23 = vst [vmem:[%s22] sm:%s3] %v21
    %s24 = smul.addr 4, 3
    %s25 = scalar_lea.vmem %s0, %s24
    %v26 = vld [vmem:[%s25] sm:%s3]
    %s27 = scalar_lea.vmem [#allocation0], 24
    %28 = vst [vmem:[%s27] sm:%s3] %v26
    %s29 = smul.addr 4, 2
    %s30 = scalar_lea.vmem %s0, %s29
    %v31 = vld [vmem:[%s30] sm:%s3]
    %s32 = scalar_lea.vmem [#allocation0], 16
    %33 = vst [vmem:[%s32] sm:%s3] %v31
    %s34 = scalar_lea.vmem %s0, 4
    %v35 = vld [vmem:[%s34] sm:%s3]
    %s36 = scalar_lea.vmem [#allocation0], 8
    %37 = vst [vmem:[%s36] sm:%s3] %v35
    %v38 = vld [vmem:[%s0] sm:%s3]
    %39 = vst [vmem:[#allocation0] sm:%s3] %v38
    %v40 = vld [vmem:[#allocation0] sm:$0x7]
    %vm41 = vcmask 130048
    %42 = vst.msk [vmem:[%s1] sm:$0x7] %vm41, %v40
    %s43 = scalar_lea.vmem [#allocation0], 8
    %v44 = vld [vmem:[%s43] sm:$0x7]
    %vm45 = vcmask 130048
    %s46 = scalar_lea.vmem %s1, 3
    %47 = vst.msk [vmem:[%s46] sm:$0x7] %vm45, %v44
    %s48 = scalar_lea.vmem [#allocation0], 16
    %v49 = vld [vmem:[%s48] sm:$0x7]
    %vm50 = vcmask 130048
    %s51 = scalar_lea.vmem %s1, 6
    %52 = vst.msk [vmem:[%s51] sm:$0x7] %vm50, %v49
    %s53 = scalar_lea.vmem [#allocation0], 24
    %v54 = vld [vmem:[%s53] sm:$0x7]
    %vm55 = vcmask 130048
    %s56 = scalar_lea.vmem %s1, 9
    %57 = vst.msk [vmem:[%s56] sm:$0x7] %vm55, %v54
    %s58 = scalar_lea.vmem [#allocation0], 32
    %v59 = vld [vmem:[%s58] sm:$0x7]
    %vm60 = vcmask 130048
    %s61 = scalar_lea.vmem %s1, 12
    %62 = vst.msk [vmem:[%s61] sm:$0x7] %vm60, %v59
    %s63 = scalar_lea.vmem [#allocation0], 40
    %v64 = vld [vmem:[%s63] sm:$0x7]
    %vm65 = vcmask 130048
    %s66 = scalar_lea.vmem %s1, 15
    %67 = vst.msk [vmem:[%s66] sm:$0x7] %vm65, %v64
    %s68 = scalar_lea.vmem [#allocation0], 48
    %v69 = vld [vmem:[%s68] sm:$0x7]
    %vm70 = vcmask 130048
    %s71 = scalar_lea.vmem %s1, 18
    %72 = vst.msk [vmem:[%s71] sm:$0x7] %vm70, %v69
    %s73 = scalar_lea.vmem [#allocation0], 56
    %v74 = vld [vmem:[%s73] sm:$0x7]
    %vm75 = vcmask 130048
    %s76 = scalar_lea.vmem %s1, 21
    %77 = vst.msk [vmem:[%s76] sm:$0x7] %vm75, %v74

// kernel: tile.11
$region0: #{tile.11}
  #allocation0 [shape = 's32[1]{0}', space=sflag, size = 0x4, scoped, tag = 'scoped memory for tile.11']
  %s0 = inlined_call_operand.<no memory space> [shape: f32[], index: 0, kind: input, shape index: {}]
  %s1 = inlined_call_operand.vmem [shape: f32[16], index: 1, kind: output, shape index: {}]
  %v2 = vstv %s0
  %3 = vst [vmem:[%s1] sm:$0x1] %v2

// kernel: jvp__.10
$region0: #{jvp__.10}
  #allocation0 [shape = 'u32[]', space=smem, size = 0x4, offset = 0x4, fixed_abs, tag = 'smem constant byte address 0x4 - core index']
  #allocation1 [shape = 'u32[144,128]{1,0:T(1,128)}', space=vmem, size = 0x12000, scoped, tag = 'internal scratch']
  %s0 = inlined_call_operand.vmem [shape: f32[8,16], index: 0, kind: input, shape index: {}]
  %s1 = inlined_call_operand.vmem [shape: bf16[16,128], index: 1, kind: input, shape index: {}]
  %s2 = inlined_call_operand.vmem [shape: f32[1,128], index: 2, kind: input, shape index: {}]
  %s3 = inlined_call_operand.vmem [shape: f32[8,128], index: 3, kind: output, shape index: {}]
  %s4 = sld [smem:[#allocation0]]
  $region22: #{jvp__.10} parent=0
    _
  %s6 = ssub.s32 1, %s4
  %s7 = scalar_select 0, %s6, %s4
  // Predicated region
  $region2: #{jvp__.10} parent=0 // pred_check
    _
  $region3: #{jvp__.10} parent=0 // pred_check_branch
    %9 = sbr.rel (0) target = $region5
  $region4: #{jvp__.10} parent=0 // pred_region
    _
  $region5: #{jvp__.10} parent=0 // pred_fallthru
    _
  // Predicated region
  $region6: #{jvp__.10} parent=0 // pred_check
    _
  $region7: #{jvp__.10} parent=0 // pred_check_branch
    %11 = sbr.rel (0) target = $region9
  $region8: #{jvp__.10} parent=0 // pred_region
    _
  $region9: #{jvp__.10} parent=0 // pred_fallthru
    _
  // Predicated region
  $region10: #{jvp__.10} parent=0 // pred_check
    _
  $region11: #{jvp__.10} parent=0 // pred_check_branch
    %13 = sbr.rel (0) target = $region13
  $region12: #{jvp__.10} parent=0 // pred_region
    _
  $region13: #{jvp__.10} parent=0 // pred_fallthru
    _
  %v15 = vld [vmem:[%s0] sm:$0xff]
  %v16 = vpack.c.bf16 %v15, %v15
  %v17 = vld [vmem:[%s1] sm:$0xf]
  %v18 = vld [vmem:[%s1 + $0x4] sm:$0xf]
  %v19 = vld [vmem:[%s2] sm:$0x1]
  %v21 = vlaneseq
  %v22 = vshrl.u32 %v21, 7
  %v23 = vsub.s32 0, %v22
  %v24 = vrot.slane %v19, %v23
  %v28 = vunpack.c.l.b16 %v17
  %v29 = vunpack.c.l.b16 %v18
  %v30 = vpack.c.b16 %v29, %v28
  %vm32 = vcmask 130048
  %v34 = vsel %vm32, %v16, 0
  %36 = vmatprep.subr.bf16.mxu0 0
  %37 = vmatpush1.bf16.msra.mxu0 %v30
  %38 = vmatprep.subr.bf16.mxu0 0
  %39 = vmatpush1.bf16.msra.mxu0 0
  %40 = vmatprep.subr.bf16.mxu0 0
  %41 = vmatpush1.bf16.msra.mxu0 0
  %42 = vmatprep.subr.bf16.mxu0 0
  %43 = vmatpush1.bf16.msra.mxu0 0
  %44 = vmatprep.subr.bf16.mxu0 0
  %45 = vmatpush1.bf16.msra.mxu0 0
  %46 = vmatprep.subr.bf16.mxu0 0
  %47 = vmatpush1.bf16.msra.mxu0 0
  %48 = vmatprep.subr.bf16.mxu0 0
  %49 = vmatpush1.bf16.msra.mxu0 0
  %50 = vmatprep.subr.bf16.mxu0 0
  %51 = vmatpush1.bf16.msra.mxu0 0
  %52 = vmatprep.subr.bf16.mxu0 0
  %53 = vmatpush1.bf16.msra.mxu0 0
  %54 = vmatprep.subr.bf16.mxu0 0
  %55 = vmatpush1.bf16.msra.mxu0 0
  %56 = vmatprep.subr.bf16.mxu0 0
  %57 = vmatpush1.bf16.msra.mxu0 0
  %58 = vmatprep.subr.bf16.mxu0 0
  %59 = vmatpush1.bf16.msra.mxu0 0
  %60 = vmatprep.subr.bf16.mxu0 0
  %61 = vmatpush1.bf16.msra.mxu0 0
  %62 = vmatprep.subr.bf16.mxu0 0
  %63 = vmatpush1.bf16.msra.mxu0 0
  %64 = vmatprep.subr.bf16.mxu0 0
  %65 = vmatpush1.bf16.msra.mxu0 0
  %66 = vmatprep.subr.bf16.mxu0 0
  %67 = vmatpush1.bf16.msra.mxu0 0
  %68 = vmatprep.mubr.bf16.mxu0 0
  %69 = vmatmul.mubr.bf16.gmra.mrb[0].mxu0 %v34
  %v70 = vpop.f32.mrb[0].mxu0
  %v71 = vadd.f32 %v24, %v70
  %v72 = vpop.f32.mrb[0].mxu0
  %v73 = vpop.f32.mrb[0].mxu0
  %v74 = vpop.f32.mrb[0].mxu0
  %75 = vdwg.mxu0
  %76 = vst [vmem:[%s3] sm:$0xff] %v71
  // Predicated region
  $region14: #{jvp__.10} parent=0 // pred_check
    _
  $region15: #{jvp__.10} parent=0 // pred_check_branch
    %78 = sbr.rel (0) target = $region17
  $region16: #{jvp__.10} parent=0 // pred_region
    _
  $region17: #{jvp__.10} parent=0 // pred_fallthru
    _
  // Predicated region
  $region18: #{jvp__.10} parent=0 // pred_check
    _
  $region19: #{jvp__.10} parent=0 // pred_check_branch
    %80 = sbr.rel (0) target = $region21
  $region20: #{jvp__.10} parent=0 // pred_region
    _
  $region21: #{jvp__.10} parent=0 // pred_fallthru
    _

// kernel: jvp__.11
$region0: #{jvp__.11}
  #allocation0 [shape = 'u32[]', space=smem, size = 0x4, offset = 0x4, fixed_abs, tag = 'smem constant byte address 0x4 - core index']
  #allocation1 [shape = 'u32[144,128]{1,0:T(1,128)}', space=vmem, size = 0x12000, scoped, tag = 'internal scratch']
  %s0 = inlined_call_operand.vmem [shape: f32[8,32], index: 0, kind: input, shape index: {}]
  %s1 = inlined_call_operand.vmem [shape: bf16[32,128], index: 1, kind: input, shape index: {}]
  %s2 = inlined_call_operand.vmem [shape: f32[1,128], index: 2, kind: input, shape index: {}]
  %s3 = inlined_call_operand.vmem [shape: bf16[128,128], index: 3, kind: input, shape index: {}]
  %s4 = inlined_call_operand.vmem [shape: f32[1,128], index: 4, kind: input, shape index: {}]
  %s5 = inlined_call_operand.vmem [shape: f32[8,128], index: 5, kind: output, shape index: {}]
  %s6 = sld [smem:[#allocation0]]
  $region30: #{jvp__.11} parent=0
    _
  %s8 = ssub.s32 1, %s6
  %s9 = scalar_select 0, %s8, %s6
  // Predicated region
  $region2: #{jvp__.11} parent=0 // pred_check
    _
  $region3: #{jvp__.11} parent=0 // pred_check_branch
    %11 = sbr.rel (0) target = $region5
  $region4: #{jvp__.11} parent=0 // pred_region
    _
  $region5: #{jvp__.11} parent=0 // pred_fallthru
    _
  // Predicated region
  $region6: #{jvp__.11} parent=0 // pred_check
    _
  $region7: #{jvp__.11} parent=0 // pred_check_branch
    %13 = sbr.rel (0) target = $region9
  $region8: #{jvp__.11} parent=0 // pred_region
    _
  $region9: #{jvp__.11} parent=0 // pred_fallthru
    _
  // Predicated region
  $region10: #{jvp__.11} parent=0 // pred_check
    _
  $region11: #{jvp__.11} parent=0 // pred_check_branch
    %15 = sbr.rel (0) target = $region13
  $region12: #{jvp__.11} parent=0 // pred_region
    _
  $region13: #{jvp__.11} parent=0 // pred_fallthru
    _
  // Predicated region
  $region14: #{jvp__.11} parent=0 // pred_check
    _
  $region15: #{jvp__.11} parent=0 // pred_check_branch
    %17 = sbr.rel (0) target = $region17
  $region16: #{jvp__.11} parent=0 // pred_region
    _
  $region17: #{jvp__.11} parent=0 // pred_fallthru
    _
  // Predicated region
  $region18: #{jvp__.11} parent=0 // pred_check
    _
  $region19: #{jvp__.11} parent=0 // pred_check_branch
    %19 = sbr.rel (0) target = $region21
  $region20: #{jvp__.11} parent=0 // pred_region
    _
  $region21: #{jvp__.11} parent=0 // pred_fallthru
    _
  %v21 = vld [vmem:[%s0] sm:$0xff]
  %v22 = vpack.c.bf16 %v21, %v21
  %v23 = vld [vmem:[%s1] sm:$0xf]
  %v24 = vld [vmem:[%s1 + $0x4] sm:$0xf]
  %v25 = vld [vmem:[%s1 + $0x8] sm:$0xf]
  %v26 = vld [vmem:[%s1 + $0xc] sm:$0xf]
  %v27 = vld [vmem:[%s2] sm:$0x1]
  %v29 = vlaneseq
  %v30 = vshrl.u32 %v29, 7
  %v31 = vsub.s32 0, %v30
  %v32 = vrot.slane %v27, %v31
  %v38 = vunpack.c.l.b16 %v23
  %v39 = vunpack.c.l.b16 %v24
  %v40 = vunpack.c.l.b16 %v25
  %v41 = vunpack.c.l.b16 %v26
  %v42 = vpack.c.b16 %v39, %v38
  %v43 = vpack.c.b16 %v41, %v40
  %vm46 = vcmask 261120
  %v48 = vsel %vm46, %v22, 0
  %50 = vmatprep.subr.bf16.mxu0 0
  %51 = vmatpush1.bf16.msra.mxu0 %v42
  %52 = vmatprep.subr.bf16.mxu0 0
  %53 = vmatpush1.bf16.msra.mxu0 %v43
  %54 = vmatprep.subr.bf16.mxu0 0
  %55 = vmatpush1.bf16.msra.mxu0 0
  %56 = vmatprep.subr.bf16.mxu0 0
  %57 = vmatpush1.bf16.msra.mxu0 0
  %58 = vmatprep.subr.bf16.mxu0 0
  %59 = vmatpush1.bf16.msra.mxu0 0
  %60 = vmatprep.subr.bf16.mxu0 0
  %61 = vmatpush1.bf16.msra.mxu0 0
  %62 = vmatprep.subr.bf16.mxu0 0
  %63 = vmatpush1.bf16.msra.mxu0 0
  %64 = vmatprep.subr.bf16.mxu0 0
  %65 = vmatpush1.bf16.msra.mxu0 0
  %66 = vmatprep.subr.bf16.mxu0 0
  %67 = vmatpush1.bf16.msra.mxu0 0
  %68 = vmatprep.subr.bf16.mxu0 0
  %69 = vmatpush1.bf16.msra.mxu0 0
  %70 = vmatprep.subr.bf16.mxu0 0
  %71 = vmatpush1.bf16.msra.mxu0 0
  %72 = vmatprep.subr.bf16.mxu0 0
  %73 = vmatpush1.bf16.msra.mxu0 0
  %74 = vmatprep.subr.bf16.mxu0 0
  %75 = vmatpush1.bf16.msra.mxu0 0
  %76 = vmatprep.subr.bf16.mxu0 0
  %77 = vmatpush1.bf16.msra.mxu0 0
  %78 = vmatprep.subr.bf16.mxu0 0
  %79 = vmatpush1.bf16.msra.mxu0 0
  %80 = vmatprep.subr.bf16.mxu0 0
  %81 = vmatpush1.bf16.msra.mxu0 0
  %82 = vmatprep.mubr.bf16.mxu0 0
  %83 = vmatmul.mubr.bf16.gmra.mrb[0].mxu0 %v48
  %v84 = vpop.f32.mrb[0].mxu0
  %v85 = vadd.f32 %v32, %v84
  %v86 = vpop.f32.mrb[0].mxu0
  %v87 = vpop.f32.mrb[0].mxu0
  %v88 = vpop.f32.mrb[0].mxu0
  %89 = vdwg.mxu0
  %v90 = vsub.f32 0.0, %v85
  %v91 = vmul.f32 %v90, 1.442695
  %v92 = vpow.pop %v91
  %v93 = vadd.f32 %v92, 1.0
  %v94 = vrcp.pop %v93
  %v95 = vmul.f32 1.0, %v94
  %v96 = vmul.f32 %v85, %v95
  %v97 = vpack.c.bf16 %v96, %v96
  %v98 = vld [vmem:[%s3] sm:$0xf]
  %v99 = vld [vmem:[%s3 + $0x4] sm:$0xf]
  %v100 = vld [vmem:[%s3 + $0x8] sm:$0xf]
  %v101 = vld [vmem:[%s3 + $0xc] sm:$0xf]
  %v102 = vld [vmem:[%s3 + $0x10] sm:$0xf]
  %v103 = vld [vmem:[%s3 + $0x14] sm:$0xf]
  %v104 = vld [vmem:[%s3 + $0x18] sm:$0xf]
  %v105 = vld [vmem:[%s3 + $0x1c] sm:$0xf]
  %v106 = vld [vmem:[%s3 + $0x20] sm:$0xf]
  %v107 = vld [vmem:[%s3 + $0x24] sm:$0xf]
  %v108 = vld [vmem:[%s3 + $0x28] sm:$0xf]
  %v109 = vld [vmem:[%s3 + $0x2c] sm:$0xf]
  %v110 = vld [vmem:[%s3 + $0x30] sm:$0xf]
  %v111 = vld [vmem:[%s3 + $0x34] sm:$0xf]
  %v112 = vld [vmem:[%s3 + $0x38] sm:$0xf]
  %v113 = vld [vmem:[%s3 + $0x3c] sm:$0xf]
  %v114 = vld [vmem:[%s4] sm:$0x1]
  %v116 = vlaneseq
  %v117 = vshrl.u32 %v116, 7
  %v118 = vsub.s32 0, %v117
  %v119 = vrot.slane %v114, %v118
  %v137 = vunpack.c.l.b16 %v98
  %v138 = vunpack.c.l.b16 %v99
  %v139 = vunpack.c.l.b16 %v100
  %v140 = vunpack.c.l.b16 %v101
  %v141 = vunpack.c.l.b16 %v102
  %v142 = vunpack.c.l.b16 %v103
  %v143 = vunpack.c.l.b16 %v104
  %v144 = vunpack.c.l.b16 %v105
  %v145 = vunpack.c.l.b16 %v106
  %v146 = vunpack.c.l.b16 %v107
  %v147 = vunpack.c.l.b16 %v108
  %v148 = vunpack.c.l.b16 %v109
  %v149 = vunpack.c.l.b16 %v110
  %v150 = vunpack.c.l.b16 %v111
  %v151 = vunpack.c.l.b16 %v112
  %v152 = vunpack.c.l.b16 %v113
  %v153 = vpack.c.b16 %v138, %v137
  %v154 = vpack.c.b16 %v140, %v139
  %v155 = vpack.c.b16 %v142, %v141
  %v156 = vpack.c.b16 %v144, %v143
  %v157 = vpack.c.b16 %v146, %v145
  %v158 = vpack.c.b16 %v148, %v147
  %v159 = vpack.c.b16 %v150, %v149
  %v160 = vpack.c.b16 %v152, %v151
  %169 = vmatprep.subr.bf16.mxu0 0
  %170 = vmatpush1.bf16.msra.mxu0 %v153
  %171 = vmatprep.subr.bf16.mxu0 0
  %172 = vmatpush1.bf16.msra.mxu0 %v154
  %173 = vmatprep.subr.bf16.mxu0 0
  %174 = vmatpush1.bf16.msra.mxu0 %v155
  %175 = vmatprep.subr.bf16.mxu0 0
  %176 = vmatpush1.bf16.msra.mxu0 %v156
  %177 = vmatprep.subr.bf16.mxu0 0
  %178 = vmatpush1.bf16.msra.mxu0 %v157
  %179 = vmatprep.subr.bf16.mxu0 0
  %180 = vmatpush1.bf16.msra.mxu0 %v158
  %181 = vmatprep.subr.bf16.mxu0 0
  %182 = vmatpush1.bf16.msra.mxu0 %v159
  %183 = vmatprep.subr.bf16.mxu0 0
  %184 = vmatpush1.bf16.msra.mxu0 %v160
  %185 = vmatprep.subr.bf16.mxu0 0
  %186 = vmatpush1.bf16.msra.mxu0 0
  %187 = vmatprep.subr.bf16.mxu0 0
  %188 = vmatpush1.bf16.msra.mxu0 0
  %189 = vmatprep.subr.bf16.mxu0 0
  %190 = vmatpush1.bf16.msra.mxu0 0
  %191 = vmatprep.subr.bf16.mxu0 0
  %192 = vmatpush1.bf16.msra.mxu0 0
  %193 = vmatprep.subr.bf16.mxu0 0
  %194 = vmatpush1.bf16.msra.mxu0 0
  %195 = vmatprep.subr.bf16.mxu0 0
  %196 = vmatpush1.bf16.msra.mxu0 0
  %197 = vmatprep.subr.bf16.mxu0 0
  %198 = vmatpush1.bf16.msra.mxu0 0
  %199 = vmatprep.subr.bf16.mxu0 0
  %200 = vmatpush1.bf16.msra.mxu0 0
  %201 = vmatprep.mubr.bf16.mxu0 0
  %202 = vmatmul.mubr.bf16.gmra.mrb[0].mxu0 %v97
  %v203 = vpop.f32.mrb[0].mxu0
  %v204 = vadd.f32 %v119, %v203
  %v205 = vpop.f32.mrb[0].mxu0
  %v206 = vpop.f32.mrb[0].mxu0
  %v207 = vpop.f32.mrb[0].mxu0
  %208 = vdwg.mxu0
  %209 = vst [vmem:[%s5] sm:$0xff] %v204
  // Predicated region
  $region22: #{jvp__.11} parent=0 // pred_check
    _
  $region23: #{jvp__.11} parent=0 // pred_check_branch
    %211 = sbr.rel (0) target = $region25
  $region24: #{jvp__.11} parent=0 // pred_region
    _
  $region25: #{jvp__.11} parent=0 // pred_fallthru
    _
  // Predicated region
  $region26: #{jvp__.11} parent=0 // pred_check
    _
  $region27: #{jvp__.11} parent=0 // pred_check_branch
    %213 = sbr.rel (0) target = $region29
  $region28: #{jvp__.11} parent=0 // pred_region
    _
  $region29: #{jvp__.11} parent=0 // pred_fallthru
    _

// kernel: jvp__.12
$region0: #{jvp__.12}
  #allocation0 [shape = 'u32[]', space=smem, size = 0x4, offset = 0x4, fixed_abs, tag = 'smem constant byte address 0x4 - core index']
  #allocation1 [shape = 'u32[144,128]{1,0:T(1,128)}', space=vmem, size = 0x12000, scoped, tag = 'internal scratch']
  %s0 = inlined_call_operand.vmem [shape: f32[16,1], index: 0, kind: input, shape index: {}]
  %s1 = inlined_call_operand.vmem [shape: f32[16,128], index: 1, kind: input, shape index: {}]
  %s2 = inlined_call_operand.vmem [shape: f32[16,128], index: 2, kind: input, shape index: {}]
  %s3 = inlined_call_operand.vmem [shape: f32[16,128], index: 3, kind: input, shape index: {}]
  %s4 = inlined_call_operand.vmem [shape: bf16[8,128], index: 4, kind: input, shape index: {}]
  %s5 = inlined_call_operand.vmem [shape: f32[1,128], index: 5, kind: input, shape index: {}]
  %s6 = inlined_call_operand.vmem [shape: bf16[128,384], index: 6, kind: input, shape index: {}]
  %s7 = inlined_call_operand.vmem [shape: f32[16,128], index: 7, kind: output, shape index: {}]
  %s8 = sld [smem:[#allocation0]]
  $region61: #{jvp__.12} parent=0
    _
  %s10 = ssub.s32 1, %s8
  %s11 = scalar_select 0, %s10, %s8
  loop: start=0, step=1, limit=4
  $region2: #{jvp__.12} parent=0 // loop_pre_header
    _
  $region3: #{jvp__.12} parent=0 // loop_header
    %s13 = sphi 0, %s17
    %p14 = scmp.ge.s32.totalorder %s13, 4
    %s23 = sphi 0, %s25
    %s26 = sphi 0, %s23
    %s27 = sphi 0, %s26
    %s43 = sphi 0, %s27
    %s49 = sphi 0, %s51
    %s52 = sphi 0, %s49
    %s53 = sphi 0, %s52
    %s69 = sphi 0, %s53
    %s75 = sphi 0, %s77
    %s78 = sphi 0, %s75
    %s79 = sphi 0, %s78
    %s95 = sphi 0, %s79
    %s101 = sphi 0, %s103
    %s104 = sphi 0, %s101
    %s105 = sphi 0, %s104
    %s121 = sphi 0, %s105
    %s125 = sphi 0, %s125
    %s127 = sphi 0, %s125
    %s128 = sphi 0, %s127
    %s142 = sphi 0, %s128
    %s146 = sphi 0, %s146
    %s148 = sphi 0, %s146
    %s149 = sphi 0, %s148
    %s163 = sphi 0, %s149
    %s167 = sphi 0, %s167
    %s169 = sphi 0, %s167
    %s170 = sphi 0, %s169
    %s184 = sphi 0, %s170
    %s190 = sphi 0, %s192
    %s193 = sphi 0, %s190
    %s194 = sphi 0, %s193
    %s210 = sphi 0, %s194
  $region4: #{jvp__.12} parent=0 // loop_header_branch
    %16 = sbr.rel (%p14) target = $region8
  $region5: #{jvp__.12} parent=0 // loop_body
    %s18 = ssub.s32 %s13, 1
    %s19 = ssub.s32 %s13, 2
    %s20 = sadd.s32 %s13, 1
    %s21 = ssub.s32 %s13, %s20
    %p22 = scmp.eq.s32.totalorder %s21, 0
    %s24 = sadd.s32 %s23, 1
    %s25 = scalar_select %p22, %s23, %s24
    %p28 = pneg %p22
    %p29 = scmp.eq.s32.totalorder %s13, 1
    %p30 = por %p28, %p29
    %p31 = scmp.ne.s32.totalorder %s23, %s26
    %p32 = scmp.eq.s32.totalorder %s13, 0
    %p33 = por %p31, %p32
    %p34 = scmp.ne.s32.totalorder %s23, %s26
    %p35 = scmp.eq.s32.totalorder %s18, 1
    %p36 = por %p34, %p35
    %p37 = scmp.ne.s32.totalorder %s26, %s27
    %p38 = scmp.eq.s32.totalorder %s18, 0
    %p39 = por %p37, %p38
    %p40 = scmp.ne.s32.totalorder %s26, %s27
    %p41 = scmp.eq.s32.totalorder %s19, 1
    %p42 = por %p40, %p41
    %p44 = scmp.ne.s32.totalorder %s27, %s43
    %p45 = scmp.eq.s32.totalorder %s19, 0
    %p46 = por %p44, %p45
    %s47 = ssub.s32 %s13, %s20
    %p48 = scmp.eq.s32.totalorder %s47, 0
    %s50 = sadd.s32 %s49, 1
    %s51 = scalar_select %p48, %s49, %s50
    %p54 = pneg %p48
    %p55 = scmp.eq.s32.totalorder %s13, 1
    %p56 = por %p54, %p55
    %p57 = scmp.ne.s32.totalorder %s49, %s52
    %p58 = scmp.eq.s32.totalorder %s13, 0
    %p59 = por %p57, %p58
    %p60 = scmp.ne.s32.totalorder %s49, %s52
    %p61 = scmp.eq.s32.totalorder %s18, 1
    %p62 = por %p60, %p61
    %p63 = scmp.ne.s32.totalorder %s52, %s53
    %p64 = scmp.eq.s32.totalorder %s18, 0
    %p65 = por %p63, %p64
    %p66 = scmp.ne.s32.totalorder %s52, %s53
    %p67 = scmp.eq.s32.totalorder %s19, 1
    %p68 = por %p66, %p67
    %p70 = scmp.ne.s32.totalorder %s53, %s69
    %p71 = scmp.eq.s32.totalorder %s19, 0
    %p72 = por %p70, %p71
    %s73 = ssub.s32 %s13, %s20
    %p74 = scmp.eq.s32.totalorder %s73, 0
    %s76 = sadd.s32 %s75, 1
    %s77 = scalar_select %p74, %s75, %s76
    %p80 = pneg %p74
    %p81 = scmp.eq.s32.totalorder %s13, 1
    %p82 = por %p80, %p81
    %p83 = scmp.ne.s32.totalorder %s75, %s78
    %p84 = scmp.eq.s32.totalorder %s13, 0
    %p85 = por %p83, %p84
    %p86 = scmp.ne.s32.totalorder %s75, %s78
    %p87 = scmp.eq.s32.totalorder %s18, 1
    %p88 = por %p86, %p87
    %p89 = scmp.ne.s32.totalorder %s78, %s79
    %p90 = scmp.eq.s32.totalorder %s18, 0
    %p91 = por %p89, %p90
    %p92 = scmp.ne.s32.totalorder %s78, %s79
    %p93 = scmp.eq.s32.totalorder %s19, 1
    %p94 = por %p92, %p93
    %p96 = scmp.ne.s32.totalorder %s79, %s95
    %p97 = scmp.eq.s32.totalorder %s19, 0
    %p98 = por %p96, %p97
    %s99 = ssub.s32 %s13, %s20
    %p100 = scmp.eq.s32.totalorder %s99, 0
    %s102 = sadd.s32 %s101, 1
    %s103 = scalar_select %p100, %s101, %s102
    %p106 = pneg %p100
    %p107 = scmp.eq.s32.totalorder %s13, 1
    %p108 = por %p106, %p107
    %p109 = scmp.ne.s32.totalorder %s101, %s104
    %p110 = scmp.eq.s32.totalorder %s13, 0
    %p111 = por %p109, %p110
    %p112 = scmp.ne.s32.totalorder %s101, %s104
    %p113 = scmp.eq.s32.totalorder %s18, 1
    %p114 = por %p112, %p113
    %p115 = scmp.ne.s32.totalorder %s104, %s105
    %p116 = scmp.eq.s32.totalorder %s18, 0
    %p117 = por %p115, %p116
    %p118 = scmp.ne.s32.totalorder %s104, %s105
    %p119 = scmp.eq.s32.totalorder %s19, 1
    %p120 = por %p118, %p119
    %p122 = scmp.ne.s32.totalorder %s105, %s121
    %p123 = scmp.eq.s32.totalorder %s19, 0
    %p124 = por %p122, %p123
    %s126 = sadd.s32 %s125, 1
    %p129 = scmp.eq.s32.totalorder %s13, 1
    %p130 = scmp.ne.s32.totalorder %s125, %s127
    %p131 = scmp.eq.s32.totalorder %s13, 0
    %p132 = por %p130, %p131
    %p133 = scmp.ne.s32.totalorder %s125, %s127
    %p134 = scmp.eq.s32.totalorder %s18, 1
    %p135 = por %p133, %p134
    %p136 = scmp.ne.s32.totalorder %s127, %s128
    %p137 = scmp.eq.s32.totalorder %s18, 0
    %p138 = por %p136, %p137
    %p139 = scmp.ne.s32.totalorder %s127, %s128
    %p140 = scmp.eq.s32.totalorder %s19, 1
    %p141 = por %p139, %p140
    %p143 = scmp.ne.s32.totalorder %s128, %s142
    %p144 = scmp.eq.s32.totalorder %s19, 0
    %p145 = por %p143, %p144
    %s147 = sadd.s32 %s146, 1
    %p150 = scmp.eq.s32.totalorder %s13, 1
    %p151 = scmp.ne.s32.totalorder %s146, %s148
    %p152 = scmp.eq.s32.totalorder %s13, 0
    %p153 = por %p151, %p152
    %p154 = scmp.ne.s32.totalorder %s146, %s148
    %p155 = scmp.eq.s32.totalorder %s18, 1
    %p156 = por %p154, %p155
    %p157 = scmp.ne.s32.totalorder %s148, %s149
    %p158 = scmp.eq.s32.totalorder %s18, 0
    %p159 = por %p157, %p158
    %p160 = scmp.ne.s32.totalorder %s148, %s149
    %p161 = scmp.eq.s32.totalorder %s19, 1
    %p162 = por %p160, %p161
    %p164 = scmp.ne.s32.totalorder %s149, %s163
    %p165 = scmp.eq.s32.totalorder %s19, 0
    %p166 = por %p164, %p165
    %s168 = sadd.s32 %s167, 1
    %p171 = scmp.eq.s32.totalorder %s13, 1
    %p172 = scmp.ne.s32.totalorder %s167, %s169
    %p173 = scmp.eq.s32.totalorder %s13, 0
    %p174 = por %p172, %p173
    %p175 = scmp.ne.s32.totalorder %s167, %s169
    %p176 = scmp.eq.s32.totalorder %s18, 1
    %p177 = por %p175, %p176
    %p178 = scmp.ne.s32.totalorder %s169, %s170
    %p179 = scmp.eq.s32.totalorder %s18, 0
    %p180 = por %p178, %p179
    %p181 = scmp.ne.s32.totalorder %s169, %s170
    %p182 = scmp.eq.s32.totalorder %s19, 1
    %p183 = por %p181, %p182
    %p185 = scmp.ne.s32.totalorder %s170, %s184
    %p186 = scmp.eq.s32.totalorder %s19, 0
    %p187 = por %p185, %p186
    %s188 = ssub.s32 %s13, %s20
    %p189 = scmp.eq.s32.totalorder %s188, 0
    %s191 = sadd.s32 %s190, 1
    %s192 = scalar_select %p189, %s190, %s191
    %p195 = pneg %p189
    %p196 = scmp.eq.s32.totalorder %s13, 1
    %p197 = por %p195, %p196
    %p198 = scmp.ne.s32.totalorder %s190, %s193
    %p199 = scmp.eq.s32.totalorder %s13, 0
    %p200 = por %p198, %p199
    %p201 = scmp.ne.s32.totalorder %s190, %s193
    %p202 = scmp.eq.s32.totalorder %s18, 1
    %p203 = por %p201, %p202
    %p204 = scmp.ne.s32.totalorder %s193, %s194
    %p205 = scmp.eq.s32.totalorder %s18, 0
    %p206 = por %p204, %p205
    %p207 = scmp.ne.s32.totalorder %s193, %s194
    %p208 = scmp.eq.s32.totalorder %s19, 1
    %p209 = por %p207, %p208
    %p211 = scmp.ne.s32.totalorder %s194, %s210
    %p212 = scmp.eq.s32.totalorder %s19, 0
    %p213 = por %p211, %p212
    %p214 = scmp.le.s32.totalorder 1, %s13
    %p215 = scmp.lt.s32.totalorder %s13, 3
    %p216 = pnand %p214, %p215
    %p217 = pneg %p216
    // Predicated region
    $region9: #{jvp__.12} parent=5 // pred_check
      _
    $region10: #{jvp__.12} parent=5 // pred_check_branch
      %219 = sbr.rel (%p216) target = $region12
    $region11: #{jvp__.12} parent=5 // pred_region
      %s220 = ssub.s32 %s13, 1
      // Predicated region
      $region13: #{jvp__.12} parent=11 // pred_check
        %p221 = pneg %p138
      $region14: #{jvp__.12} parent=11 // pred_check_branch
        %223 = sbr.rel (%p221) target = $region16
      $region15: #{jvp__.12} parent=11 // pred_region
        _
      $region16: #{jvp__.12} parent=11 // pred_fallthru
        _
      // Predicated region
      $region17: #{jvp__.12} parent=11 // pred_check
        %p224 = pneg %p159
      $region18: #{jvp__.12} parent=11 // pred_check_branch
        %226 = sbr.rel (%p224) target = $region20
      $region19: #{jvp__.12} parent=11 // pred_region
        _
      $region20: #{jvp__.12} parent=11 // pred_fallthru
        _
      // Predicated region
      $region21: #{jvp__.12} parent=11 // pred_check
        %p227 = pneg %p180
      $region22: #{jvp__.12} parent=11 // pred_check_branch
        %229 = sbr.rel (%p227) target = $region24
      $region23: #{jvp__.12} parent=11 // pred_region
        _
      $region24: #{jvp__.12} parent=11 // pred_fallthru
        _
    $region12: #{jvp__.12} parent=5 // pred_fallthru
      _
    %p230 = scmp.lt.s32.totalorder %s13, 2
    // Predicated region
    $region25: #{jvp__.12} parent=5 // pred_check
      %p231 = pneg %p230
    $region26: #{jvp__.12} parent=5 // pred_check_branch
      %233 = sbr.rel (%p231) target = $region28
    $region27: #{jvp__.12} parent=5 // pred_region
      // Predicated region
      $region29: #{jvp__.12} parent=27 // pred_check
        %p234 = pneg %p33
      $region30: #{jvp__.12} parent=27 // pred_check_branch
        %236 = sbr.rel (%p234) target = $region32
      $region31: #{jvp__.12} parent=27 // pred_region
        %p237 = scmp.lt.s32.totalorder %s13, 1
        %s238 = scalar_select %p237, %s13, 1
        %s239 = smul.addr %s238, 8
        %s240 = scalar_lea.vmem %s0, %s239
      $region32: #{jvp__.12} parent=27 // pred_fallthru
        _
      // Predicated region
      $region33: #{jvp__.12} parent=27 // pred_check
        %p241 = pneg %p59
      $region34: #{jvp__.12} parent=27 // pred_check_branch
        %243 = sbr.rel (%p241) target = $region36
      $region35: #{jvp__.12} parent=27 // pred_region
        %p244 = scmp.lt.s32.totalorder %s13, 1
        %s245 = scalar_select %p244, %s13, 1
        %s246 = smul.addr %s245, 8
        %s247 = scalar_lea.vmem %s1, %s246
      $region36: #{jvp__.12} parent=27 // pred_fallthru
        _
      // Predicated region
      $region37: #{jvp__.12} parent=27 // pred_check
        %p248 = pneg %p85
      $region38: #{jvp__.12} parent=27 // pred_check_branch
        %250 = sbr.rel (%p248) target = $region40
      $region39: #{jvp__.12} parent=27 // pred_region
        %p251 = scmp.lt.s32.totalorder %s13, 1
        %s252 = scalar_select %p251, %s13, 1
        %s253 = smul.addr %s252, 8
        %s254 = scalar_lea.vmem %s2, %s253
      $region40: #{jvp__.12} parent=27 // pred_fallthru
        _
      // Predicated region
      $region41: #{jvp__.12} parent=27 // pred_check
        %p255 = pneg %p111
      $region42: #{jvp__.12} parent=27 // pred_check_branch
        %257 = sbr.rel (%p255) target = $region44
      $region43: #{jvp__.12} parent=27 // pred_region
        %p258 = scmp.lt.s32.totalorder %s13, 1
        %s259 = scalar_select %p258, %s13, 1
        %s260 = smul.addr %s259, 8
        %s261 = scalar_lea.vmem %s3, %s260
      $region44: #{jvp__.12} parent=27 // pred_fallthru
        _
    $region28: #{jvp__.12} parent=5 // pred_fallthru
      _
    %p262 = scmp.le.s32.totalorder 1, %s13
    %p263 = scmp.lt.s32.totalorder %s13, 3
    %p264 = pnand %p262, %p263
    %p265 = pneg %p264
    // Predicated region
    $region45: #{jvp__.12} parent=5 // pred_check
      _
    $region46: #{jvp__.12} parent=5 // pred_check_branch
      %267 = sbr.rel (%p264) target = $region48
    $region47: #{jvp__.12} parent=5 // pred_region
      %s268 = ssub.s32 %s13, 1
      %p269 = scmp.lt.s32.totalorder %s18, 1
      %s270 = scalar_select %p269, %s18, 1
      %s271 = smul.addr %s270, 8
      %s272 = scalar_lea.vmem %s0, %s271
      %p273 = pneg %p39
      %p274 = pneg %p36
      %p275 = scmp.lt.s32.totalorder %s18, 1
      %s276 = scalar_select %p275, %s18, 1
      %s277 = smul.addr %s276, 8
      %s278 = scalar_lea.vmem %s1, %s277
      %p279 = pneg %p65
      %p280 = pneg %p62
      %p281 = scmp.lt.s32.totalorder %s18, 1
      %s282 = scalar_select %p281, %s18, 1
      %s283 = smul.addr %s282, 8
      %s284 = scalar_lea.vmem %s2, %s283
      %p285 = pneg %p91
      %p286 = pneg %p88
      %p287 = scmp.lt.s32.totalorder %s18, 1
      %s288 = scalar_select %p287, %s18, 1
      %s289 = smul.addr %s288, 8
      %s290 = scalar_lea.vmem %s3, %s289
      %p291 = pneg %p117
      %p292 = pneg %p114
      %p293 = pneg %p138
      %p294 = pneg %p135
      %p295 = pneg %p159
      %p296 = pneg %p156
      %p297 = pneg %p180
      %p298 = pneg %p177
      %p299 = pneg %p206
      %p300 = pneg %p203
      %p301 = scmp.lt.s32.totalorder %s18, 1
      %s302 = scalar_select %p301, %s18, 1
      %s303 = smul.addr %s302, 8
      %s304 = scalar_lea.vmem %s7, %s303
      %p305 = scmp.lt.s32.totalorder %s18, 1
      %s306 = scalar_select %p305, %s18, 1
      %s307 = smul.addr %s306, 8
      %s308 = scalar_lea.vmem %s0, %s307
      %p309 = scmp.lt.s32.totalorder %s18, 1
      %s310 = scalar_select %p309, %s18, 1
      %s311 = smul.addr %s310, 8
      %s312 = scalar_lea.vmem %s1, %s311
      %p313 = scmp.lt.s32.totalorder %s18, 1
      %s314 = scalar_select %p313, %s18, 1
      %s315 = smul.addr %s314, 8
      %s316 = scalar_lea.vmem %s2, %s315
      %p317 = scmp.lt.s32.totalorder %s18, 1
      %s318 = scalar_select %p317, %s18, 1
      %s319 = smul.addr %s318, 8
      %s320 = scalar_lea.vmem %s3, %s319
      %p321 = scmp.lt.s32.totalorder %s18, 1
      %s322 = scalar_select %p321, %s18, 1
      %s323 = smul.addr %s322, 8
      %s324 = scalar_lea.vmem %s7, %s323
      %v326 = vld [vmem:[%s308] sm:$0xff]
      %v327 = vmax.f32 %v326, 1e-12
      %v328 = vrcp.pop %v327
      %v329 = vmul.f32 1.0, %v328
      %v330 = vlaneseq
      %v331 = vand.u32 %v330, 127
      %v332 = vadd.s32 %v331, 1
      %v333 = vcvt.s32.f32 %v332
      %v334 = vmul.f32 %v326, 0.62831855
      %336 = vset.pattern.permute.xlu0 0
      %337 = vperm.xlu0 %336, %v334
      %v338 = vpop.permute.xlu0 %337
      %v340 = vmul.f32 %v333, %v338
      %v341 = vand.u32 2147483647, %v340
      %vm342 = vcmp.le.f32.partialorder %v341, 0.7853982
      %vm343 = vcmp.lt.s32.totalorder %v340, 0
      %v344 = vand.u32 %v340, 2139095040
      %v345 = vshrl.u32 %v344, 23
      %v346 = vsub.s32 %v345, 127
      %v347 = vand.u32 2147483647, %v340
      %v348 = vand.u32 %v347, 8388607
      %v349 = vor.u32 %v348, 8388608
      %v350 = vsub.s32 0, %v349
      %v351 = vadd.s32 %v346, 1
      %vm352 = vcmp.gt.s32.totalorder %v351, 0
      %v353 = vsel %vm352, %v351, 0
      %v354 = vshrl.u32 %v353, 5
      %v355 = vand.u32 %v353, 31
      %v356 = vsub.s32 32, %v355
      %v357 = vshrl.u32 683565275, %v356
      %v358 = vshll.u32 683565275, %v355
      %v359 = vshrl.u32 2475754826, %v356
      %v360 = vor.u32 %v358, %v359
      %v361 = vshll.u32 2475754826, %v355
      %v362 = vshrl.u32 2131351028, %v356
      %v363 = vor.u32 %v361, %v362
      %v364 = vshll.u32 2131351028, %v355
      %v365 = vshrl.u32 2102212464, %v356
      %v366 = vor.u32 %v364, %v365
      %v367 = vshll.u32 2102212464, %v355
      %v368 = vshrl.u32 920167782, %v356
      %v369 = vor.u32 %v367, %v368
      %v370 = vshll.u32 920167782, %v355
      %v371 = vshrl.u32 1326507024, %v356
      %v372 = vor.u32 %v370, %v371
      %vm373 = vcmp.lt.s32.totalorder %v354, 1
      %vm374 = vcmp.lt.s32.totalorder %v354, 2
      %vm375 = vcmp.lt.s32.totalorder %v354, 3
      %vm376 = vcmp.lt.s32.totalorder %v354, 4
      %v377 = vsel %vm373, %v357, %v360
      %v378 = vsel %vm376, %v366, 2102212464
      %v379 = vsel %vm375, %v363, %v378
      %v380 = vsel %vm374, %v377, %v379
      %v381 = vsel %vm373, %v360, %v363
      %v382 = vsel %vm376, %v369, 920167782
      %v383 = vsel %vm375, %v366, %v382
      %v384 = vsel %vm374, %v381, %v383
      %v385 = vsel %vm373, %v363, %v366
      %v386 = vsel %vm376, %v372, 1326507024
      %v387 = vsel %vm375, %v369, %v386
      %v388 = vsel %vm374, %v385, %v387
      %v389 = vshll.u32 %v349, 8
      %v390 = vmul.u32.u64.compose %v389, %v388
      %v391 = vextract.low.u32 %v390
      %v392 = vextract.high.u32 %v390
      %v393 = vmul.u32.u64.compose %v389, %v384
      %v394 = vextract.low.u32 %v393
      %v395 = vextract.high.u32 %v393
      %v396 = vmul.u32 %v389, %v380
      %v397 = vadd.s32 %v392, %v394
      %vm398 = vc.u32 %v392, %v394
      %v399 = vadd.s32 %v395, 1
      %v400 = vsel %vm398, %v399, %v395
      %v401 = vadd.s32 %v396, %v400
      %v402 = vadd.s32 %v401, 536870912
      %v403 = vshrl.u32 %v402, 30
      %v404 = vshll.u32 %v403, 30
      %v405 = vsub.s32 %v401, %v404
      %vm406 = vcmp.lt.s32.totalorder %v405, 0
      %v407 = vsub.s32 0, %v405
      %v408 = vsel %vm406, %v407, %v405
      %v409 = vclz %v408
      %v410 = vsub.s32 %v409, 2
      %vm411 = vcmp.gt.s32.totalorder 0, %v410
      %v412 = vsel %vm411, 0, %v410
      %v413 = vsub.s32 32, %v412
      %v414 = vshll.u32 %v405, %v412
      %v415 = vshrl.u32 %v397, %v413
      %v416 = vor.u32 %v414, %v415
      %v417 = vsub.s32 4294967266, %v412
      %v418 = vadd.s32 %v417, 127
      %v419 = vshll.u32 %v418, 23
      %v420 = vor.u32 4788187, %v419
      %v421 = vand.u32 2147483647, %v420
      %v423 = vcvt.s32.f32 %v416
      %v424 = vmul.f32 %v423, %v421
      %v425 = vxor.u32 %v424, 2147483648
      %v426 = vsel %vm343, %v425, %v424
      %v427 = vsub.s32 4, %v403
      %v428 = vsel %vm343, %v427, %v403
      %v429 = vsel %vm342, %v340, %v426
      %v430 = vsel %vm342, 0, %v428
      %v431 = vcosq.f32.pop %v429
      %v432 = vsinq.f32.pop %v429
      %vm433 = vweird.f32 %v340
      %v434 = vadd.s32 %v430, 3
      %v435 = vand.u32 %v434, 3
      %vm436 = vcmp.lt.s32.totalorder %v435, 2
      %vm437 = vcmp.eq.s32.totalorder %v435, 0
      %v438 = vxor.u32 %v432, 2147483648
      %v439 = vsel %vm437, %v431, %v438
      %vm440 = vcmp.eq.s32.totalorder %v435, 2
      %v441 = vxor.u32 %v431, 2147483648
      %v442 = vsel %vm440, %v441, %v432
      %v443 = vsel %vm436, %v439, %v442
      %v444 = vsel %vm433, nan, %v443
      %v445 = vmul.f32 %v444, 0.6324555
      %447 = vset.pattern.permute.xlu0 0
      %448 = vperm.xlu0 %447, %v329
      %v449 = vpop.permute.xlu0 %448
      %v451 = vmul.f32 %v445, %v449
      %v452 = vand.u32 2147483647, %v334
      %vm453 = vcmp.le.f32.partialorder %v452, 0.7853982
      %vm454 = vcmp.lt.s32.totalorder %v334, 0
      %v455 = vand.u32 %v334, 2139095040
      %v456 = vshrl.u32 %v455, 23
      %v457 = vsub.s32 %v456, 127
      %v458 = vand.u32 2147483647, %v334
      %v459 = vand.u32 %v458, 8388607
      %v460 = vor.u32 %v459, 8388608
      %v461 = vsub.s32 0, %v460
      %v462 = vadd.s32 %v457, 1
      %vm463 = vcmp.gt.s32.totalorder %v462, 0
      %v464 = vsel %vm463, %v462, 0
      %v465 = vshrl.u32 %v464, 5
      %v466 = vand.u32 %v464, 31
      %v467 = vsub.s32 32, %v466
      %v468 = vshrl.u32 683565275, %v467
      %v469 = vshll.u32 683565275, %v466
      %v470 = vshrl.u32 2475754826, %v467
      %v471 = vor.u32 %v469, %v470
      %v472 = vshll.u32 2475754826, %v466
      %v473 = vshrl.u32 2131351028, %v467
      %v474 = vor.u32 %v472, %v473
      %v475 = vshll.u32 2131351028, %v466
      %v476 = vshrl.u32 2102212464, %v467
      %v477 = vor.u32 %v475, %v476
      %v478 = vshll.u32 2102212464, %v466
      %v479 = vshrl.u32 920167782, %v467
      %v480 = vor.u32 %v478, %v479
      %v481 = vshll.u32 920167782, %v466
      %v482 = vshrl.u32 1326507024, %v467
      %v483 = vor.u32 %v481, %v482
      %vm484 = vcmp.lt.s32.totalorder %v465, 1
      %vm485 = vcmp.lt.s32.totalorder %v465, 2
      %vm486 = vcmp.lt.s32.totalorder %v465, 3
      %vm487 = vcmp.lt.s32.totalorder %v465, 4
      %v488 = vsel %vm484, %v468, %v471
      %v489 = vsel %vm487, %v477, 2102212464
      %v490 = vsel %vm486, %v474, %v489
      %v491 = vsel %vm485, %v488, %v490
      %v492 = vsel %vm484, %v471, %v474
      %v493 = vsel %vm487, %v480, 920167782
      %v494 = vsel %vm486, %v477, %v493
      %v495 = vsel %vm485, %v492, %v494
      %v496 = vsel %vm484, %v474, %v477
      %v497 = vsel %vm487, %v483, 1326507024
      %v498 = vsel %vm486, %v480, %v497
      %v499 = vsel %vm485, %v496, %v498
      %v500 = vshll.u32 %v460, 8
      %v501 = vmul.u32.u64.compose %v500, %v499
      %v502 = vextract.low.u32 %v501
      %v503 = vextract.high.u32 %v501
      %v504 = vmul.u32.u64.compose %v500, %v495
      %v505 = vextract.low.u32 %v504
      %v506 = vextract.high.u32 %v504
      %v507 = vmul.u32 %v500, %v491
      %v508 = vadd.s32 %v503, %v505
      %vm509 = vc.u32 %v503, %v505
      %v510 = vadd.s32 %v506, 1
      %v511 = vsel %vm509, %v510, %v506
      %v512 = vadd.s32 %v507, %v511
      %v513 = vadd.s32 %v512, 536870912
      %v514 = vshrl.u32 %v513, 30
      %v515 = vshll.u32 %v514, 30
      %v516 = vsub.s32 %v512, %v515
      %vm517 = vcmp.lt.s32.totalorder %v516, 0
      %v518 = vsub.s32 0, %v516
      %v519 = vsel %vm517, %v518, %v516
      %v520 = vclz %v519
      %v521 = vsub.s32 %v520, 2
      %vm522 = vcmp.gt.s32.totalorder 0, %v521
      %v523 = vsel %vm522, 0, %v521
      %v524 = vsub.s32 32, %v523
      %v525 = vshll.u32 %v516, %v523
      %v526 = vshrl.u32 %v508, %v524
      %v527 = vor.u32 %v525, %v526
      %v528 = vsub.s32 4294967266, %v523
      %v529 = vadd.s32 %v528, 127
      %v530 = vshll.u32 %v529, 23
      %v531 = vor.u32 4788187, %v530
      %v532 = vand.u32 2147483647, %v531
      %v534 = vcvt.s32.f32 %v527
      %v535 = vmul.f32 %v534, %v532
      %v536 = vxor.u32 %v535, 2147483648
      %v537 = vsel %vm454, %v536, %v535
      %v538 = vsub.s32 4, %v514
      %v539 = vsel %vm454, %v538, %v514
      %v540 = vsel %vm453, %v334, %v537
      %v541 = vsel %vm453, 0, %v539
      %v542 = vcosq.f32.pop %v540
      %v543 = vsinq.f32.pop %v540
      %vm544 = vweird.f32 %v334
      %v545 = vand.u32 %v541, 3
      %vm546 = vcmp.lt.s32.totalorder %v545, 2
      %vm547 = vcmp.eq.s32.totalorder %v545, 0
      %v548 = vxor.u32 %v543, 2147483648
      %v549 = vsel %vm547, %v542, %v548
      %vm550 = vcmp.eq.s32.totalorder %v545, 2
      %v551 = vxor.u32 %v542, 2147483648
      %v552 = vsel %vm550, %v551, %v543
      %v553 = vsel %vm546, %v549, %v552
      %v554 = vsel %vm544, nan, %v553
      %v555 = vadd.f32 %v554, 1.0
      %v556 = vmul.f32 %v555, 0.5
      %vm557 = vcmp.lt.f32.partialorder %v326, 5.0
      %v558 = vsel %vm557, 1.0, 0.0
      %v559 = vmul.f32 %v556, %v558
      %v560 = vpack.c.bf16 %v451, %v451
      %v561 = vld [vmem:[%s4] sm:$0xf]
      %v562 = vld [vmem:[%s5] sm:$0x1]
      %v564 = vlaneseq
      %v565 = vshrl.u32 %v564, 7
      %v566 = vsub.s32 0, %v565
      %v567 = vrot.slane %v562, %v566
      %vm569 = vcmask 64512
      %v571 = vsel %vm569, %v560, 0
      %vm573 = vcmask 1043456
      %v575 = vsel %vm573, %v561, 0
      %577 = vmatprep.subr.bf16.mxu0 0
      %578 = vmatpush1.bf16.msra.mxu0 %v575
      %579 = vmatprep.subr.bf16.mxu0 0
      %580 = vmatpush1.bf16.msra.mxu0 0
      %581 = vmatprep.subr.bf16.mxu0 0
      %582 = vmatpush1.bf16.msra.mxu0 0
      %583 = vmatprep.subr.bf16.mxu0 0
      %584 = vmatpush1.bf16.msra.mxu0 0
      %585 = vmatprep.subr.bf16.mxu0 0
      %586 = vmatpush1.bf16.msra.mxu0 0
      %587 = vmatprep.subr.bf16.mxu0 0
      %588 = vmatpush1.bf16.msra.mxu0 0
      %589 = vmatprep.subr.bf16.mxu0 0
      %590 = vmatpush1.bf16.msra.mxu0 0
      %591 = vmatprep.subr.bf16.mxu0 0
      %592 = vmatpush1.bf16.msra.mxu0 0
      %593 = vmatprep.subr.bf16.mxu0 0
      %594 = vmatpush1.bf16.msra.mxu0 0
      %595 = vmatprep.subr.bf16.mxu0 0
      %596 = vmatpush1.bf16.msra.mxu0 0
      %597 = vmatprep.subr.bf16.mxu0 0
      %598 = vmatpush1.bf16.msra.mxu0 0
      %599 = vmatprep.subr.bf16.mxu0 0
      %600 = vmatpush1.bf16.msra.mxu0 0
      %601 = vmatprep.subr.bf16.mxu0 0
      %602 = vmatpush1.bf16.msra.mxu0 0
      %603 = vmatprep.subr.bf16.mxu0 0
      %604 = vmatpush1.bf16.msra.mxu0 0
      %605 = vmatprep.subr.bf16.mxu0 0
      %606 = vmatpush1.bf16.msra.mxu0 0
      %607 = vmatprep.subr.bf16.mxu0 0
      %608 = vmatpush1.bf16.msra.mxu0 0
      %609 = vmatprep.mubr.bf16.mxu0 0
      %610 = vmatmul.mubr.bf16.gmra.mrb[0].mxu0 %v571
      %v611 = vpop.f32.mrb[0].mxu0
      %v612 = vadd.f32 %v567, %v611
      %v613 = vpop.f32.mrb[0].mxu0
      %v614 = vpop.f32.mrb[0].mxu0
      %v615 = vpop.f32.mrb[0].mxu0
      %616 = vdwg.mxu0
      %618 = vset.pattern.permute.xlu0 0
      %619 = vperm.xlu0 %618, %v559
      %v620 = vpop.permute.xlu0 %619
      %v622 = vmul.f32 %v612, %v620
      %v623 = vld [vmem:[%s312] sm:$0xff]
      %v624 = vmul.f32 %v623, %v622
      %v625 = vpack.c.bf16 %v624, %v624
      %v626 = vld [vmem:[%s6] sm:$0xff]
      %v627 = vld [vmem:[%s6 + $0x8] sm:$0xf]
      %v628 = vld [vmem:[%s6 + $0xc] sm:$0xff]
      %v629 = vld [vmem:[%s6 + $0x14] sm:$0xf]
      %v630 = vld [vmem:[%s6 + $0x18] sm:$0xff]
      %v631 = vld [vmem:[%s6 + $0x20] sm:$0xf]
      %v632 = vld [vmem:[%s6 + $0x24] sm:$0xff]
      %v633 = vld [vmem:[%s6 + $0x2c] sm:$0xf]
      %v634 = vld [vmem:[%s6 + $0x30] sm:$0xff]
      %v635 = vld [vmem:[%s6 + $0x38] sm:$0xf]
      %v636 = vld [vmem:[%s6 + $0x3c] sm:$0xff]
      %v637 = vld [vmem:[%s6 + $0x44] sm:$0xf]
      %v638 = vld [vmem:[%s6 + $0x48] sm:$0xff]
      %v639 = vld [vmem:[%s6 + $0x50] sm:$0xf]
      %v640 = vld [vmem:[%s6 + $0x54] sm:$0xff]
      %v641 = vld [vmem:[%s6 + $0x5c] sm:$0xf]
      %v642 = vld [vmem:[%s6 + $0x60] sm:$0xff]
      %v643 = vld [vmem:[%s6 + $0x68] sm:$0xf]
      %v644 = vld [vmem:[%s6 + $0x6c] sm:$0xff]
      %v645 = vld [vmem:[%s6 + $0x74] sm:$0xf]
      %v646 = vld [vmem:[%s6 + $0x78] sm:$0xff]
      %v647 = vld [vmem:[%s6 + $0x80] sm:$0xf]
      %v648 = vld [vmem:[%s6 + $0x84] sm:$0xff]
      %v649 = vld [vmem:[%s6 + $0x8c] sm:$0xf]
      %v650 = vld [vmem:[%s6 + $0x90] sm:$0xff]
      %v651 = vld [vmem:[%s6 + $0x98] sm:$0xf]
      %v652 = vld [vmem:[%s6 + $0x9c] sm:$0xff]
      %v653 = vld [vmem:[%s6 + $0xa4] sm:$0xf]
      %v654 = vld [vmem:[%s6 + $0xa8] sm:$0xff]
      %v655 = vld [vmem:[%s6 + $0xb0] sm:$0xf]
      %v656 = vld [vmem:[%s6 + $0xb4] sm:$0xff]
      %v657 = vld [vmem:[%s6 + $0xbc] sm:$0xf]
      %v690 = vunpack.c.l.b16 %v626
      %v691 = vunpack.c.h.b16 %v626
      %v692 = vunpack.c.l.b16 %v627
      %v693 = vunpack.c.l.b16 %v628
      %v694 = vunpack.c.h.b16 %v628
      %v695 = vunpack.c.l.b16 %v629
      %v696 = vunpack.c.l.b16 %v630
      %v697 = vunpack.c.h.b16 %v630
      %v698 = vunpack.c.l.b16 %v631
      %v699 = vunpack.c.l.b16 %v632
      %v700 = vunpack.c.h.b16 %v632
      %v701 = vunpack.c.l.b16 %v633
      %v702 = vunpack.c.l.b16 %v634
      %v703 = vunpack.c.h.b16 %v634
      %v704 = vunpack.c.l.b16 %v635
      %v705 = vunpack.c.l.b16 %v636
      %v706 = vunpack.c.h.b16 %v636
      %v707 = vunpack.c.l.b16 %v637
      %v708 = vunpack.c.l.b16 %v638
      %v709 = vunpack.c.h.b16 %v638
      %v710 = vunpack.c.l.b16 %v639
      %v711 = vunpack.c.l.b16 %v640
      %v712 = vunpack.c.h.b16 %v640
      %v713 = vunpack.c.l.b16 %v641
      %v714 = vunpack.c.l.b16 %v642
      %v715 = vunpack.c.h.b16 %v642
      %v716 = vunpack.c.l.b16 %v643
      %v717 = vunpack.c.l.b16 %v644
      %v718 = vunpack.c.h.b16 %v644
      %v719 = vunpack.c.l.b16 %v645
      %v720 = vunpack.c.l.b16 %v646
      %v721 = vunpack.c.h.b16 %v646
      %v722 = vunpack.c.l.b16 %v647
      %v723 = vunpack.c.l.b16 %v648
      %v724 = vunpack.c.h.b16 %v648
      %v725 = vunpack.c.l.b16 %v649
      %v726 = vunpack.c.l.b16 %v650
      %v727 = vunpack.c.h.b16 %v650
      %v728 = vunpack.c.l.b16 %v651
      %v729 = vunpack.c.l.b16 %v652
      %v730 = vunpack.c.h.b16 %v652
      %v731 = vunpack.c.l.b16 %v653
      %v732 = vunpack.c.l.b16 %v654
      %v733 = vunpack.c.h.b16 %v654
      %v734 = vunpack.c.l.b16 %v655
      %v735 = vunpack.c.l.b16 %v656
      %v736 = vunpack.c.h.b16 %v656
      %v737 = vunpack.c.l.b16 %v657
      %v738 = vpack.c.b16 %v693, %v690
      %v739 = vpack.c.b16 %v694, %v691
      %v740 = vpack.c.b16 %v695, %v692
      %v741 = vpack.c.b16 %v699, %v696
      %v742 = vpack.c.b16 %v700, %v697
      %v743 = vpack.c.b16 %v701, %v698
      %v744 = vpack.c.b16 %v705, %v702
      %v745 = vpack.c.b16 %v706, %v703
      %v746 = vpack.c.b16 %v707, %v704
      %v747 = vpack.c.b16 %v711, %v708
      %v748 = vpack.c.b16 %v712, %v709
      %v749 = vpack.c.b16 %v713, %v710
      %v750 = vpack.c.b16 %v717, %v714
      %v751 = vpack.c.b16 %v718, %v715
      %v752 = vpack.c.b16 %v719, %v716
      %v753 = vpack.c.b16 %v723, %v720
      %v754 = vpack.c.b16 %v724, %v721
      %v755 = vpack.c.b16 %v725, %v722
      %v756 = vpack.c.b16 %v729, %v726
      %v757 = vpack.c.b16 %v730, %v727
      %v758 = vpack.c.b16 %v731, %v728
      %v759 = vpack.c.b16 %v735, %v732
      %v760 = vpack.c.b16 %v736, %v733
      %v761 = vpack.c.b16 %v737, %v734
      %786 = vmatprep.subr.bf16.mxu0 %v739
      %787 = vmatpush1.bf16.msra.mxu0 %v738
      %788 = vmatprep.subr.bf16.mxu0 %v742
      %789 = vmatpush1.bf16.msra.mxu0 %v741
      %790 = vmatprep.subr.bf16.mxu0 %v745
      %791 = vmatpush1.bf16.msra.mxu0 %v744
      %792 = vmatprep.subr.bf16.mxu0 %v748
      %793 = vmatpush1.bf16.msra.mxu0 %v747
      %794 = vmatprep.subr.bf16.mxu0 %v751
      %795 = vmatpush1.bf16.msra.mxu0 %v750
      %796 = vmatprep.subr.bf16.mxu0 %v754
      %797 = vmatpush1.bf16.msra.mxu0 %v753
      %798 = vmatprep.subr.bf16.mxu0 %v757
      %799 = vmatpush1.bf16.msra.mxu0 %v756
      %800 = vmatprep.subr.bf16.mxu0 %v760
      %801 = vmatpush1.bf16.msra.mxu0 %v759
      %802 = vmatprep.subr.bf16.mxu0 0
      %803 = vmatpush1.bf16.msra.mxu0 0
      %804 = vmatprep.subr.bf16.mxu0 0
      %805 = vmatpush1.bf16.msra.mxu0 0
      %806 = vmatprep.subr.bf16.mxu0 0
      %807 = vmatpush1.bf16.msra.mxu0 0
      %808 = vmatprep.subr.bf16.mxu0 0
      %809 = vmatpush1.bf16.msra.mxu0 0
      %810 = vmatprep.subr.bf16.mxu0 0
      %811 = vmatpush1.bf16.msra.mxu0 0
      %812 = vmatprep.subr.bf16.mxu0 0
      %813 = vmatpush1.bf16.msra.mxu0 0
      %814 = vmatprep.subr.bf16.mxu0 0
      %815 = vmatpush1.bf16.msra.mxu0 0
      %816 = vmatprep.subr.bf16.mxu0 0
      %817 = vmatpush1.bf16.msra.mxu0 0
      %818 = vmatprep.mubr.bf16.mxu0 0
      %819 = vmatmul.mubr.bf16.gmra.mrb[0].mxu0 %v625
      %v820 = vpop.f32.mrb[0].mxu0
      %v821 = vadd.f32 0.0, %v820
      %v822 = vpop.f32.mrb[0].mxu0
      %v823 = vadd.f32 0.0, %v822
      %v824 = vpop.f32.mrb[0].mxu0
      %v825 = vpop.f32.mrb[0].mxu0
      %826 = vdwg.mxu0
      %827 = vmatprep.subr.bf16.mxu0 0
      %828 = vmatpush1.bf16.msra.mxu0 %v740
      %829 = vmatprep.subr.bf16.mxu0 0
      %830 = vmatpush1.bf16.msra.mxu0 %v743
      %831 = vmatprep.subr.bf16.mxu0 0
      %832 = vmatpush1.bf16.msra.mxu0 %v746
      %833 = vmatprep.subr.bf16.mxu0 0
      %834 = vmatpush1.bf16.msra.mxu0 %v749
      %835 = vmatprep.subr.bf16.mxu0 0
      %836 = vmatpush1.bf16.msra.mxu0 %v752
      %837 = vmatprep.subr.bf16.mxu0 0
      %838 = vmatpush1.bf16.msra.mxu0 %v755
      %839 = vmatprep.subr.bf16.mxu0 0
      %840 = vmatpush1.bf16.msra.mxu0 %v758
      %841 = vmatprep.subr.bf16.mxu0 0
      %842 = vmatpush1.bf16.msra.mxu0 %v761
      %843 = vmatprep.subr.bf16.mxu0 0
      %844 = vmatpush1.bf16.msra.mxu0 0
      %845 = vmatprep.subr.bf16.mxu0 0
      %846 = vmatpush1.bf16.msra.mxu0 0
      %847 = vmatprep.subr.bf16.mxu0 0
      %848 = vmatpush1.bf16.msra.mxu0 0
      %849 = vmatprep.subr.bf16.mxu0 0
      %850 = vmatpush1.bf16.msra.mxu0 0
      %851 = vmatprep.subr.bf16.mxu0 0
      %852 = vmatpush1.bf16.msra.mxu0 0
      %853 = vmatprep.subr.bf16.mxu0 0
      %854 = vmatpush1.bf16.msra.mxu0 0
      %855 = vmatprep.subr.bf16.mxu0 0
      %856 = vmatpush1.bf16.msra.mxu0 0
      %857 = vmatprep.subr.bf16.mxu0 0
      %858 = vmatpush1.bf16.msra.mxu0 0
      %859 = vmatprep.mubr.bf16.mxu0 0
      %860 = vmatmul.mubr.bf16.gmra.mrb[0].mxu0 %v625
      %v861 = vpop.f32.mrb[0].mxu0
      %v862 = vadd.f32 0.0, %v861
      %v863 = vpop.f32.mrb[0].mxu0
      %v864 = vpop.f32.mrb[0].mxu0
      %v865 = vpop.f32.mrb[0].mxu0
      %866 = vdwg.mxu0
      %v867 = vld [vmem:[%s316] sm:$0xff]
      %v868 = vmul.f32 %v867, %v821
      %v869 = vld [vmem:[%s320] sm:$0xff]
      %v870 = vmul.f32 %v869, %v823
      %v871 = vadd.f32 %v868, %v870
      %v872 = vadd.f32 %v871, %v862
      %873 = vst [vmem:[%s324] sm:$0xff] %v872
      %p874 = scmp.lt.s32.totalorder %s18, 1
      %s875 = scalar_select %p874, %s18, 1
      %s876 = smul.addr %s875, 8
      %s877 = scalar_lea.vmem %s7, %s876
      // Predicated region
      $region49: #{jvp__.12} parent=47 // pred_check
        %p878 = pneg %p203
      $region50: #{jvp__.12} parent=47 // pred_check_branch
        %880 = sbr.rel (%p878) target = $region52
      $region51: #{jvp__.12} parent=47 // pred_region
        _
      $region52: #{jvp__.12} parent=47 // pred_fallthru
        _
    $region48: #{jvp__.12} parent=5 // pred_fallthru
      _
    %p881 = scmp.le.s32.totalorder 2, %s13
    // Predicated region
    $region53: #{jvp__.12} parent=5 // pred_check
      %p882 = pneg %p881
    $region54: #{jvp__.12} parent=5 // pred_check_branch
      %884 = sbr.rel (%p882) target = $region56
    $region55: #{jvp__.12} parent=5 // pred_region
      %s885 = ssub.s32 %s13, 2
      // Predicated region
      $region57: #{jvp__.12} parent=55 // pred_check
        %p886 = pneg %p209
      $region58: #{jvp__.12} parent=55 // pred_check_branch
        %888 = sbr.rel (%p886) target = $region60
      $region59: #{jvp__.12} parent=55 // pred_region
        %p889 = scmp.lt.s32.totalorder %s19, 1
        %s890 = scalar_select %p889, %s19, 1
        %s891 = smul.addr %s890, 8
        %s892 = scalar_lea.vmem %s7, %s891
      $region60: #{jvp__.12} parent=55 // pred_fallthru
        _
    $region56: #{jvp__.12} parent=5 // pred_fallthru
      _
  $region6: #{jvp__.12} parent=0 // loop_footer
    %s17 = sadd.s32 1, %s13
  $region7: #{jvp__.12} parent=0 // loop_footer_branch
    %12 = sbr.rel target = $region3
  $region8: #{jvp__.12} parent=0 // loop_exit
    _

// kernel: jvp__.14
$region0: #{jvp__.14}
  #allocation0 [shape = 'u32[]', space=smem, size = 0x4, offset = 0x4, fixed_abs, tag = 'smem constant byte address 0x4 - core index']
  #allocation1 [shape = 'u32[144,128]{1,0:T(1,128)}', space=vmem, size = 0x12000, scoped, tag = 'internal scratch']
  %s0 = inlined_call_operand.vmem [shape: f32[8,32], index: 0, kind: input, shape index: {}]
  %s1 = inlined_call_operand.vmem [shape: bf16[32,128], index: 1, kind: input, shape index: {}]
  %s2 = inlined_call_operand.vmem [shape: f32[1,128], index: 2, kind: input, shape index: {}]
  %s3 = inlined_call_operand.vmem [shape: f32[8,128], index: 3, kind: output, shape index: {}]
  %s4 = sld [smem:[#allocation0]]
  $region22: #{jvp__.14} parent=0
    _
  %s6 = ssub.s32 1, %s4
  %s7 = scalar_select 0, %s6, %s4
  // Predicated region
  $region2: #{jvp__.14} parent=0 // pred_check
    _
  $region3: #{jvp__.14} parent=0 // pred_check_branch
    %9 = sbr.rel (0) target = $region5
  $region4: #{jvp__.14} parent=0 // pred_region
    _
  $region5: #{jvp__.14} parent=0 // pred_fallthru
    _
  // Predicated region
  $region6: #{jvp__.14} parent=0 // pred_check
    _
  $region7: #{jvp__.14} parent=0 // pred_check_branch
    %11 = sbr.rel (0) target = $region9
  $region8: #{jvp__.14} parent=0 // pred_region
    _
  $region9: #{jvp__.14} parent=0 // pred_fallthru
    _
  // Predicated region
  $region10: #{jvp__.14} parent=0 // pred_check
    _
  $region11: #{jvp__.14} parent=0 // pred_check_branch
    %13 = sbr.rel (0) target = $region13
  $region12: #{jvp__.14} parent=0 // pred_region
    _
  $region13: #{jvp__.14} parent=0 // pred_fallthru
    _
  %v15 = vld [vmem:[%s0] sm:$0xff]
  %v16 = vpack.c.bf16 %v15, %v15
  %v17 = vld [vmem:[%s1] sm:$0xf]
  %v18 = vld [vmem:[%s1 + $0x4] sm:$0xf]
  %v19 = vld [vmem:[%s1 + $0x8] sm:$0xf]
  %v20 = vld [vmem:[%s1 + $0xc] sm:$0xf]
  %v21 = vld [vmem:[%s2] sm:$0x1]
  %v23 = vlaneseq
  %v24 = vshrl.u32 %v23, 7
  %v25 = vsub.s32 0, %v24
  %v26 = vrot.slane %v21, %v25
  %v32 = vunpack.c.l.b16 %v17
  %v33 = vunpack.c.l.b16 %v18
  %v34 = vunpack.c.l.b16 %v19
  %v35 = vunpack.c.l.b16 %v20
  %v36 = vpack.c.b16 %v33, %v32
  %v37 = vpack.c.b16 %v35, %v34
  %vm40 = vcmask 261120
  %v42 = vsel %vm40, %v16, 0
  %44 = vmatprep.subr.bf16.mxu0 0
  %45 = vmatpush1.bf16.msra.mxu0 %v36
  %46 = vmatprep.subr.bf16.mxu0 0
  %47 = vmatpush1.bf16.msra.mxu0 %v37
  %48 = vmatprep.subr.bf16.mxu0 0
  %49 = vmatpush1.bf16.msra.mxu0 0
  %50 = vmatprep.subr.bf16.mxu0 0
  %51 = vmatpush1.bf16.msra.mxu0 0
  %52 = vmatprep.subr.bf16.mxu0 0
  %53 = vmatpush1.bf16.msra.mxu0 0
  %54 = vmatprep.subr.bf16.mxu0 0
  %55 = vmatpush1.bf16.msra.mxu0 0
  %56 = vmatprep.subr.bf16.mxu0 0
  %57 = vmatpush1.bf16.msra.mxu0 0
  %58 = vmatprep.subr.bf16.mxu0 0
  %59 = vmatpush1.bf16.msra.mxu0 0
  %60 = vmatprep.subr.bf16.mxu0 0
  %61 = vmatpush1.bf16.msra.mxu0 0
  %62 = vmatprep.subr.bf16.mxu0 0
  %63 = vmatpush1.bf16.msra.mxu0 0
  %64 = vmatprep.subr.bf16.mxu0 0
  %65 = vmatpush1.bf16.msra.mxu0 0
  %66 = vmatprep.subr.bf16.mxu0 0
  %67 = vmatpush1.bf16.msra.mxu0 0
  %68 = vmatprep.subr.bf16.mxu0 0
  %69 = vmatpush1.bf16.msra.mxu0 0
  %70 = vmatprep.subr.bf16.mxu0 0
  %71 = vmatpush1.bf16.msra.mxu0 0
  %72 = vmatprep.subr.bf16.mxu0 0
  %73 = vmatpush1.bf16.msra.mxu0 0
  %74 = vmatprep.subr.bf16.mxu0 0
  %75 = vmatpush1.bf16.msra.mxu0 0
  %76 = vmatprep.mubr.bf16.mxu0 0
  %77 = vmatmul.mubr.bf16.gmra.mrb[0].mxu0 %v42
  %v78 = vpop.f32.mrb[0].mxu0
  %v79 = vadd.f32 %v26, %v78
  %v80 = vpop.f32.mrb[0].mxu0
  %v81 = vpop.f32.mrb[0].mxu0
  %v82 = vpop.f32.mrb[0].mxu0
  %83 = vdwg.mxu0
  %84 = vst [vmem:[%s3] sm:$0xff] %v79
  // Predicated region
  $region14: #{jvp__.14} parent=0 // pred_check
    _
  $region15: #{jvp__.14} parent=0 // pred_check_branch
    %86 = sbr.rel (0) target = $region17
  $region16: #{jvp__.14} parent=0 // pred_region
    _
  $region17: #{jvp__.14} parent=0 // pred_fallthru
    _
  // Predicated region
  $region18: #{jvp__.14} parent=0 // pred_check
    _
  $region19: #{jvp__.14} parent=0 // pred_check_branch
    %88 = sbr.rel (0) target = $region21
  $region20: #{jvp__.14} parent=0 // pred_region
    _
  $region21: #{jvp__.14} parent=0 // pred_fallthru
    _

// kernel: jvp__.13
$region0: #{jvp__.13}
  #allocation0 [shape = 'u32[]', space=smem, size = 0x4, offset = 0x4, fixed_abs, tag = 'smem constant byte address 0x4 - core index']
  #allocation1 [shape = 'u32[144,128]{1,0:T(1,128)}', space=vmem, size = 0x12000, scoped, tag = 'internal scratch']
  %s0 = inlined_call_operand.vmem [shape: f32[8,64], index: 0, kind: input, shape index: {}]
  %s1 = inlined_call_operand.vmem [shape: bf16[64,128], index: 1, kind: input, shape index: {}]
  %s2 = inlined_call_operand.vmem [shape: f32[1,128], index: 2, kind: input, shape index: {}]
  %s3 = inlined_call_operand.vmem [shape: bf16[128,128], index: 3, kind: input, shape index: {}]
  %s4 = inlined_call_operand.vmem [shape: f32[1,128], index: 4, kind: input, shape index: {}]
  %s5 = inlined_call_operand.vmem [shape: f32[8,128], index: 5, kind: output, shape index: {0}]
  %s6 = inlined_call_operand.vmem [shape: f32[8,128], index: 6, kind: output, shape index: {1}]
  %7 = xla_tuple %s5, %s6
  %s8 = sld [smem:[#allocation0]]
  $region38: #{jvp__.13} parent=0
    _
  %s10 = ssub.s32 1, %s8
  %s11 = scalar_select 0, %s10, %s8
  // Predicated region
  $region2: #{jvp__.13} parent=0 // pred_check
    _
  $region3: #{jvp__.13} parent=0 // pred_check_branch
    %13 = sbr.rel (0) target = $region5
  $region4: #{jvp__.13} parent=0 // pred_region
    _
  $region5: #{jvp__.13} parent=0 // pred_fallthru
    _
  // Predicated region
  $region6: #{jvp__.13} parent=0 // pred_check
    _
  $region7: #{jvp__.13} parent=0 // pred_check_branch
    %15 = sbr.rel (0) target = $region9
  $region8: #{jvp__.13} parent=0 // pred_region
    _
  $region9: #{jvp__.13} parent=0 // pred_fallthru
    _
  // Predicated region
  $region10: #{jvp__.13} parent=0 // pred_check
    _
  $region11: #{jvp__.13} parent=0 // pred_check_branch
    %17 = sbr.rel (0) target = $region13
  $region12: #{jvp__.13} parent=0 // pred_region
    _
  $region13: #{jvp__.13} parent=0 // pred_fallthru
    _
  // Predicated region
  $region14: #{jvp__.13} parent=0 // pred_check
    _
  $region15: #{jvp__.13} parent=0 // pred_check_branch
    %19 = sbr.rel (0) target = $region17
  $region16: #{jvp__.13} parent=0 // pred_region
    _
  $region17: #{jvp__.13} parent=0 // pred_fallthru
    _
  // Predicated region
  $region18: #{jvp__.13} parent=0 // pred_check
    _
  $region19: #{jvp__.13} parent=0 // pred_check_branch
    %21 = sbr.rel (0) target = $region21
  $region20: #{jvp__.13} parent=0 // pred_region
    _
  $region21: #{jvp__.13} parent=0 // pred_fallthru
    _
  %v23 = vld [vmem:[%s0] sm:$0xff]
  %v24 = vpack.c.bf16 %v23, %v23
  %v25 = vld [vmem:[%s1] sm:$0xf]
  %v26 = vld [vmem:[%s1 + $0x4] sm:$0xf]
  %v27 = vld [vmem:[%s1 + $0x8] sm:$0xf]
  %v28 = vld [vmem:[%s1 + $0xc] sm:$0xf]
  %v29 = vld [vmem:[%s1 + $0x10] sm:$0xf]
  %v30 = vld [vmem:[%s1 + $0x14] sm:$0xf]
  %v31 = vld [vmem:[%s1 + $0x18] sm:$0xf]
  %v32 = vld [vmem:[%s1 + $0x1c] sm:$0xf]
  %v33 = vld [vmem:[%s2] sm:$0x1]
  %v35 = vlaneseq
  %v36 = vshrl.u32 %v35, 7
  %v37 = vsub.s32 0, %v36
  %v38 = vrot.slane %v33, %v37
  %v48 = vunpack.c.l.b16 %v25
  %v49 = vunpack.c.l.b16 %v26
  %v50 = vunpack.c.l.b16 %v27
  %v51 = vunpack.c.l.b16 %v28
  %v52 = vunpack.c.l.b16 %v29
  %v53 = vunpack.c.l.b16 %v30
  %v54 = vunpack.c.l.b16 %v31
  %v55 = vunpack.c.l.b16 %v32
  %v56 = vpack.c.b16 %v49, %v48
  %v57 = vpack.c.b16 %v51, %v50
  %v58 = vpack.c.b16 %v53, %v52
  %v59 = vpack.c.b16 %v55, %v54
  %vm64 = vcmask 523264
  %v66 = vsel %vm64, %v24, 0
  %68 = vmatprep.subr.bf16.mxu0 0
  %69 = vmatpush1.bf16.msra.mxu0 %v56
  %70 = vmatprep.subr.bf16.mxu0 0
  %71 = vmatpush1.bf16.msra.mxu0 %v57
  %72 = vmatprep.subr.bf16.mxu0 0
  %73 = vmatpush1.bf16.msra.mxu0 %v58
  %74 = vmatprep.subr.bf16.mxu0 0
  %75 = vmatpush1.bf16.msra.mxu0 %v59
  %76 = vmatprep.subr.bf16.mxu0 0
  %77 = vmatpush1.bf16.msra.mxu0 0
  %78 = vmatprep.subr.bf16.mxu0 0
  %79 = vmatpush1.bf16.msra.mxu0 0
  %80 = vmatprep.subr.bf16.mxu0 0
  %81 = vmatpush1.bf16.msra.mxu0 0
  %82 = vmatprep.subr.bf16.mxu0 0
  %83 = vmatpush1.bf16.msra.mxu0 0
  %84 = vmatprep.subr.bf16.mxu0 0
  %85 = vmatpush1.bf16.msra.mxu0 0
  %86 = vmatprep.subr.bf16.mxu0 0
  %87 = vmatpush1.bf16.msra.mxu0 0
  %88 = vmatprep.subr.bf16.mxu0 0
  %89 = vmatpush1.bf16.msra.mxu0 0
  %90 = vmatprep.subr.bf16.mxu0 0
  %91 = vmatpush1.bf16.msra.mxu0 0
  %92 = vmatprep.subr.bf16.mxu0 0
  %93 = vmatpush1.bf16.msra.mxu0 0
  %94 = vmatprep.subr.bf16.mxu0 0
  %95 = vmatpush1.bf16.msra.mxu0 0
  %96 = vmatprep.subr.bf16.mxu0 0
  %97 = vmatpush1.bf16.msra.mxu0 0
  %98 = vmatprep.subr.bf16.mxu0 0
  %99 = vmatpush1.bf16.msra.mxu0 0
  %100 = vmatprep.mubr.bf16.mxu0 0
  %101 = vmatmul.mubr.bf16.gmra.mrb[0].mxu0 %v66
  %v102 = vpop.f32.mrb[0].mxu0
  %v103 = vadd.f32 %v38, %v102
  %v104 = vpop.f32.mrb[0].mxu0
  %v105 = vpop.f32.mrb[0].mxu0
  %v106 = vpop.f32.mrb[0].mxu0
  %107 = vdwg.mxu0
  %v108 = vsub.f32 0.0, %v103
  %v109 = vmul.f32 %v108, 1.442695
  %v110 = vpow.pop %v109
  %v111 = vadd.f32 %v110, 1.0
  %v112 = vrcp.pop %v111
  %v113 = vmul.f32 1.0, %v112
  %v114 = vmul.f32 %v103, %v113
  %v115 = vpack.c.bf16 %v114, %v114
  %v116 = vld [vmem:[%s3] sm:$0xf]
  %v117 = vld [vmem:[%s3 + $0x4] sm:$0xf]
  %v118 = vld [vmem:[%s3 + $0x8] sm:$0xf]
  %v119 = vld [vmem:[%s3 + $0xc] sm:$0xf]
  %v120 = vld [vmem:[%s3 + $0x10] sm:$0xf]
  %v121 = vld [vmem:[%s3 + $0x14] sm:$0xf]
  %v122 = vld [vmem:[%s3 + $0x18] sm:$0xf]
  %v123 = vld [vmem:[%s3 + $0x1c] sm:$0xf]
  %v124 = vld [vmem:[%s3 + $0x20] sm:$0xf]
  %v125 = vld [vmem:[%s3 + $0x24] sm:$0xf]
  %v126 = vld [vmem:[%s3 + $0x28] sm:$0xf]
  %v127 = vld [vmem:[%s3 + $0x2c] sm:$0xf]
  %v128 = vld [vmem:[%s3 + $0x30] sm:$0xf]
  %v129 = vld [vmem:[%s3 + $0x34] sm:$0xf]
  %v130 = vld [vmem:[%s3 + $0x38] sm:$0xf]
  %v131 = vld [vmem:[%s3 + $0x3c] sm:$0xf]
  %v132 = vld [vmem:[%s4] sm:$0x1]
  %v134 = vlaneseq
  %v135 = vshrl.u32 %v134, 7
  %v136 = vsub.s32 0, %v135
  %v137 = vrot.slane %v132, %v136
  %v155 = vunpack.c.l.b16 %v116
  %v156 = vunpack.c.l.b16 %v117
  %v157 = vunpack.c.l.b16 %v118
  %v158 = vunpack.c.l.b16 %v119
  %v159 = vunpack.c.l.b16 %v120
  %v160 = vunpack.c.l.b16 %v121
  %v161 = vunpack.c.l.b16 %v122
  %v162 = vunpack.c.l.b16 %v123
  %v163 = vunpack.c.l.b16 %v124
  %v164 = vunpack.c.l.b16 %v125
  %v165 = vunpack.c.l.b16 %v126
  %v166 = vunpack.c.l.b16 %v127
  %v167 = vunpack.c.l.b16 %v128
  %v168 = vunpack.c.l.b16 %v129
  %v169 = vunpack.c.l.b16 %v130
  %v170 = vunpack.c.l.b16 %v131
  %v171 = vpack.c.b16 %v156, %v155
  %v172 = vpack.c.b16 %v158, %v157
  %v173 = vpack.c.b16 %v160, %v159
  %v174 = vpack.c.b16 %v162, %v161
  %v175 = vpack.c.b16 %v164, %v163
  %v176 = vpack.c.b16 %v166, %v165
  %v177 = vpack.c.b16 %v168, %v167
  %v178 = vpack.c.b16 %v170, %v169
  %187 = vmatprep.subr.bf16.mxu0 0
  %188 = vmatpush1.bf16.msra.mxu0 %v171
  %189 = vmatprep.subr.bf16.mxu0 0
  %190 = vmatpush1.bf16.msra.mxu0 %v172
  %191 = vmatprep.subr.bf16.mxu0 0
  %192 = vmatpush1.bf16.msra.mxu0 %v173
  %193 = vmatprep.subr.bf16.mxu0 0
  %194 = vmatpush1.bf16.msra.mxu0 %v174
  %195 = vmatprep.subr.bf16.mxu0 0
  %196 = vmatpush1.bf16.msra.mxu0 %v175
  %197 = vmatprep.subr.bf16.mxu0 0
  %198 = vmatpush1.bf16.msra.mxu0 %v176
  %199 = vmatprep.subr.bf16.mxu0 0
  %200 = vmatpush1.bf16.msra.mxu0 %v177
  %201 = vmatprep.subr.bf16.mxu0 0
  %202 = vmatpush1.bf16.msra.mxu0 %v178
  %203 = vmatprep.subr.bf16.mxu0 0
  %204 = vmatpush1.bf16.msra.mxu0 0
  %205 = vmatprep.subr.bf16.mxu0 0
  %206 = vmatpush1.bf16.msra.mxu0 0
  %207 = vmatprep.subr.bf16.mxu0 0
  %208 = vmatpush1.bf16.msra.mxu0 0
  %209 = vmatprep.subr.bf16.mxu0 0
  %210 = vmatpush1.bf16.msra.mxu0 0
  %211 = vmatprep.subr.bf16.mxu0 0
  %212 = vmatpush1.bf16.msra.mxu0 0
  %213 = vmatprep.subr.bf16.mxu0 0
  %214 = vmatpush1.bf16.msra.mxu0 0
  %215 = vmatprep.subr.bf16.mxu0 0
  %216 = vmatpush1.bf16.msra.mxu0 0
  %217 = vmatprep.subr.bf16.mxu0 0
  %218 = vmatpush1.bf16.msra.mxu0 0
  %219 = vmatprep.mubr.bf16.mxu0 0
  %220 = vmatmul.mubr.bf16.gmra.mrb[0].mxu0 %v115
  %v221 = vpop.f32.mrb[0].mxu0
  %v222 = vadd.f32 %v137, %v221
  %v223 = vpop.f32.mrb[0].mxu0
  %v224 = vpop.f32.mrb[0].mxu0
  %v225 = vpop.f32.mrb[0].mxu0
  %226 = vdwg.mxu0
  %227 = vst [vmem:[%s5] sm:$0xff] %v222
  %228 = vst [vmem:[%s6] sm:$0xff] %v103
  // Predicated region
  $region22: #{jvp__.13} parent=0 // pred_check
    _
  $region23: #{jvp__.13} parent=0 // pred_check_branch
    %230 = sbr.rel (0) target = $region25
  $region24: #{jvp__.13} parent=0 // pred_region
    _
  $region25: #{jvp__.13} parent=0 // pred_fallthru
    _
  // Predicated region
  $region26: #{jvp__.13} parent=0 // pred_check
    _
  $region27: #{jvp__.13} parent=0 // pred_check_branch
    %232 = sbr.rel (0) target = $region29
  $region28: #{jvp__.13} parent=0 // pred_region
    _
  $region29: #{jvp__.13} parent=0 // pred_fallthru
    _
  // Predicated region
  $region30: #{jvp__.13} parent=0 // pred_check
    _
  $region31: #{jvp__.13} parent=0 // pred_check_branch
    %234 = sbr.rel (0) target = $region33
  $region32: #{jvp__.13} parent=0 // pred_region
    _
  $region33: #{jvp__.13} parent=0 // pred_fallthru
    _
  // Predicated region
  $region34: #{jvp__.13} parent=0 // pred_check
    _
  $region35: #{jvp__.13} parent=0 // pred_check_branch
    %236 = sbr.rel (0) target = $region37
  $region36: #{jvp__.13} parent=0 // pred_region
    _
  $region37: #{jvp__.13} parent=0 // pred_fallthru
    _

// kernel: jvp__.15
$region0: #{jvp__.15}
  #allocation0 [shape = 'u32[]', space=smem, size = 0x4, offset = 0x4, fixed_abs, tag = 'smem constant byte address 0x4 - core index']
  #allocation1 [shape = 'u32[144,128]{1,0:T(1,128)}', space=vmem, size = 0x12000, scoped, tag = 'internal scratch']
  %s0 = inlined_call_operand.vmem [shape: f32[8,32], index: 0, kind: input, shape index: {}]
  %s1 = inlined_call_operand.vmem [shape: bf16[32,128], index: 1, kind: input, shape index: {}]
  %s2 = inlined_call_operand.vmem [shape: f32[1,128], index: 2, kind: input, shape index: {}]
  %s3 = inlined_call_operand.vmem [shape: bf16[128,128], index: 3, kind: input, shape index: {}]
  %s4 = inlined_call_operand.vmem [shape: f32[1,128], index: 4, kind: input, shape index: {}]
  %s5 = inlined_call_operand.vmem [shape: f32[8,128], index: 5, kind: output, shape index: {0}]
  %s6 = inlined_call_operand.vmem [shape: f32[8,128], index: 6, kind: output, shape index: {1}]
  %7 = xla_tuple %s5, %s6
  %s8 = sld [smem:[#allocation0]]
  $region38: #{jvp__.15} parent=0
    _
  %s10 = ssub.s32 1, %s8
  %s11 = scalar_select 0, %s10, %s8
  // Predicated region
  $region2: #{jvp__.15} parent=0 // pred_check
    _
  $region3: #{jvp__.15} parent=0 // pred_check_branch
    %13 = sbr.rel (0) target = $region5
  $region4: #{jvp__.15} parent=0 // pred_region
    _
  $region5: #{jvp__.15} parent=0 // pred_fallthru
    _
  // Predicated region
  $region6: #{jvp__.15} parent=0 // pred_check
    _
  $region7: #{jvp__.15} parent=0 // pred_check_branch
    %15 = sbr.rel (0) target = $region9
  $region8: #{jvp__.15} parent=0 // pred_region
    _
  $region9: #{jvp__.15} parent=0 // pred_fallthru
    _
  // Predicated region
  $region10: #{jvp__.15} parent=0 // pred_check
    _
  $region11: #{jvp__.15} parent=0 // pred_check_branch
    %17 = sbr.rel (0) target = $region13
  $region12: #{jvp__.15} parent=0 // pred_region
    _
  $region13: #{jvp__.15} parent=0 // pred_fallthru
    _
  // Predicated region
  $region14: #{jvp__.15} parent=0 // pred_check
    _
  $region15: #{jvp__.15} parent=0 // pred_check_branch
    %19 = sbr.rel (0) target = $region17
  $region16: #{jvp__.15} parent=0 // pred_region
    _
  $region17: #{jvp__.15} parent=0 // pred_fallthru
    _
  // Predicated region
  $region18: #{jvp__.15} parent=0 // pred_check
    _
  $region19: #{jvp__.15} parent=0 // pred_check_branch
    %21 = sbr.rel (0) target = $region21
  $region20: #{jvp__.15} parent=0 // pred_region
    _
  $region21: #{jvp__.15} parent=0 // pred_fallthru
    _
  %v23 = vld [vmem:[%s0] sm:$0xff]
  %v24 = vpack.c.bf16 %v23, %v23
  %v25 = vld [vmem:[%s1] sm:$0xf]
  %v26 = vld [vmem:[%s1 + $0x4] sm:$0xf]
  %v27 = vld [vmem:[%s1 + $0x8] sm:$0xf]
  %v28 = vld [vmem:[%s1 + $0xc] sm:$0xf]
  %v29 = vld [vmem:[%s2] sm:$0x1]
  %v31 = vlaneseq
  %v32 = vshrl.u32 %v31, 7
  %v33 = vsub.s32 0, %v32
  %v34 = vrot.slane %v29, %v33
  %v40 = vunpack.c.l.b16 %v25
  %v41 = vunpack.c.l.b16 %v26
  %v42 = vunpack.c.l.b16 %v27
  %v43 = vunpack.c.l.b16 %v28
  %v44 = vpack.c.b16 %v41, %v40
  %v45 = vpack.c.b16 %v43, %v42
  %vm48 = vcmask 261120
  %v50 = vsel %vm48, %v24, 0
  %52 = vmatprep.subr.bf16.mxu0 0
  %53 = vmatpush1.bf16.msra.mxu0 %v44
  %54 = vmatprep.subr.bf16.mxu0 0
  %55 = vmatpush1.bf16.msra.mxu0 %v45
  %56 = vmatprep.subr.bf16.mxu0 0
  %57 = vmatpush1.bf16.msra.mxu0 0
  %58 = vmatprep.subr.bf16.mxu0 0
  %59 = vmatpush1.bf16.msra.mxu0 0
  %60 = vmatprep.subr.bf16.mxu0 0
  %61 = vmatpush1.bf16.msra.mxu0 0
  %62 = vmatprep.subr.bf16.mxu0 0
  %63 = vmatpush1.bf16.msra.mxu0 0
  %64 = vmatprep.subr.bf16.mxu0 0
  %65 = vmatpush1.bf16.msra.mxu0 0
  %66 = vmatprep.subr.bf16.mxu0 0
  %67 = vmatpush1.bf16.msra.mxu0 0
  %68 = vmatprep.subr.bf16.mxu0 0
  %69 = vmatpush1.bf16.msra.mxu0 0
  %70 = vmatprep.subr.bf16.mxu0 0
  %71 = vmatpush1.bf16.msra.mxu0 0
  %72 = vmatprep.subr.bf16.mxu0 0
  %73 = vmatpush1.bf16.msra.mxu0 0
  %74 = vmatprep.subr.bf16.mxu0 0
  %75 = vmatpush1.bf16.msra.mxu0 0
  %76 = vmatprep.subr.bf16.mxu0 0
  %77 = vmatpush1.bf16.msra.mxu0 0
  %78 = vmatprep.subr.bf16.mxu0 0
  %79 = vmatpush1.bf16.msra.mxu0 0
  %80 = vmatprep.subr.bf16.mxu0 0
  %81 = vmatpush1.bf16.msra.mxu0 0
  %82 = vmatprep.subr.bf16.mxu0 0
  %83 = vmatpush1.bf16.msra.mxu0 0
  %84 = vmatprep.mubr.bf16.mxu0 0
  %85 = vmatmul.mubr.bf16.gmra.mrb[0].mxu0 %v50
  %v86 = vpop.f32.mrb[0].mxu0
  %v87 = vadd.f32 %v34, %v86
  %v88 = vpop.f32.mrb[0].mxu0
  %v89 = vpop.f32.mrb[0].mxu0
  %v90 = vpop.f32.mrb[0].mxu0
  %91 = vdwg.mxu0
  %v92 = vsub.f32 0.0, %v87
  %v93 = vmul.f32 %v92, 1.442695
  %v94 = vpow.pop %v93
  %v95 = vadd.f32 %v94, 1.0
  %v96 = vrcp.pop %v95
  %v97 = vmul.f32 1.0, %v96
  %v98 = vmul.f32 %v87, %v97
  %v99 = vpack.c.bf16 %v98, %v98
  %v100 = vld [vmem:[%s3] sm:$0xf]
  %v101 = vld [vmem:[%s3 + $0x4] sm:$0xf]
  %v102 = vld [vmem:[%s3 + $0x8] sm:$0xf]
  %v103 = vld [vmem:[%s3 + $0xc] sm:$0xf]
  %v104 = vld [vmem:[%s3 + $0x10] sm:$0xf]
  %v105 = vld [vmem:[%s3 + $0x14] sm:$0xf]
  %v106 = vld [vmem:[%s3 + $0x18] sm:$0xf]
  %v107 = vld [vmem:[%s3 + $0x1c] sm:$0xf]
  %v108 = vld [vmem:[%s3 + $0x20] sm:$0xf]
  %v109 = vld [vmem:[%s3 + $0x24] sm:$0xf]
  %v110 = vld [vmem:[%s3 + $0x28] sm:$0xf]
  %v111 = vld [vmem:[%s3 + $0x2c] sm:$0xf]
  %v112 = vld [vmem:[%s3 + $0x30] sm:$0xf]
  %v113 = vld [vmem:[%s3 + $0x34] sm:$0xf]
  %v114 = vld [vmem:[%s3 + $0x38] sm:$0xf]
  %v115 = vld [vmem:[%s3 + $0x3c] sm:$0xf]
  %v116 = vld [vmem:[%s4] sm:$0x1]
  %v118 = vlaneseq
  %v119 = vshrl.u32 %v118, 7
  %v120 = vsub.s32 0, %v119
  %v121 = vrot.slane %v116, %v120
  %v139 = vunpack.c.l.b16 %v100
  %v140 = vunpack.c.l.b16 %v101
  %v141 = vunpack.c.l.b16 %v102
  %v142 = vunpack.c.l.b16 %v103
  %v143 = vunpack.c.l.b16 %v104
  %v144 = vunpack.c.l.b16 %v105
  %v145 = vunpack.c.l.b16 %v106
  %v146 = vunpack.c.l.b16 %v107
  %v147 = vunpack.c.l.b16 %v108
  %v148 = vunpack.c.l.b16 %v109
  %v149 = vunpack.c.l.b16 %v110
  %v150 = vunpack.c.l.b16 %v111
  %v151 = vunpack.c.l.b16 %v112
  %v152 = vunpack.c.l.b16 %v113
  %v153 = vunpack.c.l.b16 %v114
  %v154 = vunpack.c.l.b16 %v115
  %v155 = vpack.c.b16 %v140, %v139
  %v156 = vpack.c.b16 %v142, %v141
  %v157 = vpack.c.b16 %v144, %v143
  %v158 = vpack.c.b16 %v146, %v145
  %v159 = vpack.c.b16 %v148, %v147
  %v160 = vpack.c.b16 %v150, %v149
  %v161 = vpack.c.b16 %v152, %v151
  %v162 = vpack.c.b16 %v154, %v153
  %171 = vmatprep.subr.bf16.mxu0 0
  %172 = vmatpush1.bf16.msra.mxu0 %v155
  %173 = vmatprep.subr.bf16.mxu0 0
  %174 = vmatpush1.bf16.msra.mxu0 %v156
  %175 = vmatprep.subr.bf16.mxu0 0
  %176 = vmatpush1.bf16.msra.mxu0 %v157
  %177 = vmatprep.subr.bf16.mxu0 0
  %178 = vmatpush1.bf16.msra.mxu0 %v158
  %179 = vmatprep.subr.bf16.mxu0 0
  %180 = vmatpush1.bf16.msra.mxu0 %v159
  %181 = vmatprep.subr.bf16.mxu0 0
  %182 = vmatpush1.bf16.msra.mxu0 %v160
  %183 = vmatprep.subr.bf16.mxu0 0
  %184 = vmatpush1.bf16.msra.mxu0 %v161
  %185 = vmatprep.subr.bf16.mxu0 0
  %186 = vmatpush1.bf16.msra.mxu0 %v162
  %187 = vmatprep.subr.bf16.mxu0 0
  %188 = vmatpush1.bf16.msra.mxu0 0
  %189 = vmatprep.subr.bf16.mxu0 0
  %190 = vmatpush1.bf16.msra.mxu0 0
  %191 = vmatprep.subr.bf16.mxu0 0
  %192 = vmatpush1.bf16.msra.mxu0 0
  %193 = vmatprep.subr.bf16.mxu0 0
  %194 = vmatpush1.bf16.msra.mxu0 0
  %195 = vmatprep.subr.bf16.mxu0 0
  %196 = vmatpush1.bf16.msra.mxu0 0
  %197 = vmatprep.subr.bf16.mxu0 0
  %198 = vmatpush1.bf16.msra.mxu0 0
  %199 = vmatprep.subr.bf16.mxu0 0
  %200 = vmatpush1.bf16.msra.mxu0 0
  %201 = vmatprep.subr.bf16.mxu0 0
  %202 = vmatpush1.bf16.msra.mxu0 0
  %203 = vmatprep.mubr.bf16.mxu0 0
  %204 = vmatmul.mubr.bf16.gmra.mrb[0].mxu0 %v99
  %v205 = vpop.f32.mrb[0].mxu0
  %v206 = vadd.f32 %v121, %v205
  %v207 = vpop.f32.mrb[0].mxu0
  %v208 = vpop.f32.mrb[0].mxu0
  %v209 = vpop.f32.mrb[0].mxu0
  %210 = vdwg.mxu0
  %211 = vst [vmem:[%s5] sm:$0xff] %v206
  %212 = vst [vmem:[%s6] sm:$0xff] %v87
  // Predicated region
  $region22: #{jvp__.15} parent=0 // pred_check
    _
  $region23: #{jvp__.15} parent=0 // pred_check_branch
    %214 = sbr.rel (0) target = $region25
  $region24: #{jvp__.15} parent=0 // pred_region
    _
  $region25: #{jvp__.15} parent=0 // pred_fallthru
    _
  // Predicated region
  $region26: #{jvp__.15} parent=0 // pred_check
    _
  $region27: #{jvp__.15} parent=0 // pred_check_branch
    %216 = sbr.rel (0) target = $region29
  $region28: #{jvp__.15} parent=0 // pred_region
    _
  $region29: #{jvp__.15} parent=0 // pred_fallthru
    _
  // Predicated region
  $region30: #{jvp__.15} parent=0 // pred_check
    _
  $region31: #{jvp__.15} parent=0 // pred_check_branch
    %218 = sbr.rel (0) target = $region33
  $region32: #{jvp__.15} parent=0 // pred_region
    _
  $region33: #{jvp__.15} parent=0 // pred_fallthru
    _
  // Predicated region
  $region34: #{jvp__.15} parent=0 // pred_check
    _
  $region35: #{jvp__.15} parent=0 // pred_check_branch
    %220 = sbr.rel (0) target = $region37
  $region36: #{jvp__.15} parent=0 // pred_region
    _
  $region37: #{jvp__.15} parent=0 // pred_fallthru
    _

// kernel: split.5
$region0: #{split.5}
  #allocation0 [shape = 'u32[2048]{0}', space=vmem, size = 0x2000, scoped, tag = 'scoped memory for split.5']
  #allocation1 [shape = 'u32[2048]{0}', space=vmem, size = 0x2000, scoped, tag = 'scoped memory for split.5']
  #allocation2 [shape = 'u32[2048]{0}', space=vmem, size = 0x2000, scoped, tag = 'scoped memory for split.5']
  #allocation3 [shape = 'u32[2048]{0}', space=vmem, size = 0x2000, scoped, tag = 'scoped memory for split.5']
  #allocation4 [shape = 'u32[2048]{0}', space=vmem, size = 0x2000, scoped, tag = 'scoped memory for split.5']
  #allocation5 [shape = 's32[1]{0}', space=sflag, size = 0x4, scoped, tag = 'scoped memory for split.5']
  %s0 = inlined_call_operand.vmem [shape: f32[16,128], index: 0, kind: input, shape index: {}]
  %s1 = inlined_call_operand.vmem [shape: f32[16,24], index: 1, kind: output, shape index: {}]
  %v2 = vld [vmem:[%s0] sm:$0xff]
  %v3 = vlaneseq
  %v4 = vand.u32 %v3, 127
  %vm5 = vcmp.lt.s32.totalorder %v4, 16
  %v6 = vsel %vm5, 0, %v2
  %7 = vrot.lane.b32.xlu0 %v6, 112
  %v8 = vpop.permute.xlu0 %7
  %9 = vst [vmem:[%s1] sm:$0xff] %v8
  %s10 = scalar_lea.vmem %s0, 8
  %v11 = vld [vmem:[%s10] sm:$0xff]
  %v12 = vlaneseq
  %v13 = vand.u32 %v12, 127
  %vm14 = vcmp.lt.s32.totalorder %v13, 16
  %v15 = vsel %vm14, 0, %v11
  %16 = vrot.lane.b32.xlu0 %v15, 112
  %v17 = vpop.permute.xlu0 %16
  %s18 = scalar_lea.vmem %s1, 8
  %19 = vst [vmem:[%s18] sm:$0xff] %v17

// kernel: split.0
$region0: #{split.0}
  #allocation0 [shape = 'u32[2048]{0}', space=vmem, size = 0x2000, scoped, tag = 'scoped memory for split.0']
  #allocation1 [shape = 'u32[2048]{0}', space=vmem, size = 0x2000, scoped, tag = 'scoped memory for split.0']
  #allocation2 [shape = 'u32[2048]{0}', space=vmem, size = 0x2000, scoped, tag = 'scoped memory for split.0']
  #allocation3 [shape = 'u32[2048]{0}', space=vmem, size = 0x2000, scoped, tag = 'scoped memory for split.0']
  #allocation4 [shape = 'u32[2048]{0}', space=vmem, size = 0x2000, scoped, tag = 'scoped memory for split.0']
  #allocation5 [shape = 's32[1]{0}', space=sflag, size = 0x4, scoped, tag = 'scoped memory for split.0']
  %s0 = inlined_call_operand.vmem [shape: f32[16,128], index: 0, kind: input, shape index: {}]
  %s1 = inlined_call_operand.vmem [shape: f32[16,40], index: 1, kind: output, shape index: {}]
  %v2 = vld [vmem:[%s0] sm:$0xff]
  %v3 = vlaneseq
  %v4 = vand.u32 %v3, 127
  %vm5 = vcmp.lt.s32.totalorder %v4, 40
  %v6 = vsel %vm5, 0, %v2
  %7 = vrot.lane.b32.xlu0 %v6, 88
  %v8 = vpop.permute.xlu0 %7
  %9 = vst [vmem:[%s1] sm:$0xff] %v8
  %s10 = scalar_lea.vmem %s0, 8
  %v11 = vld [vmem:[%s10] sm:$0xff]
  %v12 = vlaneseq
  %v13 = vand.u32 %v12, 127
  %vm14 = vcmp.lt.s32.totalorder %v13, 40
  %v15 = vsel %vm14, 0, %v11
  %16 = vrot.lane.b32.xlu0 %v15, 88
  %v17 = vpop.permute.xlu0 %16
  %s18 = scalar_lea.vmem %s1, 8
  %19 = vst [vmem:[%s18] sm:$0xff] %v17

</llo_original>
